<compile_context>
chip_gen: v5e
topology: v5e:2x2
jax: 0.10.0
libtpu: 0.0.40
codegen_flags: <defaults>
</compile_context>

<pallas_src>
import functools

import jax
import jax.numpy as jnp
from jax.experimental import pallas as pl
from jax.experimental.pallas import tpu as pltpu


VMEM_BUDGET_BYTES = 40 * 1024 * 1024   # stay well under v7x's 64 MiB / TensorCore


def _round_up(x, m):
    return (x + m - 1) // m * m


def _cdiv(a, b):
    return (a + b - 1) // b


def _resident_spec(shape):
    """BlockSpec for weights resident across the whole grid (constant index).

    Single-buffer them (they are DMA'd only once) so the default double-buffer
    doesn't waste VMEM; fall back to the default on jax versions without
    pipeline_mode / pl.Buffered.
    """
    index_map = lambda i: (0, 0)
    try:
        return pl.BlockSpec(shape, index_map, pipeline_mode=pl.Buffered(1))
    except (AttributeError, TypeError, ValueError):
        return pl.BlockSpec(shape, index_map)


def _prompt_linear_kernel(ego_ref, cen_ref, w1e_ref, w1c_ref, b1_ref, w2_ref,
                          b2_ref, o_ref):
    # ---- Layer 1: Linear(2H -> H), concat-free (W1 split into its two halves).
    h = jnp.dot(ego_ref[...], w1e_ref[...], preferred_element_type=jnp.float32)
    h = h + jnp.dot(cen_ref[...], w1c_ref[...],
                    preferred_element_type=jnp.float32)
    h = h + b1_ref[...]                       # b1 is (1, H): broadcast over rows
    h = jnp.maximum(h, 0.01 * h)              # LeakyReLU (default slope 0.01)

    # ---- Layer 2: Linear(H -> 1) as VPU multiply + lane reduction (avoids a
    # 1-wide-output MXU matmul and its result-FIFO round trip).
    y = jnp.sum(h * w2_ref[...], axis=-1, keepdims=True)       # (TILE_N, 1)

    # Relayout to the lane-dense slab FIRST, then run the epilogue on dense
    # vregs: the b2 add + sigmoid touch tile_n/1024 vregs instead of tile_n/8.
    # TODO(synk): confirm in the bundle dump that this sublane->lane relayout
    # stays hidden under the input DMA (swap for an explicit 128-wide
    # transpose if it ever shows on the critical path, esp. on v5e).
    y = y.reshape(o_ref.shape)                                  # (TILE_N//128, 128)
    o_ref[...] = jax.nn.sigmoid(y + b2_ref[0]).astype(o_ref.dtype)


@functools.partial(jax.jit, static_argnames=("max_tile",))
def prompt_linear_net(ego_nodes, central_nodes, params, *, max_tile=None):
    """ego_nodes, central_nodes: [N, H] (f32 or bf16). Returns [N, 1] f32 probs."""
    w1, b1, w2, b2 = params["w1"], params["b1"], params["w2"], params["b2"]
    n, hdim = ego_nodes.shape
    assert central_nodes.shape == (n, hdim)
    assert w1.shape == (2 * hdim, hdim)
    assert hdim % 8 == 0

    act_dtype = ego_nodes.dtype
    itemsize = jnp.dtype(act_dtype).itemsize

    # ---- Tile sizing from a VMEM budget.
    # Resident weights (single-buffered) + per-row pipeline cost:
    #   ego+central input blocks x 2 pipeline bufs + f32 `h` intermediate
    #   + f32 output slab x 2 pipeline bufs.
    weight_bytes = 2 * hdim * hdim * itemsize + 2 * hdim * 4
    per_row_bytes = 2 * 2 * hdim * itemsize + hdim * 4 + 2 * 4
    vmem_cap_rows = max(
        1024, (VMEM_BUDGET_BYTES - weight_bytes) // per_row_bytes // 1024 * 1024)
    # Keep >= 2 grid steps for mid-size N so v7x's two TensorCores both get work.
    rows_for_two_steps = _round_up(_cdiv(max(n, 1), 2), 1024)
    tile_n = min(vmem_cap_rows, rows_for_two_steps, 32768)
    if max_tile is not None:
        assert max_tile % 1024 == 0
        tile_n = min(tile_n, max_tile)
    tile_n = max(tile_n, 1024)   # multiple of 1024 -> (tile_n//128, 128) out block

    # No full-array jnp.pad (it would re-read/re-write all activation rows in
    # HBM). Only a tiny N (< one tile) pads, which is negligible. For larger N
    # the ragged trailing block is clipped by Pallas.
    if n < tile_n:
        pad = tile_n - n
        ego_nodes = jnp.pad(ego_nodes, ((0, pad), (0, 0)))
        central_nodes = jnp.pad(central_nodes, ((0, pad), (0, 0)))
    n_rows = ego_nodes.shape[0]
    grid_len = _cdiv(n_rows, tile_n)
    blk_rows = tile_n // 128
    out_rows = grid_len * blk_rows

    # Split W1 so the kernel never materializes concat([ego, central]) in HBM.
    # Cast W1 halves to the activation dtype (bf16 x bf16 on the MXU when the
    # activations arrive as bf16); small biases stay f32 (applied to f32 h).
    w1_ego = w1[:hdim, :].astype(act_dtype)
    w1_cen = w1[hdim:, :].astype(act_dtype)
    b1_row = b1.reshape(1, hdim).astype(jnp.float32)
    w2_row = w2.reshape(1, hdim).astype(jnp.float32)
    b2_s = b2.reshape(1).astype(jnp.float32)

    est_vmem = weight_bytes + per_row_bytes * tile_n
    vmem_limit = int(min(56 << 20, max(2 * est_vmem, 16 << 20)))

    cost = pl.CostEstimate(
        flops=2 * n * (2 * hdim) * hdim + 5 * n * hdim,
        transcendentals=n,                      # sigmoid exp
        bytes_accessed=2 * n * hdim * itemsize + n * 4
        + (w1.size + b1.size + w2.size + b2.size) * 4,
    )

    out = pl.pallas_call(
        _prompt_linear_kernel,
        out_shape=jax.ShapeDtypeStruct((out_rows, 128), jnp.float32),
        grid_spec=pltpu.PrefetchScalarGridSpec(
            num_scalar_prefetch=0,
            grid=(grid_len,),
            in_specs=[
                pl.BlockSpec((tile_n, hdim), lambda i: (i, 0)),     # ego rows
                # TODO(synk): if xprof shows exposed DMA gaps on v7x, raise to
                # pipeline_mode=pl.Buffered(3) on these two activation specs.
                pl.BlockSpec((tile_n, hdim), lambda i: (i, 0)),     # central rows
                _resident_spec((hdim, hdim)),                       # W1[:H]
                _resident_spec((hdim, hdim)),                       # W1[H:]
                _resident_spec((1, hdim)),                          # b1
                _resident_spec((1, hdim)),                          # w2 row
                pl.BlockSpec(memory_space=pltpu.MemorySpace.SMEM),  # b2 scalar
            ],
            out_specs=pl.BlockSpec((blk_rows, 128), lambda i: (i, 0)),
        ),
        compiler_params=pltpu.CompilerParams(
            dimension_semantics=("parallel",),       # shard rows across TCs (v7x)
            vmem_limit_bytes=vmem_limit,
        ),
        cost_estimate=cost,
    )(ego_nodes, central_nodes, w1_ego, w1_cen, b1_row, w2_row, b2_s)

    # Layout plumbing only: lane-dense slab -> (N, 1) column, drop padded rows.
    return out.reshape(out_rows * 128, 1)[:n]


def init_params(key, hidden_dim):
    """Deterministic parameter init matching nn.Linear shapes (stored transposed)."""
    k1, k2, k3, k4 = jax.random.split(key, 4)
    bound1 = 1.0 / jnp.sqrt(2 * hidden_dim)
    bound2 = 1.0 / jnp.sqrt(hidden_dim)
    return {
        "w1": jax.random.uniform(k1, (2 * hidden_dim, hidden_dim),
                                 jnp.float32, -bound1, bound1),
        "b1": jax.random.uniform(k2, (1, hidden_dim),
                                 jnp.float32, -bound1, bound1),
        "w2": jax.random.uniform(k3, (hidden_dim, 1),
                                 jnp.float32, -bound2, bound2),
        "b2": jax.random.uniform(k4, (1, 1),
                                 jnp.float32, -bound2, bound2),
    }


def _reference(ego, central, params):
    x = jnp.concatenate([ego, central], axis=1)
    h = x @ params["w1"] + params["b1"]
    h = jnp.where(h > 0, h, 0.01 * h)
    y = h @ params["w2"] + params["b2"]
    return jax.nn.sigmoid(y)


if __name__ == "__main__":
    key = jax.random.PRNGKey(0)
    (k_ego, k_cen, k_par, k_ego2, k_cen2, k_ego3, k_cen3) = jax.random.split(key, 7)

    num_nodes = 8
    hidden_dim = 32
    params = init_params(k_par, hidden_dim)

    # Small case (single tile, tiny internal pad).
    ego_nodes = jax.random.normal(k_ego, (num_nodes, hidden_dim), jnp.float32)
    central_nodes = jax.random.normal(k_cen, (num_nodes, hidden_dim), jnp.float32)
    out = jax.block_until_ready(prompt_linear_net(ego_nodes, central_nodes, params))
    ref = _reference(ego_nodes, central_nodes, params)
    assert out.shape == (num_nodes, 1)
    assert jnp.allclose(out, ref, atol=1e-5, rtol=1e-5)

    # Multi-tile path with a ragged trailing block (no wrapper jnp.pad).
    n2 = 2500
    ego2 = jax.random.normal(k_ego2, (n2, hidden_dim), jnp.float32)
    cen2 = jax.random.normal(k_cen2, (n2, hidden_dim), jnp.float32)
    out2 = jax.block_until_ready(
        prompt_linear_net(ego2, cen2, params, max_tile=1024))
    ref2 = _reference(ego2, cen2, params)
    assert out2.shape == (n2, 1)
    assert jnp.allclose(out2, ref2, atol=1e-5, rtol=1e-5)

    # bf16 activations end-to-end (no wrapper casts of the activation arrays),
    # 2-step grid + partial trailing block from the derived tiling.
    n3 = 1536
    ego3 = jax.random.normal(k_ego3, (n3, hidden_dim), jnp.bfloat16)
    cen3 = jax.random.normal(k_cen3, (n3, hidden_dim), jnp.bfloat16)
    out3 = jax.block_until_ready(prompt_linear_net(ego3, cen3, params))
    ref3 = _reference(ego3.astype(jnp.float32), cen3.astype(jnp.float32), params)
    assert out3.shape == (n3, 1)
    assert jnp.allclose(out3, ref3, atol=5e-2, rtol=5e-2)

    # TODO(synk): make_prediction()'s thresholding + .nonzero().tolist() is
    # host-side post-processing of the forward output, not implemented as a kernel.
    print("KERNEL_OK")
</pallas_src>

<mosaic_0001>
module attributes {stable_mosaic.version = 11 : i64} {
  func.func @_prompt_linear_kernel(%arg0: i32, %arg1: memref<1024x32xf32, #tpu.memory_space<vmem>>, %arg2: memref<1024x32xf32, #tpu.memory_space<vmem>>, %arg3: memref<32x32xf32, #tpu.memory_space<vmem>>, %arg4: memref<32x32xf32, #tpu.memory_space<vmem>>, %arg5: memref<1x32xf32, #tpu.memory_space<vmem>>, %arg6: memref<1x32xf32, #tpu.memory_space<vmem>>, %arg7: memref<1xf32, #tpu.memory_space<smem>>, %arg8: memref<8x128xf32, #tpu.memory_space<vmem>>) attributes {dimension_semantics = [#tpu.dimension_semantics<parallel>], iteration_bounds = array<i64: 1>, scalar_prefetch = 0 : i64, scratch_operands = 0 : i64, tpu.core_type = #tpu.core_type<tc>, window_params = [{transform_indices = @transform_0, window_bounds = array<i64: 1024, 32>}, {transform_indices = @transform_1, window_bounds = array<i64: 1024, 32>}, {pipeline_mode = #tpu.pipeline_mode<synchronous>, transform_indices = @transform_2, window_bounds = array<i64: 32, 32>}, {pipeline_mode = #tpu.pipeline_mode<synchronous>, transform_indices = @transform_3, window_bounds = array<i64: 32, 32>}, {pipeline_mode = #tpu.pipeline_mode<synchronous>, transform_indices = @transform_4, window_bounds = array<i64: 1, 32>}, {pipeline_mode = #tpu.pipeline_mode<synchronous>, transform_indices = @transform_5, window_bounds = array<i64: 1, 32>}, {transform_indices = @transform_6, window_bounds = array<i64: 1>}, {transform_indices = @transform_7, window_bounds = array<i64: 8, 128>}]} {
    %c0 = arith.constant 0 : index
    %c0_0 = arith.constant 0 : index
    %0 = vector.load %arg1[%c0, %c0_0] : memref<1024x32xf32, #tpu.memory_space<vmem>>, vector<1024x32xf32>
    %c0_1 = arith.constant 0 : index
    %c0_2 = arith.constant 0 : index
    %1 = vector.load %arg3[%c0_1, %c0_2] : memref<32x32xf32, #tpu.memory_space<vmem>>, vector<32x32xf32>
    %cst = arith.constant dense<0.000000e+00> : vector<1024x32xf32>
    %2 = tpu.matmul %0, %1, %cst {dimension_numbers = #tpu.dot_dimension_numbers<[1], [0], [0], [1], [0, 0, 1, 1], [], []>} : vector<1024x32xf32>, vector<32x32xf32>, vector<1024x32xf32> -> vector<1024x32xf32>
    %c0_3 = arith.constant 0 : index
    %c0_4 = arith.constant 0 : index
    %3 = vector.load %arg2[%c0_3, %c0_4] : memref<1024x32xf32, #tpu.memory_space<vmem>>, vector<1024x32xf32>
    %c0_5 = arith.constant 0 : index
    %c0_6 = arith.constant 0 : index
    %4 = vector.load %arg4[%c0_5, %c0_6] : memref<32x32xf32, #tpu.memory_space<vmem>>, vector<32x32xf32>
    %cst_7 = arith.constant dense<0.000000e+00> : vector<1024x32xf32>
    %5 = tpu.matmul %3, %4, %cst_7 {dimension_numbers = #tpu.dot_dimension_numbers<[1], [0], [0], [1], [0, 0, 1, 1], [], []>} : vector<1024x32xf32>, vector<32x32xf32>, vector<1024x32xf32> -> vector<1024x32xf32>
    %6 = arith.addf %2, %5 : vector<1024x32xf32>
    %c0_8 = arith.constant 0 : index
    %c0_9 = arith.constant 0 : index
    %7 = vector.load %arg5[%c0_8, %c0_9] : memref<1x32xf32, #tpu.memory_space<vmem>>, vector<1x32xf32>
    %8 = vector.broadcast %7 : vector<1x32xf32> to vector<1024x32xf32>
    %9 = arith.addf %6, %8 : vector<1024x32xf32>
    %cst_10 = arith.constant 0.00999999977 : f32
    %10 = vector.broadcast %cst_10 : f32 to vector<1024x32xf32>
    %11 = arith.mulf %10, %9 : vector<1024x32xf32>
    %12 = arith.maximumf %9, %11 : vector<1024x32xf32>
    %c0_11 = arith.constant 0 : index
    %c0_12 = arith.constant 0 : index
    %13 = vector.load %arg6[%c0_11, %c0_12] : memref<1x32xf32, #tpu.memory_space<vmem>>, vector<1x32xf32>
    %14 = vector.broadcast %13 : vector<1x32xf32> to vector<1024x32xf32>
    %15 = arith.mulf %12, %14 : vector<1024x32xf32>
    %cst_13 = arith.constant dense<0.000000e+00> : vector<1024xf32>
    %16 = vector.multi_reduction <add>, %15, %cst_13 [1] : vector<1024x32xf32> to vector<1024xf32>
    %17 = vector.shape_cast %16 : vector<1024xf32> to vector<1024x1xf32>
    %18 = vector.shape_cast %17 : vector<1024x1xf32> to vector<8x128xf32>
    %c0_14 = arith.constant 0 : index
    %19 = memref.load %arg7[%c0_14] : memref<1xf32, #tpu.memory_space<smem>>
    %20 = vector.broadcast %19 : f32 to vector<8x128xf32>
    %21 = arith.addf %18, %20 : vector<8x128xf32>
    %22 = arith.negf %21 : vector<8x128xf32>
    %23 = math.exp %22 : vector<8x128xf32>
    %cst_15 = arith.constant 1.000000e+00 : f32
    %24 = vector.broadcast %cst_15 : f32 to vector<8x128xf32>
    %25 = arith.addf %24, %23 : vector<8x128xf32>
    %26 = arith.divf %24, %25 : vector<8x128xf32>
    %c0_16 = arith.constant 0 : index
    %c0_17 = arith.constant 0 : index
    %27 = vector.load %arg8[%c0_16, %c0_17] : memref<8x128xf32, #tpu.memory_space<vmem>>, vector<8x128xf32>
    tpu.vector_store %arg8[%c0_16, %c0_17], %26 {strides = array<i32>} : memref<8x128xf32, #tpu.memory_space<vmem>>, vector<8x128xf32>,
    return
  }
  func.func @transform_0(%arg0: i32) -> (i32, i32) {
    %c0_i32 = arith.constant 0 : i32
    %c0_i32_0 = arith.constant 0 : i32
    return %arg0, %c0_i32 : i32, i32
  }
  func.func @transform_1(%arg0: i32) -> (i32, i32) {
    %c0_i32 = arith.constant 0 : i32
    %c0_i32_0 = arith.constant 0 : i32
    return %arg0, %c0_i32 : i32, i32
  }
  func.func @transform_2(%arg0: i32) -> (i32, i32) {
    %c0_i32 = arith.constant 0 : i32
    %c0_i32_0 = arith.constant 0 : i32
    %c0_i32_1 = arith.constant 0 : i32
    return %c0_i32, %c0_i32_0 : i32, i32
  }
  func.func @transform_3(%arg0: i32) -> (i32, i32) {
    %c0_i32 = arith.constant 0 : i32
    %c0_i32_0 = arith.constant 0 : i32
    %c0_i32_1 = arith.constant 0 : i32
    return %c0_i32, %c0_i32_0 : i32, i32
  }
  func.func @transform_4(%arg0: i32) -> (i32, i32) {
    %c0_i32 = arith.constant 0 : i32
    %c0_i32_0 = arith.constant 0 : i32
    %c0_i32_1 = arith.constant 0 : i32
    return %c0_i32, %c0_i32_0 : i32, i32
  }
  func.func @transform_5(%arg0: i32) -> (i32, i32) {
    %c0_i32 = arith.constant 0 : i32
    %c0_i32_0 = arith.constant 0 : i32
    %c0_i32_1 = arith.constant 0 : i32
    return %c0_i32, %c0_i32_0 : i32, i32
  }
  func.func @transform_6(%arg0: i32) -> i32 {
    %c0_i32 = arith.constant 0 : i32
    %c0_i32_0 = arith.constant 0 : i32
    return %c0_i32 : i32
  }
  func.func @transform_7(%arg0: i32) -> (i32, i32) {
    %c0_i32 = arith.constant 0 : i32
    %c0_i32_0 = arith.constant 0 : i32
    return %arg0, %c0_i32 : i32, i32
  }
}

</mosaic_0001>

<llo_original>
// kernel: prompt_linear_net.1
$region0: #{prompt_linear_net.1}
  #allocation0 [shape = 'u32[]', space=smem, size = 0x4, offset = 0x4, fixed_abs, tag = 'smem constant byte address 0x4 - core index']
  #allocation1 [shape = 'u32[72,128]{1,0:T(1,128)}', space=vmem, size = 0x9000, scoped, tag = 'internal scratch']
  #allocation2 [shape = 'f32[1]{0:T(128)S(6)}', space=smem, size = 0x200, scoped, tag = 'scoped memory for prompt_linear_net.1']
  %s0 = inlined_call_operand.vmem [shape: f32[1024,32], index: 0, kind: input, shape index: {}]
  %s1 = inlined_call_operand.vmem [shape: f32[1024,32], index: 1, kind: input, shape index: {}]
  %s2 = inlined_call_operand.vmem [shape: f32[32,32], index: 2, kind: input, shape index: {}]
  %s3 = inlined_call_operand.vmem [shape: f32[32,32], index: 3, kind: input, shape index: {}]
  %s4 = inlined_call_operand.vmem [shape: f32[1,32], index: 4, kind: input, shape index: {}]
  %s5 = inlined_call_operand.vmem [shape: f32[1,32], index: 5, kind: input, shape index: {}]
  %s6 = inlined_call_operand.<no memory space> [shape: f32[1], index: 6, kind: input, shape index: {}]
  %s7 = inlined_call_operand.vmem [shape: f32[8,128], index: 7, kind: output, shape index: {}]
  %s8 = sld [smem:[#allocation0]]
  $region38: #{prompt_linear_net.1} parent=0
    _
  %s10 = ssub.s32 1, %s8
  %s11 = scalar_select 0, %s10, %s8
  %12 = sst [smem:[#allocation2]] %s6
  // Predicated region
  $region2: #{prompt_linear_net.1} parent=0 // pred_check
    _
  $region3: #{prompt_linear_net.1} parent=0 // pred_check_branch
    %14 = sbr.rel (0) target = $region5
  $region4: #{prompt_linear_net.1} parent=0 // pred_region
    _
  $region5: #{prompt_linear_net.1} parent=0 // pred_fallthru
    _
  // Predicated region
  $region6: #{prompt_linear_net.1} parent=0 // pred_check
    _
  $region7: #{prompt_linear_net.1} parent=0 // pred_check_branch
    %16 = sbr.rel (0) target = $region9
  $region8: #{prompt_linear_net.1} parent=0 // pred_region
    _
  $region9: #{prompt_linear_net.1} parent=0 // pred_fallthru
    _
  // Predicated region
  $region10: #{prompt_linear_net.1} parent=0 // pred_check
    _
  $region11: #{prompt_linear_net.1} parent=0 // pred_check_branch
    %18 = sbr.rel (0) target = $region13
  $region12: #{prompt_linear_net.1} parent=0 // pred_region
    _
  $region13: #{prompt_linear_net.1} parent=0 // pred_fallthru
    _
  // Predicated region
  $region14: #{prompt_linear_net.1} parent=0 // pred_check
    _
  $region15: #{prompt_linear_net.1} parent=0 // pred_check_branch
    %20 = sbr.rel (0) target = $region17
  $region16: #{prompt_linear_net.1} parent=0 // pred_region
    _
  $region17: #{prompt_linear_net.1} parent=0 // pred_fallthru
    _
  // Predicated region
  $region18: #{prompt_linear_net.1} parent=0 // pred_check
    _
  $region19: #{prompt_linear_net.1} parent=0 // pred_check_branch
    %22 = sbr.rel (0) target = $region21
  $region20: #{prompt_linear_net.1} parent=0 // pred_region
    _
  $region21: #{prompt_linear_net.1} parent=0 // pred_fallthru
    _
  // Predicated region
  $region22: #{prompt_linear_net.1} parent=0 // pred_check
    _
  $region23: #{prompt_linear_net.1} parent=0 // pred_check_branch
    %24 = sbr.rel (0) target = $region25
  $region24: #{prompt_linear_net.1} parent=0 // pred_region
    _
  $region25: #{prompt_linear_net.1} parent=0 // pred_fallthru
    _
  // Predicated region
  $region26: #{prompt_linear_net.1} parent=0 // pred_check
    _
  $region27: #{prompt_linear_net.1} parent=0 // pred_check_branch
    %26 = sbr.rel (0) target = $region29
  $region28: #{prompt_linear_net.1} parent=0 // pred_region
    _
  $region29: #{prompt_linear_net.1} parent=0 // pred_fallthru
    _
  %v27 = vld [vmem:[%s0] sm:$0xff]
  %v28 = vld [vmem:[%s0 + $0x8] sm:$0xff]
  %v29 = vld [vmem:[%s0 + $0x10] sm:$0xff]
  %v30 = vld [vmem:[%s0 + $0x18] sm:$0xff]
  %v31 = vld [vmem:[%s0 + $0x20] sm:$0xff]
  %v32 = vld [vmem:[%s0 + $0x28] sm:$0xff]
  %v33 = vld [vmem:[%s0 + $0x30] sm:$0xff]
  %v34 = vld [vmem:[%s0 + $0x38] sm:$0xff]
  %v35 = vld [vmem:[%s0 + $0x40] sm:$0xff]
  %v36 = vld [vmem:[%s0 + $0x48] sm:$0xff]
  %v37 = vld [vmem:[%s0 + $0x50] sm:$0xff]
  %v38 = vld [vmem:[%s0 + $0x58] sm:$0xff]
  %v39 = vld [vmem:[%s0 + $0x60] sm:$0xff]
  %v40 = vld [vmem:[%s0 + $0x68] sm:$0xff]
  %v41 = vld [vmem:[%s0 + $0x70] sm:$0xff]
  %v42 = vld [vmem:[%s0 + $0x78] sm:$0xff]
  %v43 = vld [vmem:[%s0 + $0x80] sm:$0xff]
  %v44 = vld [vmem:[%s0 + $0x88] sm:$0xff]
  %v45 = vld [vmem:[%s0 + $0x90] sm:$0xff]
  %v46 = vld [vmem:[%s0 + $0x98] sm:$0xff]
  %v47 = vld [vmem:[%s0 + $0xa0] sm:$0xff]
  %v48 = vld [vmem:[%s0 + $0xa8] sm:$0xff]
  %v49 = vld [vmem:[%s0 + $0xb0] sm:$0xff]
  %v50 = vld [vmem:[%s0 + $0xb8] sm:$0xff]
  %v51 = vld [vmem:[%s0 + $0xc0] sm:$0xff]
  %v52 = vld [vmem:[%s0 + $0xc8] sm:$0xff]
  %v53 = vld [vmem:[%s0 + $0xd0] sm:$0xff]
  %v54 = vld [vmem:[%s0 + $0xd8] sm:$0xff]
  %v55 = vld [vmem:[%s0 + $0xe0] sm:$0xff]
  %v56 = vld [vmem:[%s0 + $0xe8] sm:$0xff]
  %v57 = vld [vmem:[%s0 + $0xf0] sm:$0xff]
  %v58 = vld [vmem:[%s0 + $0xf8] sm:$0xff]
  %v59 = vld [vmem:[%s0 + $0x100] sm:$0xff]
  %v60 = vld [vmem:[%s0 + $0x108] sm:$0xff]
  %v61 = vld [vmem:[%s0 + $0x110] sm:$0xff]
  %v62 = vld [vmem:[%s0 + $0x118] sm:$0xff]
  %v63 = vld [vmem:[%s0 + $0x120] sm:$0xff]
  %v64 = vld [vmem:[%s0 + $0x128] sm:$0xff]
  %v65 = vld [vmem:[%s0 + $0x130] sm:$0xff]
  %v66 = vld [vmem:[%s0 + $0x138] sm:$0xff]
  %v67 = vld [vmem:[%s0 + $0x140] sm:$0xff]
  %v68 = vld [vmem:[%s0 + $0x148] sm:$0xff]
  %v69 = vld [vmem:[%s0 + $0x150] sm:$0xff]
  %v70 = vld [vmem:[%s0 + $0x158] sm:$0xff]
  %v71 = vld [vmem:[%s0 + $0x160] sm:$0xff]
  %v72 = vld [vmem:[%s0 + $0x168] sm:$0xff]
  %v73 = vld [vmem:[%s0 + $0x170] sm:$0xff]
  %v74 = vld [vmem:[%s0 + $0x178] sm:$0xff]
  %v75 = vld [vmem:[%s0 + $0x180] sm:$0xff]
  %v76 = vld [vmem:[%s0 + $0x188] sm:$0xff]
  %v77 = vld [vmem:[%s0 + $0x190] sm:$0xff]
  %v78 = vld [vmem:[%s0 + $0x198] sm:$0xff]
  %v79 = vld [vmem:[%s0 + $0x1a0] sm:$0xff]
  %v80 = vld [vmem:[%s0 + $0x1a8] sm:$0xff]
  %v81 = vld [vmem:[%s0 + $0x1b0] sm:$0xff]
  %v82 = vld [vmem:[%s0 + $0x1b8] sm:$0xff]
  %v83 = vld [vmem:[%s0 + $0x1c0] sm:$0xff]
  %v84 = vld [vmem:[%s0 + $0x1c8] sm:$0xff]
  %v85 = vld [vmem:[%s0 + $0x1d0] sm:$0xff]
  %v86 = vld [vmem:[%s0 + $0x1d8] sm:$0xff]
  %v87 = vld [vmem:[%s0 + $0x1e0] sm:$0xff]
  %v88 = vld [vmem:[%s0 + $0x1e8] sm:$0xff]
  %v89 = vld [vmem:[%s0 + $0x1f0] sm:$0xff]
  %v90 = vld [vmem:[%s0 + $0x1f8] sm:$0xff]
  %v91 = vld [vmem:[%s0 + $0x200] sm:$0xff]
  %v92 = vld [vmem:[%s0 + $0x208] sm:$0xff]
  %v93 = vld [vmem:[%s0 + $0x210] sm:$0xff]
  %v94 = vld [vmem:[%s0 + $0x218] sm:$0xff]
  %v95 = vld [vmem:[%s0 + $0x220] sm:$0xff]
  %v96 = vld [vmem:[%s0 + $0x228] sm:$0xff]
  %v97 = vld [vmem:[%s0 + $0x230] sm:$0xff]
  %v98 = vld [vmem:[%s0 + $0x238] sm:$0xff]
  %v99 = vld [vmem:[%s0 + $0x240] sm:$0xff]
  %v100 = vld [vmem:[%s0 + $0x248] sm:$0xff]
  %v101 = vld [vmem:[%s0 + $0x250] sm:$0xff]
  %v102 = vld [vmem:[%s0 + $0x258] sm:$0xff]
  %v103 = vld [vmem:[%s0 + $0x260] sm:$0xff]
  %v104 = vld [vmem:[%s0 + $0x268] sm:$0xff]
  %v105 = vld [vmem:[%s0 + $0x270] sm:$0xff]
  %v106 = vld [vmem:[%s0 + $0x278] sm:$0xff]
  %v107 = vld [vmem:[%s0 + $0x280] sm:$0xff]
  %v108 = vld [vmem:[%s0 + $0x288] sm:$0xff]
  %v109 = vld [vmem:[%s0 + $0x290] sm:$0xff]
  %v110 = vld [vmem:[%s0 + $0x298] sm:$0xff]
  %v111 = vld [vmem:[%s0 + $0x2a0] sm:$0xff]
  %v112 = vld [vmem:[%s0 + $0x2a8] sm:$0xff]
  %v113 = vld [vmem:[%s0 + $0x2b0] sm:$0xff]
  %v114 = vld [vmem:[%s0 + $0x2b8] sm:$0xff]
  %v115 = vld [vmem:[%s0 + $0x2c0] sm:$0xff]
  %v116 = vld [vmem:[%s0 + $0x2c8] sm:$0xff]
  %v117 = vld [vmem:[%s0 + $0x2d0] sm:$0xff]
  %v118 = vld [vmem:[%s0 + $0x2d8] sm:$0xff]
  %v119 = vld [vmem:[%s0 + $0x2e0] sm:$0xff]
  %v120 = vld [vmem:[%s0 + $0x2e8] sm:$0xff]
  %v121 = vld [vmem:[%s0 + $0x2f0] sm:$0xff]
  %v122 = vld [vmem:[%s0 + $0x2f8] sm:$0xff]
  %v123 = vld [vmem:[%s0 + $0x300] sm:$0xff]
  %v124 = vld [vmem:[%s0 + $0x308] sm:$0xff]
  %v125 = vld [vmem:[%s0 + $0x310] sm:$0xff]
  %v126 = vld [vmem:[%s0 + $0x318] sm:$0xff]
  %v127 = vld [vmem:[%s0 + $0x320] sm:$0xff]
  %v128 = vld [vmem:[%s0 + $0x328] sm:$0xff]
  %v129 = vld [vmem:[%s0 + $0x330] sm:$0xff]
  %v130 = vld [vmem:[%s0 + $0x338] sm:$0xff]
  %v131 = vld [vmem:[%s0 + $0x340] sm:$0xff]
  %v132 = vld [vmem:[%s0 + $0x348] sm:$0xff]
  %v133 = vld [vmem:[%s0 + $0x350] sm:$0xff]
  %v134 = vld [vmem:[%s0 + $0x358] sm:$0xff]
  %v135 = vld [vmem:[%s0 + $0x360] sm:$0xff]
  %v136 = vld [vmem:[%s0 + $0x368] sm:$0xff]
  %v137 = vld [vmem:[%s0 + $0x370] sm:$0xff]
  %v138 = vld [vmem:[%s0 + $0x378] sm:$0xff]
  %v139 = vld [vmem:[%s0 + $0x380] sm:$0xff]
  %v140 = vld [vmem:[%s0 + $0x388] sm:$0xff]
  %v141 = vld [vmem:[%s0 + $0x390] sm:$0xff]
  %v142 = vld [vmem:[%s0 + $0x398] sm:$0xff]
  %v143 = vld [vmem:[%s0 + $0x3a0] sm:$0xff]
  %v144 = vld [vmem:[%s0 + $0x3a8] sm:$0xff]
  %v145 = vld [vmem:[%s0 + $0x3b0] sm:$0xff]
  %v146 = vld [vmem:[%s0 + $0x3b8] sm:$0xff]
  %v147 = vld [vmem:[%s0 + $0x3c0] sm:$0xff]
  %v148 = vld [vmem:[%s0 + $0x3c8] sm:$0xff]
  %v149 = vld [vmem:[%s0 + $0x3d0] sm:$0xff]
  %v150 = vld [vmem:[%s0 + $0x3d8] sm:$0xff]
  %v151 = vld [vmem:[%s0 + $0x3e0] sm:$0xff]
  %v152 = vld [vmem:[%s0 + $0x3e8] sm:$0xff]
  %v153 = vld [vmem:[%s0 + $0x3f0] sm:$0xff]
  %v154 = vld [vmem:[%s0 + $0x3f8] sm:$0xff]
  %v155 = vld [vmem:[%s2] sm:$0xff]
  %v156 = vld [vmem:[%s2 + $0x8] sm:$0xff]
  %v157 = vld [vmem:[%s2 + $0x10] sm:$0xff]
  %v158 = vld [vmem:[%s2 + $0x18] sm:$0xff]
  %v159 = vld [vmem:[%s1] sm:$0xff]
  %v160 = vld [vmem:[%s1 + $0x8] sm:$0xff]
  %v161 = vld [vmem:[%s1 + $0x10] sm:$0xff]
  %v162 = vld [vmem:[%s1 + $0x18] sm:$0xff]
  %v163 = vld [vmem:[%s1 + $0x20] sm:$0xff]
  %v164 = vld [vmem:[%s1 + $0x28] sm:$0xff]
  %v165 = vld [vmem:[%s1 + $0x30] sm:$0xff]
  %v166 = vld [vmem:[%s1 + $0x38] sm:$0xff]
  %v167 = vld [vmem:[%s1 + $0x40] sm:$0xff]
  %v168 = vld [vmem:[%s1 + $0x48] sm:$0xff]
  %v169 = vld [vmem:[%s1 + $0x50] sm:$0xff]
  %v170 = vld [vmem:[%s1 + $0x58] sm:$0xff]
  %v171 = vld [vmem:[%s1 + $0x60] sm:$0xff]
  %v172 = vld [vmem:[%s1 + $0x68] sm:$0xff]
  %v173 = vld [vmem:[%s1 + $0x70] sm:$0xff]
  %v174 = vld [vmem:[%s1 + $0x78] sm:$0xff]
  %v175 = vld [vmem:[%s1 + $0x80] sm:$0xff]
  %v176 = vld [vmem:[%s1 + $0x88] sm:$0xff]
  %v177 = vld [vmem:[%s1 + $0x90] sm:$0xff]
  %v178 = vld [vmem:[%s1 + $0x98] sm:$0xff]
  %v179 = vld [vmem:[%s1 + $0xa0] sm:$0xff]
  %v180 = vld [vmem:[%s1 + $0xa8] sm:$0xff]
  %v181 = vld [vmem:[%s1 + $0xb0] sm:$0xff]
  %v182 = vld [vmem:[%s1 + $0xb8] sm:$0xff]
  %v183 = vld [vmem:[%s1 + $0xc0] sm:$0xff]
  %v184 = vld [vmem:[%s1 + $0xc8] sm:$0xff]
  %v185 = vld [vmem:[%s1 + $0xd0] sm:$0xff]
  %v186 = vld [vmem:[%s1 + $0xd8] sm:$0xff]
  %v187 = vld [vmem:[%s1 + $0xe0] sm:$0xff]
  %v188 = vld [vmem:[%s1 + $0xe8] sm:$0xff]
  %v189 = vld [vmem:[%s1 + $0xf0] sm:$0xff]
  %v190 = vld [vmem:[%s1 + $0xf8] sm:$0xff]
  %v191 = vld [vmem:[%s1 + $0x100] sm:$0xff]
  %v192 = vld [vmem:[%s1 + $0x108] sm:$0xff]
  %v193 = vld [vmem:[%s1 + $0x110] sm:$0xff]
  %v194 = vld [vmem:[%s1 + $0x118] sm:$0xff]
  %v195 = vld [vmem:[%s1 + $0x120] sm:$0xff]
  %v196 = vld [vmem:[%s1 + $0x128] sm:$0xff]
  %v197 = vld [vmem:[%s1 + $0x130] sm:$0xff]
  %v198 = vld [vmem:[%s1 + $0x138] sm:$0xff]
  %v199 = vld [vmem:[%s1 + $0x140] sm:$0xff]
  %v200 = vld [vmem:[%s1 + $0x148] sm:$0xff]
  %v201 = vld [vmem:[%s1 + $0x150] sm:$0xff]
  %v202 = vld [vmem:[%s1 + $0x158] sm:$0xff]
  %v203 = vld [vmem:[%s1 + $0x160] sm:$0xff]
  %v204 = vld [vmem:[%s1 + $0x168] sm:$0xff]
  %v205 = vld [vmem:[%s1 + $0x170] sm:$0xff]
  %v206 = vld [vmem:[%s1 + $0x178] sm:$0xff]
  %v207 = vld [vmem:[%s1 + $0x180] sm:$0xff]
  %v208 = vld [vmem:[%s1 + $0x188] sm:$0xff]
  %v209 = vld [vmem:[%s1 + $0x190] sm:$0xff]
  %v210 = vld [vmem:[%s1 + $0x198] sm:$0xff]
  %v211 = vld [vmem:[%s1 + $0x1a0] sm:$0xff]
  %v212 = vld [vmem:[%s1 + $0x1a8] sm:$0xff]
  %v213 = vld [vmem:[%s1 + $0x1b0] sm:$0xff]
  %v214 = vld [vmem:[%s1 + $0x1b8] sm:$0xff]
  %v215 = vld [vmem:[%s1 + $0x1c0] sm:$0xff]
  %v216 = vld [vmem:[%s1 + $0x1c8] sm:$0xff]
  %v217 = vld [vmem:[%s1 + $0x1d0] sm:$0xff]
  %v218 = vld [vmem:[%s1 + $0x1d8] sm:$0xff]
  %v219 = vld [vmem:[%s1 + $0x1e0] sm:$0xff]
  %v220 = vld [vmem:[%s1 + $0x1e8] sm:$0xff]
  %v221 = vld [vmem:[%s1 + $0x1f0] sm:$0xff]
  %v222 = vld [vmem:[%s1 + $0x1f8] sm:$0xff]
  %v223 = vld [vmem:[%s1 + $0x200] sm:$0xff]
  %v224 = vld [vmem:[%s1 + $0x208] sm:$0xff]
  %v225 = vld [vmem:[%s1 + $0x210] sm:$0xff]
  %v226 = vld [vmem:[%s1 + $0x218] sm:$0xff]
  %v227 = vld [vmem:[%s1 + $0x220] sm:$0xff]
  %v228 = vld [vmem:[%s1 + $0x228] sm:$0xff]
  %v229 = vld [vmem:[%s1 + $0x230] sm:$0xff]
  %v230 = vld [vmem:[%s1 + $0x238] sm:$0xff]
  %v231 = vld [vmem:[%s1 + $0x240] sm:$0xff]
  %v232 = vld [vmem:[%s1 + $0x248] sm:$0xff]
  %v233 = vld [vmem:[%s1 + $0x250] sm:$0xff]
  %v234 = vld [vmem:[%s1 + $0x258] sm:$0xff]
  %v235 = vld [vmem:[%s1 + $0x260] sm:$0xff]
  %v236 = vld [vmem:[%s1 + $0x268] sm:$0xff]
  %v237 = vld [vmem:[%s1 + $0x270] sm:$0xff]
  %v238 = vld [vmem:[%s1 + $0x278] sm:$0xff]
  %v239 = vld [vmem:[%s1 + $0x280] sm:$0xff]
  %v240 = vld [vmem:[%s1 + $0x288] sm:$0xff]
  %v241 = vld [vmem:[%s1 + $0x290] sm:$0xff]
  %v242 = vld [vmem:[%s1 + $0x298] sm:$0xff]
  %v243 = vld [vmem:[%s1 + $0x2a0] sm:$0xff]
  %v244 = vld [vmem:[%s1 + $0x2a8] sm:$0xff]
  %v245 = vld [vmem:[%s1 + $0x2b0] sm:$0xff]
  %v246 = vld [vmem:[%s1 + $0x2b8] sm:$0xff]
  %v247 = vld [vmem:[%s1 + $0x2c0] sm:$0xff]
  %v248 = vld [vmem:[%s1 + $0x2c8] sm:$0xff]
  %v249 = vld [vmem:[%s1 + $0x2d0] sm:$0xff]
  %v250 = vld [vmem:[%s1 + $0x2d8] sm:$0xff]
  %v251 = vld [vmem:[%s1 + $0x2e0] sm:$0xff]
  %v252 = vld [vmem:[%s1 + $0x2e8] sm:$0xff]
  %v253 = vld [vmem:[%s1 + $0x2f0] sm:$0xff]
  %v254 = vld [vmem:[%s1 + $0x2f8] sm:$0xff]
  %v255 = vld [vmem:[%s1 + $0x300] sm:$0xff]
  %v256 = vld [vmem:[%s1 + $0x308] sm:$0xff]
  %v257 = vld [vmem:[%s1 + $0x310] sm:$0xff]
  %v258 = vld [vmem:[%s1 + $0x318] sm:$0xff]
  %v259 = vld [vmem:[%s1 + $0x320] sm:$0xff]
  %v260 = vld [vmem:[%s1 + $0x328] sm:$0xff]
  %v261 = vld [vmem:[%s1 + $0x330] sm:$0xff]
  %v262 = vld [vmem:[%s1 + $0x338] sm:$0xff]
  %v263 = vld [vmem:[%s1 + $0x340] sm:$0xff]
  %v264 = vld [vmem:[%s1 + $0x348] sm:$0xff]
  %v265 = vld [vmem:[%s1 + $0x350] sm:$0xff]
  %v266 = vld [vmem:[%s1 + $0x358] sm:$0xff]
  %v267 = vld [vmem:[%s1 + $0x360] sm:$0xff]
  %v268 = vld [vmem:[%s1 + $0x368] sm:$0xff]
  %v269 = vld [vmem:[%s1 + $0x370] sm:$0xff]
  %v270 = vld [vmem:[%s1 + $0x378] sm:$0xff]
  %v271 = vld [vmem:[%s1 + $0x380] sm:$0xff]
  %v272 = vld [vmem:[%s1 + $0x388] sm:$0xff]
  %v273 = vld [vmem:[%s1 + $0x390] sm:$0xff]
  %v274 = vld [vmem:[%s1 + $0x398] sm:$0xff]
  %v275 = vld [vmem:[%s1 + $0x3a0] sm:$0xff]
  %v276 = vld [vmem:[%s1 + $0x3a8] sm:$0xff]
  %v277 = vld [vmem:[%s1 + $0x3b0] sm:$0xff]
  %v278 = vld [vmem:[%s1 + $0x3b8] sm:$0xff]
  %v279 = vld [vmem:[%s1 + $0x3c0] sm:$0xff]
  %v280 = vld [vmem:[%s1 + $0x3c8] sm:$0xff]
  %v281 = vld [vmem:[%s1 + $0x3d0] sm:$0xff]
  %v282 = vld [vmem:[%s1 + $0x3d8] sm:$0xff]
  %v283 = vld [vmem:[%s1 + $0x3e0] sm:$0xff]
  %v284 = vld [vmem:[%s1 + $0x3e8] sm:$0xff]
  %v285 = vld [vmem:[%s1 + $0x3f0] sm:$0xff]
  %v286 = vld [vmem:[%s1 + $0x3f8] sm:$0xff]
  %v287 = vld [vmem:[%s3] sm:$0xff]
  %v288 = vld [vmem:[%s3 + $0x8] sm:$0xff]
  %v289 = vld [vmem:[%s3 + $0x10] sm:$0xff]
  %v290 = vld [vmem:[%s3 + $0x18] sm:$0xff]
  %vm291 = vcmask 261120
  %v293 = vsel %vm291, %v159, 0
  %v296 = vsel %vm291, %v160, 0
  %v299 = vsel %vm291, %v161, 0
  %v302 = vsel %vm291, %v162, 0
  %v305 = vsel %vm291, %v163, 0
  %v308 = vsel %vm291, %v164, 0
  %v311 = vsel %vm291, %v165, 0
  %v314 = vsel %vm291, %v166, 0
  %v317 = vsel %vm291, %v167, 0
  %v320 = vsel %vm291, %v168, 0
  %v323 = vsel %vm291, %v169, 0
  %v326 = vsel %vm291, %v170, 0
  %v329 = vsel %vm291, %v171, 0
  %v332 = vsel %vm291, %v172, 0
  %v335 = vsel %vm291, %v173, 0
  %v338 = vsel %vm291, %v174, 0
  %v341 = vsel %vm291, %v175, 0
  %v344 = vsel %vm291, %v176, 0
  %v347 = vsel %vm291, %v177, 0
  %v350 = vsel %vm291, %v178, 0
  %v353 = vsel %vm291, %v179, 0
  %v356 = vsel %vm291, %v180, 0
  %v359 = vsel %vm291, %v181, 0
  %v362 = vsel %vm291, %v182, 0
  %v365 = vsel %vm291, %v183, 0
  %v368 = vsel %vm291, %v184, 0
  %v371 = vsel %vm291, %v185, 0
  %v374 = vsel %vm291, %v186, 0
  %v377 = vsel %vm291, %v187, 0
  %v380 = vsel %vm291, %v188, 0
  %v383 = vsel %vm291, %v189, 0
  %v386 = vsel %vm291, %v190, 0
  %v389 = vsel %vm291, %v191, 0
  %v392 = vsel %vm291, %v192, 0
  %v395 = vsel %vm291, %v193, 0
  %v398 = vsel %vm291, %v194, 0
  %v401 = vsel %vm291, %v195, 0
  %v404 = vsel %vm291, %v196, 0
  %v407 = vsel %vm291, %v197, 0
  %v410 = vsel %vm291, %v198, 0
  %v413 = vsel %vm291, %v199, 0
  %v416 = vsel %vm291, %v200, 0
  %v419 = vsel %vm291, %v201, 0
  %v422 = vsel %vm291, %v202, 0
  %v425 = vsel %vm291, %v203, 0
  %v428 = vsel %vm291, %v204, 0
  %v431 = vsel %vm291, %v205, 0
  %v434 = vsel %vm291, %v206, 0
  %v437 = vsel %vm291, %v207, 0
  %v440 = vsel %vm291, %v208, 0
  %v443 = vsel %vm291, %v209, 0
  %v446 = vsel %vm291, %v210, 0
  %v449 = vsel %vm291, %v211, 0
  %v452 = vsel %vm291, %v212, 0
  %v455 = vsel %vm291, %v213, 0
  %v458 = vsel %vm291, %v214, 0
  %v461 = vsel %vm291, %v215, 0
  %v464 = vsel %vm291, %v216, 0
  %v467 = vsel %vm291, %v217, 0
  %v470 = vsel %vm291, %v218, 0
  %v473 = vsel %vm291, %v219, 0
  %v476 = vsel %vm291, %v220, 0
  %v479 = vsel %vm291, %v221, 0
  %v482 = vsel %vm291, %v222, 0
  %v485 = vsel %vm291, %v223, 0
  %v488 = vsel %vm291, %v224, 0
  %v491 = vsel %vm291, %v225, 0
  %v494 = vsel %vm291, %v226, 0
  %v497 = vsel %vm291, %v227, 0
  %v500 = vsel %vm291, %v228, 0
  %v503 = vsel %vm291, %v229, 0
  %v506 = vsel %vm291, %v230, 0
  %v509 = vsel %vm291, %v231, 0
  %v512 = vsel %vm291, %v232, 0
  %v515 = vsel %vm291, %v233, 0
  %v518 = vsel %vm291, %v234, 0
  %v521 = vsel %vm291, %v235, 0
  %v524 = vsel %vm291, %v236, 0
  %v527 = vsel %vm291, %v237, 0
  %v530 = vsel %vm291, %v238, 0
  %v533 = vsel %vm291, %v239, 0
  %v536 = vsel %vm291, %v240, 0
  %v539 = vsel %vm291, %v241, 0
  %v542 = vsel %vm291, %v242, 0
  %v545 = vsel %vm291, %v243, 0
  %v548 = vsel %vm291, %v244, 0
  %v551 = vsel %vm291, %v245, 0
  %v554 = vsel %vm291, %v246, 0
  %v557 = vsel %vm291, %v247, 0
  %v560 = vsel %vm291, %v248, 0
  %v563 = vsel %vm291, %v249, 0
  %v566 = vsel %vm291, %v250, 0
  %v569 = vsel %vm291, %v251, 0
  %v572 = vsel %vm291, %v252, 0
  %v575 = vsel %vm291, %v253, 0
  %v578 = vsel %vm291, %v254, 0
  %v581 = vsel %vm291, %v255, 0
  %v584 = vsel %vm291, %v256, 0
  %v587 = vsel %vm291, %v257, 0
  %v590 = vsel %vm291, %v258, 0
  %v593 = vsel %vm291, %v259, 0
  %v596 = vsel %vm291, %v260, 0
  %v599 = vsel %vm291, %v261, 0
  %v602 = vsel %vm291, %v262, 0
  %v605 = vsel %vm291, %v263, 0
  %v608 = vsel %vm291, %v264, 0
  %v611 = vsel %vm291, %v265, 0
  %v614 = vsel %vm291, %v266, 0
  %v617 = vsel %vm291, %v267, 0
  %v620 = vsel %vm291, %v268, 0
  %v623 = vsel %vm291, %v269, 0
  %v626 = vsel %vm291, %v270, 0
  %v629 = vsel %vm291, %v271, 0
  %v632 = vsel %vm291, %v272, 0
  %v635 = vsel %vm291, %v273, 0
  %v638 = vsel %vm291, %v274, 0
  %v641 = vsel %vm291, %v275, 0
  %v644 = vsel %vm291, %v276, 0
  %v647 = vsel %vm291, %v277, 0
  %v650 = vsel %vm291, %v278, 0
  %v653 = vsel %vm291, %v279, 0
  %v656 = vsel %vm291, %v280, 0
  %v659 = vsel %vm291, %v281, 0
  %v662 = vsel %vm291, %v282, 0
  %v665 = vsel %vm291, %v283, 0
  %v668 = vsel %vm291, %v284, 0
  %v671 = vsel %vm291, %v285, 0
  %v674 = vsel %vm291, %v286, 0
  %676 = vmatpush.msra.mxu0 0.0
  %677 = vmatpush.msra.mxu0 0.0
  %678 = vmatpush.msra.mxu0 0.0
  %679 = vmatpush.msra.mxu0 0.0
  %680 = vmatpush.msra.mxu0 0.0
  %681 = vmatpush.msra.mxu0 0.0
  %682 = vmatpush.msra.mxu0 0.0
  %683 = vmatpush.msra.mxu0 0.0
  %684 = vmatpush.msra.mxu0 0.0
  %685 = vmatpush.msra.mxu0 0.0
  %686 = vmatpush.msra.mxu0 0.0
  %687 = vmatpush.msra.mxu0 0.0
  %688 = vmatpush.msra.mxu0 %v290
  %689 = vmatpush.msra.mxu0 %v289
  %690 = vmatpush.msra.mxu0 %v288
  %691 = vmatpush.msra.mxu0 %v287
  %692 = vmatmul.f32.gmra.mxu0 %v293
  %v693 = vpop.f32.mrf.mxu0
  %v694 = vadd.f32 0.0, %v693
  %695 = vmatmul.f32.gmra.mxu0 %v296
  %v696 = vpop.f32.mrf.mxu0
  %v697 = vadd.f32 0.0, %v696
  %698 = vmatmul.f32.gmra.mxu0 %v299
  %v699 = vpop.f32.mrf.mxu0
  %v700 = vadd.f32 0.0, %v699
  %701 = vmatmul.f32.gmra.mxu0 %v302
  %v702 = vpop.f32.mrf.mxu0
  %v703 = vadd.f32 0.0, %v702
  %704 = vmatmul.f32.gmra.mxu0 %v305
  %v705 = vpop.f32.mrf.mxu0
  %v706 = vadd.f32 0.0, %v705
  %707 = vmatmul.f32.gmra.mxu0 %v308
  %v708 = vpop.f32.mrf.mxu0
  %v709 = vadd.f32 0.0, %v708
  %710 = vmatmul.f32.gmra.mxu0 %v311
  %v711 = vpop.f32.mrf.mxu0
  %v712 = vadd.f32 0.0, %v711
  %713 = vmatmul.f32.gmra.mxu0 %v314
  %v714 = vpop.f32.mrf.mxu0
  %v715 = vadd.f32 0.0, %v714
  %716 = vmatmul.f32.gmra.mxu0 %v317
  %v717 = vpop.f32.mrf.mxu0
  %v718 = vadd.f32 0.0, %v717
  %719 = vmatmul.f32.gmra.mxu0 %v320
  %v720 = vpop.f32.mrf.mxu0
  %v721 = vadd.f32 0.0, %v720
  %722 = vmatmul.f32.gmra.mxu0 %v323
  %v723 = vpop.f32.mrf.mxu0
  %v724 = vadd.f32 0.0, %v723
  %725 = vmatmul.f32.gmra.mxu0 %v326
  %v726 = vpop.f32.mrf.mxu0
  %v727 = vadd.f32 0.0, %v726
  %728 = vmatmul.f32.gmra.mxu0 %v329
  %v729 = vpop.f32.mrf.mxu0
  %v730 = vadd.f32 0.0, %v729
  %731 = vmatmul.f32.gmra.mxu0 %v332
  %v732 = vpop.f32.mrf.mxu0
  %v733 = vadd.f32 0.0, %v732
  %734 = vmatmul.f32.gmra.mxu0 %v335
  %v735 = vpop.f32.mrf.mxu0
  %v736 = vadd.f32 0.0, %v735
  %737 = vmatmul.f32.gmra.mxu0 %v338
  %v738 = vpop.f32.mrf.mxu0
  %v739 = vadd.f32 0.0, %v738
  %740 = vmatmul.f32.gmra.mxu0 %v341
  %v741 = vpop.f32.mrf.mxu0
  %v742 = vadd.f32 0.0, %v741
  %743 = vmatmul.f32.gmra.mxu0 %v344
  %v744 = vpop.f32.mrf.mxu0
  %v745 = vadd.f32 0.0, %v744
  %746 = vmatmul.f32.gmra.mxu0 %v347
  %v747 = vpop.f32.mrf.mxu0
  %v748 = vadd.f32 0.0, %v747
  %749 = vmatmul.f32.gmra.mxu0 %v350
  %v750 = vpop.f32.mrf.mxu0
  %v751 = vadd.f32 0.0, %v750
  %752 = vmatmul.f32.gmra.mxu0 %v353
  %v753 = vpop.f32.mrf.mxu0
  %v754 = vadd.f32 0.0, %v753
  %755 = vmatmul.f32.gmra.mxu0 %v356
  %v756 = vpop.f32.mrf.mxu0
  %v757 = vadd.f32 0.0, %v756
  %758 = vmatmul.f32.gmra.mxu0 %v359
  %v759 = vpop.f32.mrf.mxu0
  %v760 = vadd.f32 0.0, %v759
  %761 = vmatmul.f32.gmra.mxu0 %v362
  %v762 = vpop.f32.mrf.mxu0
  %v763 = vadd.f32 0.0, %v762
  %764 = vmatmul.f32.gmra.mxu0 %v365
  %v765 = vpop.f32.mrf.mxu0
  %v766 = vadd.f32 0.0, %v765
  %767 = vmatmul.f32.gmra.mxu0 %v368
  %v768 = vpop.f32.mrf.mxu0
  %v769 = vadd.f32 0.0, %v768
  %770 = vmatmul.f32.gmra.mxu0 %v371
  %v771 = vpop.f32.mrf.mxu0
  %v772 = vadd.f32 0.0, %v771
  %773 = vmatmul.f32.gmra.mxu0 %v374
  %v774 = vpop.f32.mrf.mxu0
  %v775 = vadd.f32 0.0, %v774
  %776 = vmatmul.f32.gmra.mxu0 %v377
  %v777 = vpop.f32.mrf.mxu0
  %v778 = vadd.f32 0.0, %v777
  %779 = vmatmul.f32.gmra.mxu0 %v380
  %v780 = vpop.f32.mrf.mxu0
  %v781 = vadd.f32 0.0, %v780
  %782 = vmatmul.f32.gmra.mxu0 %v383
  %v783 = vpop.f32.mrf.mxu0
  %v784 = vadd.f32 0.0, %v783
  %785 = vmatmul.f32.gmra.mxu0 %v386
  %v786 = vpop.f32.mrf.mxu0
  %v787 = vadd.f32 0.0, %v786
  %788 = vmatmul.f32.gmra.mxu0 %v389
  %v789 = vpop.f32.mrf.mxu0
  %v790 = vadd.f32 0.0, %v789
  %791 = vmatmul.f32.gmra.mxu0 %v392
  %v792 = vpop.f32.mrf.mxu0
  %v793 = vadd.f32 0.0, %v792
  %794 = vmatmul.f32.gmra.mxu0 %v395
  %v795 = vpop.f32.mrf.mxu0
  %v796 = vadd.f32 0.0, %v795
  %797 = vmatmul.f32.gmra.mxu0 %v398
  %v798 = vpop.f32.mrf.mxu0
  %v799 = vadd.f32 0.0, %v798
  %800 = vmatmul.f32.gmra.mxu0 %v401
  %v801 = vpop.f32.mrf.mxu0
  %v802 = vadd.f32 0.0, %v801
  %803 = vmatmul.f32.gmra.mxu0 %v404
  %v804 = vpop.f32.mrf.mxu0
  %v805 = vadd.f32 0.0, %v804
  %806 = vmatmul.f32.gmra.mxu0 %v407
  %v807 = vpop.f32.mrf.mxu0
  %v808 = vadd.f32 0.0, %v807
  %809 = vmatmul.f32.gmra.mxu0 %v410
  %v810 = vpop.f32.mrf.mxu0
  %v811 = vadd.f32 0.0, %v810
  %812 = vmatmul.f32.gmra.mxu0 %v413
  %v813 = vpop.f32.mrf.mxu0
  %v814 = vadd.f32 0.0, %v813
  %815 = vmatmul.f32.gmra.mxu0 %v416
  %v816 = vpop.f32.mrf.mxu0
  %v817 = vadd.f32 0.0, %v816
  %818 = vmatmul.f32.gmra.mxu0 %v419
  %v819 = vpop.f32.mrf.mxu0
  %v820 = vadd.f32 0.0, %v819
  %821 = vmatmul.f32.gmra.mxu0 %v422
  %v822 = vpop.f32.mrf.mxu0
  %v823 = vadd.f32 0.0, %v822
  %824 = vmatmul.f32.gmra.mxu0 %v425
  %v825 = vpop.f32.mrf.mxu0
  %v826 = vadd.f32 0.0, %v825
  %827 = vmatmul.f32.gmra.mxu0 %v428
  %v828 = vpop.f32.mrf.mxu0
  %v829 = vadd.f32 0.0, %v828
  %830 = vmatmul.f32.gmra.mxu0 %v431
  %v831 = vpop.f32.mrf.mxu0
  %v832 = vadd.f32 0.0, %v831
  %833 = vmatmul.f32.gmra.mxu0 %v434
  %v834 = vpop.f32.mrf.mxu0
  %v835 = vadd.f32 0.0, %v834
  %836 = vmatmul.f32.gmra.mxu0 %v437
  %v837 = vpop.f32.mrf.mxu0
  %v838 = vadd.f32 0.0, %v837
  %839 = vmatmul.f32.gmra.mxu0 %v440
  %v840 = vpop.f32.mrf.mxu0
  %v841 = vadd.f32 0.0, %v840
  %842 = vmatmul.f32.gmra.mxu0 %v443
  %v843 = vpop.f32.mrf.mxu0
  %v844 = vadd.f32 0.0, %v843
  %845 = vmatmul.f32.gmra.mxu0 %v446
  %v846 = vpop.f32.mrf.mxu0
  %v847 = vadd.f32 0.0, %v846
  %848 = vmatmul.f32.gmra.mxu0 %v449
  %v849 = vpop.f32.mrf.mxu0
  %v850 = vadd.f32 0.0, %v849
  %851 = vmatmul.f32.gmra.mxu0 %v452
  %v852 = vpop.f32.mrf.mxu0
  %v853 = vadd.f32 0.0, %v852
  %854 = vmatmul.f32.gmra.mxu0 %v455
  %v855 = vpop.f32.mrf.mxu0
  %v856 = vadd.f32 0.0, %v855
  %857 = vmatmul.f32.gmra.mxu0 %v458
  %v858 = vpop.f32.mrf.mxu0
  %v859 = vadd.f32 0.0, %v858
  %860 = vmatmul.f32.gmra.mxu0 %v461
  %v861 = vpop.f32.mrf.mxu0
  %v862 = vadd.f32 0.0, %v861
  %863 = vmatmul.f32.gmra.mxu0 %v464
  %v864 = vpop.f32.mrf.mxu0
  %v865 = vadd.f32 0.0, %v864
  %866 = vmatmul.f32.gmra.mxu0 %v467
  %v867 = vpop.f32.mrf.mxu0
  %v868 = vadd.f32 0.0, %v867
  %869 = vmatmul.f32.gmra.mxu0 %v470
  %v870 = vpop.f32.mrf.mxu0
  %v871 = vadd.f32 0.0, %v870
  %872 = vmatmul.f32.gmra.mxu0 %v473
  %v873 = vpop.f32.mrf.mxu0
  %v874 = vadd.f32 0.0, %v873
  %875 = vmatmul.f32.gmra.mxu0 %v476
  %v876 = vpop.f32.mrf.mxu0
  %v877 = vadd.f32 0.0, %v876
  %878 = vmatmul.f32.gmra.mxu0 %v479
  %v879 = vpop.f32.mrf.mxu0
  %v880 = vadd.f32 0.0, %v879
  %881 = vmatmul.f32.gmra.mxu0 %v482
  %v882 = vpop.f32.mrf.mxu0
  %v883 = vadd.f32 0.0, %v882
  %884 = vmatmul.f32.gmra.mxu0 %v485
  %v885 = vpop.f32.mrf.mxu0
  %v886 = vadd.f32 0.0, %v885
  %887 = vmatmul.f32.gmra.mxu0 %v488
  %v888 = vpop.f32.mrf.mxu0
  %v889 = vadd.f32 0.0, %v888
  %890 = vmatmul.f32.gmra.mxu0 %v491
  %v891 = vpop.f32.mrf.mxu0
  %v892 = vadd.f32 0.0, %v891
  %893 = vmatmul.f32.gmra.mxu0 %v494
  %v894 = vpop.f32.mrf.mxu0
  %v895 = vadd.f32 0.0, %v894
  %896 = vmatmul.f32.gmra.mxu0 %v497
  %v897 = vpop.f32.mrf.mxu0
  %v898 = vadd.f32 0.0, %v897
  %899 = vmatmul.f32.gmra.mxu0 %v500
  %v900 = vpop.f32.mrf.mxu0
  %v901 = vadd.f32 0.0, %v900
  %902 = vmatmul.f32.gmra.mxu0 %v503
  %v903 = vpop.f32.mrf.mxu0
  %v904 = vadd.f32 0.0, %v903
  %905 = vmatmul.f32.gmra.mxu0 %v506
  %v906 = vpop.f32.mrf.mxu0
  %v907 = vadd.f32 0.0, %v906
  %908 = vmatmul.f32.gmra.mxu0 %v509
  %v909 = vpop.f32.mrf.mxu0
  %v910 = vadd.f32 0.0, %v909
  %911 = vmatmul.f32.gmra.mxu0 %v512
  %v912 = vpop.f32.mrf.mxu0
  %v913 = vadd.f32 0.0, %v912
  %914 = vmatmul.f32.gmra.mxu0 %v515
  %v915 = vpop.f32.mrf.mxu0
  %v916 = vadd.f32 0.0, %v915
  %917 = vmatmul.f32.gmra.mxu0 %v518
  %v918 = vpop.f32.mrf.mxu0
  %v919 = vadd.f32 0.0, %v918
  %920 = vmatmul.f32.gmra.mxu0 %v521
  %v921 = vpop.f32.mrf.mxu0
  %v922 = vadd.f32 0.0, %v921
  %923 = vmatmul.f32.gmra.mxu0 %v524
  %v924 = vpop.f32.mrf.mxu0
  %v925 = vadd.f32 0.0, %v924
  %926 = vmatmul.f32.gmra.mxu0 %v527
  %v927 = vpop.f32.mrf.mxu0
  %v928 = vadd.f32 0.0, %v927
  %929 = vmatmul.f32.gmra.mxu0 %v530
  %v930 = vpop.f32.mrf.mxu0
  %v931 = vadd.f32 0.0, %v930
  %932 = vmatmul.f32.gmra.mxu0 %v533
  %v933 = vpop.f32.mrf.mxu0
  %v934 = vadd.f32 0.0, %v933
  %935 = vmatmul.f32.gmra.mxu0 %v536
  %v936 = vpop.f32.mrf.mxu0
  %v937 = vadd.f32 0.0, %v936
  %938 = vmatmul.f32.gmra.mxu0 %v539
  %v939 = vpop.f32.mrf.mxu0
  %v940 = vadd.f32 0.0, %v939
  %941 = vmatmul.f32.gmra.mxu0 %v542
  %v942 = vpop.f32.mrf.mxu0
  %v943 = vadd.f32 0.0, %v942
  %944 = vmatmul.f32.gmra.mxu0 %v545
  %v945 = vpop.f32.mrf.mxu0
  %v946 = vadd.f32 0.0, %v945
  %947 = vmatmul.f32.gmra.mxu0 %v548
  %v948 = vpop.f32.mrf.mxu0
  %v949 = vadd.f32 0.0, %v948
  %950 = vmatmul.f32.gmra.mxu0 %v551
  %v951 = vpop.f32.mrf.mxu0
  %v952 = vadd.f32 0.0, %v951
  %953 = vmatmul.f32.gmra.mxu0 %v554
  %v954 = vpop.f32.mrf.mxu0
  %v955 = vadd.f32 0.0, %v954
  %956 = vmatmul.f32.gmra.mxu0 %v557
  %v957 = vpop.f32.mrf.mxu0
  %v958 = vadd.f32 0.0, %v957
  %959 = vmatmul.f32.gmra.mxu0 %v560
  %v960 = vpop.f32.mrf.mxu0
  %v961 = vadd.f32 0.0, %v960
  %962 = vmatmul.f32.gmra.mxu0 %v563
  %v963 = vpop.f32.mrf.mxu0
  %v964 = vadd.f32 0.0, %v963
  %965 = vmatmul.f32.gmra.mxu0 %v566
  %v966 = vpop.f32.mrf.mxu0
  %v967 = vadd.f32 0.0, %v966
  %968 = vmatmul.f32.gmra.mxu0 %v569
  %v969 = vpop.f32.mrf.mxu0
  %v970 = vadd.f32 0.0, %v969
  %971 = vmatmul.f32.gmra.mxu0 %v572
  %v972 = vpop.f32.mrf.mxu0
  %v973 = vadd.f32 0.0, %v972
  %974 = vmatmul.f32.gmra.mxu0 %v575
  %v975 = vpop.f32.mrf.mxu0
  %v976 = vadd.f32 0.0, %v975
  %977 = vmatmul.f32.gmra.mxu0 %v578
  %v978 = vpop.f32.mrf.mxu0
  %v979 = vadd.f32 0.0, %v978
  %980 = vmatmul.f32.gmra.mxu0 %v581
  %v981 = vpop.f32.mrf.mxu0
  %v982 = vadd.f32 0.0, %v981
  %983 = vmatmul.f32.gmra.mxu0 %v584
  %v984 = vpop.f32.mrf.mxu0
  %v985 = vadd.f32 0.0, %v984
  %986 = vmatmul.f32.gmra.mxu0 %v587
  %v987 = vpop.f32.mrf.mxu0
  %v988 = vadd.f32 0.0, %v987
  %989 = vmatmul.f32.gmra.mxu0 %v590
  %v990 = vpop.f32.mrf.mxu0
  %v991 = vadd.f32 0.0, %v990
  %992 = vmatmul.f32.gmra.mxu0 %v593
  %v993 = vpop.f32.mrf.mxu0
  %v994 = vadd.f32 0.0, %v993
  %995 = vmatmul.f32.gmra.mxu0 %v596
  %v996 = vpop.f32.mrf.mxu0
  %v997 = vadd.f32 0.0, %v996
  %998 = vmatmul.f32.gmra.mxu0 %v599
  %v999 = vpop.f32.mrf.mxu0
  %v1000 = vadd.f32 0.0, %v999
  %1001 = vmatmul.f32.gmra.mxu0 %v602
  %v1002 = vpop.f32.mrf.mxu0
  %v1003 = vadd.f32 0.0, %v1002
  %1004 = vmatmul.f32.gmra.mxu0 %v605
  %v1005 = vpop.f32.mrf.mxu0
  %v1006 = vadd.f32 0.0, %v1005
  %1007 = vmatmul.f32.gmra.mxu0 %v608
  %v1008 = vpop.f32.mrf.mxu0
  %v1009 = vadd.f32 0.0, %v1008
  %1010 = vmatmul.f32.gmra.mxu0 %v611
  %v1011 = vpop.f32.mrf.mxu0
  %v1012 = vadd.f32 0.0, %v1011
  %1013 = vmatmul.f32.gmra.mxu0 %v614
  %v1014 = vpop.f32.mrf.mxu0
  %v1015 = vadd.f32 0.0, %v1014
  %1016 = vmatmul.f32.gmra.mxu0 %v617
  %v1017 = vpop.f32.mrf.mxu0
  %v1018 = vadd.f32 0.0, %v1017
  %1019 = vmatmul.f32.gmra.mxu0 %v620
  %v1020 = vpop.f32.mrf.mxu0
  %v1021 = vadd.f32 0.0, %v1020
  %1022 = vmatmul.f32.gmra.mxu0 %v623
  %v1023 = vpop.f32.mrf.mxu0
  %v1024 = vadd.f32 0.0, %v1023
  %1025 = vmatmul.f32.gmra.mxu0 %v626
  %v1026 = vpop.f32.mrf.mxu0
  %v1027 = vadd.f32 0.0, %v1026
  %1028 = vmatmul.f32.gmra.mxu0 %v629
  %v1029 = vpop.f32.mrf.mxu0
  %v1030 = vadd.f32 0.0, %v1029
  %1031 = vmatmul.f32.gmra.mxu0 %v632
  %v1032 = vpop.f32.mrf.mxu0
  %v1033 = vadd.f32 0.0, %v1032
  %1034 = vmatmul.f32.gmra.mxu0 %v635
  %v1035 = vpop.f32.mrf.mxu0
  %v1036 = vadd.f32 0.0, %v1035
  %1037 = vmatmul.f32.gmra.mxu0 %v638
  %v1038 = vpop.f32.mrf.mxu0
  %v1039 = vadd.f32 0.0, %v1038
  %1040 = vmatmul.f32.gmra.mxu0 %v641
  %v1041 = vpop.f32.mrf.mxu0
  %v1042 = vadd.f32 0.0, %v1041
  %1043 = vmatmul.f32.gmra.mxu0 %v644
  %v1044 = vpop.f32.mrf.mxu0
  %v1045 = vadd.f32 0.0, %v1044
  %1046 = vmatmul.f32.gmra.mxu0 %v647
  %v1047 = vpop.f32.mrf.mxu0
  %v1048 = vadd.f32 0.0, %v1047
  %1049 = vmatmul.f32.gmra.mxu0 %v650
  %v1050 = vpop.f32.mrf.mxu0
  %v1051 = vadd.f32 0.0, %v1050
  %1052 = vmatmul.f32.gmra.mxu0 %v653
  %v1053 = vpop.f32.mrf.mxu0
  %v1054 = vadd.f32 0.0, %v1053
  %1055 = vmatmul.f32.gmra.mxu0 %v656
  %v1056 = vpop.f32.mrf.mxu0
  %v1057 = vadd.f32 0.0, %v1056
  %1058 = vmatmul.f32.gmra.mxu0 %v659
  %v1059 = vpop.f32.mrf.mxu0
  %v1060 = vadd.f32 0.0, %v1059
  %1061 = vmatmul.f32.gmra.mxu0 %v662
  %v1062 = vpop.f32.mrf.mxu0
  %v1063 = vadd.f32 0.0, %v1062
  %1064 = vmatmul.f32.gmra.mxu0 %v665
  %v1065 = vpop.f32.mrf.mxu0
  %v1066 = vadd.f32 0.0, %v1065
  %1067 = vmatmul.f32.gmra.mxu0 %v668
  %v1068 = vpop.f32.mrf.mxu0
  %v1069 = vadd.f32 0.0, %v1068
  %1070 = vmatmul.f32.gmra.mxu0 %v671
  %v1071 = vpop.f32.mrf.mxu0
  %v1072 = vadd.f32 0.0, %v1071
  %1073 = vmatmul.f32.gmra.mxu0 %v674
  %v1074 = vpop.f32.mrf.mxu0
  %v1075 = vadd.f32 0.0, %v1074
  %1076 = vdwg.mxu0
  %v1078 = vsel %vm291, %v27, 0
  %v1081 = vsel %vm291, %v28, 0
  %v1084 = vsel %vm291, %v29, 0
  %v1087 = vsel %vm291, %v30, 0
  %v1090 = vsel %vm291, %v31, 0
  %v1093 = vsel %vm291, %v32, 0
  %v1096 = vsel %vm291, %v33, 0
  %v1099 = vsel %vm291, %v34, 0
  %v1102 = vsel %vm291, %v35, 0
  %v1105 = vsel %vm291, %v36, 0
  %v1108 = vsel %vm291, %v37, 0
  %v1111 = vsel %vm291, %v38, 0
  %v1114 = vsel %vm291, %v39, 0
  %v1117 = vsel %vm291, %v40, 0
  %v1120 = vsel %vm291, %v41, 0
  %v1123 = vsel %vm291, %v42, 0
  %v1126 = vsel %vm291, %v43, 0
  %v1129 = vsel %vm291, %v44, 0
  %v1132 = vsel %vm291, %v45, 0
  %v1135 = vsel %vm291, %v46, 0
  %v1138 = vsel %vm291, %v47, 0
  %v1141 = vsel %vm291, %v48, 0
  %v1144 = vsel %vm291, %v49, 0
  %v1147 = vsel %vm291, %v50, 0
  %v1150 = vsel %vm291, %v51, 0
  %v1153 = vsel %vm291, %v52, 0
  %v1156 = vsel %vm291, %v53, 0
  %v1159 = vsel %vm291, %v54, 0
  %v1162 = vsel %vm291, %v55, 0
  %v1165 = vsel %vm291, %v56, 0
  %v1168 = vsel %vm291, %v57, 0
  %v1171 = vsel %vm291, %v58, 0
  %v1174 = vsel %vm291, %v59, 0
  %v1177 = vsel %vm291, %v60, 0
  %v1180 = vsel %vm291, %v61, 0
  %v1183 = vsel %vm291, %v62, 0
  %v1186 = vsel %vm291, %v63, 0
  %v1189 = vsel %vm291, %v64, 0
  %v1192 = vsel %vm291, %v65, 0
  %v1195 = vsel %vm291, %v66, 0
  %v1198 = vsel %vm291, %v67, 0
  %v1201 = vsel %vm291, %v68, 0
  %v1204 = vsel %vm291, %v69, 0
  %v1207 = vsel %vm291, %v70, 0
  %v1210 = vsel %vm291, %v71, 0
  %v1213 = vsel %vm291, %v72, 0
  %v1216 = vsel %vm291, %v73, 0
  %v1219 = vsel %vm291, %v74, 0
  %v1222 = vsel %vm291, %v75, 0
  %v1225 = vsel %vm291, %v76, 0
  %v1228 = vsel %vm291, %v77, 0
  %v1231 = vsel %vm291, %v78, 0
  %v1234 = vsel %vm291, %v79, 0
  %v1237 = vsel %vm291, %v80, 0
  %v1240 = vsel %vm291, %v81, 0
  %v1243 = vsel %vm291, %v82, 0
  %v1246 = vsel %vm291, %v83, 0
  %v1249 = vsel %vm291, %v84, 0
  %v1252 = vsel %vm291, %v85, 0
  %v1255 = vsel %vm291, %v86, 0
  %v1258 = vsel %vm291, %v87, 0
  %v1261 = vsel %vm291, %v88, 0
  %v1264 = vsel %vm291, %v89, 0
  %v1267 = vsel %vm291, %v90, 0
  %v1270 = vsel %vm291, %v91, 0
  %v1273 = vsel %vm291, %v92, 0
  %v1276 = vsel %vm291, %v93, 0
  %v1279 = vsel %vm291, %v94, 0
  %v1282 = vsel %vm291, %v95, 0
  %v1285 = vsel %vm291, %v96, 0
  %v1288 = vsel %vm291, %v97, 0
  %v1291 = vsel %vm291, %v98, 0
  %v1294 = vsel %vm291, %v99, 0
  %v1297 = vsel %vm291, %v100, 0
  %v1300 = vsel %vm291, %v101, 0
  %v1303 = vsel %vm291, %v102, 0
  %v1306 = vsel %vm291, %v103, 0
  %v1309 = vsel %vm291, %v104, 0
  %v1312 = vsel %vm291, %v105, 0
  %v1315 = vsel %vm291, %v106, 0
  %v1318 = vsel %vm291, %v107, 0
  %v1321 = vsel %vm291, %v108, 0
  %v1324 = vsel %vm291, %v109, 0
  %v1327 = vsel %vm291, %v110, 0
  %v1330 = vsel %vm291, %v111, 0
  %v1333 = vsel %vm291, %v112, 0
  %v1336 = vsel %vm291, %v113, 0
  %v1339 = vsel %vm291, %v114, 0
  %v1342 = vsel %vm291, %v115, 0
  %v1345 = vsel %vm291, %v116, 0
  %v1348 = vsel %vm291, %v117, 0
  %v1351 = vsel %vm291, %v118, 0
  %v1354 = vsel %vm291, %v119, 0
  %v1357 = vsel %vm291, %v120, 0
  %v1360 = vsel %vm291, %v121, 0
  %v1363 = vsel %vm291, %v122, 0
  %v1366 = vsel %vm291, %v123, 0
  %v1369 = vsel %vm291, %v124, 0
  %v1372 = vsel %vm291, %v125, 0
  %v1375 = vsel %vm291, %v126, 0
  %v1378 = vsel %vm291, %v127, 0
  %v1381 = vsel %vm291, %v128, 0
  %v1384 = vsel %vm291, %v129, 0
  %v1387 = vsel %vm291, %v130, 0
  %v1390 = vsel %vm291, %v131, 0
  %v1393 = vsel %vm291, %v132, 0
  %v1396 = vsel %vm291, %v133, 0
  %v1399 = vsel %vm291, %v134, 0
  %v1402 = vsel %vm291, %v135, 0
  %v1405 = vsel %vm291, %v136, 0
  %v1408 = vsel %vm291, %v137, 0
  %v1411 = vsel %vm291, %v138, 0
  %v1414 = vsel %vm291, %v139, 0
  %v1417 = vsel %vm291, %v140, 0
  %v1420 = vsel %vm291, %v141, 0
  %v1423 = vsel %vm291, %v142, 0
  %v1426 = vsel %vm291, %v143, 0
  %v1429 = vsel %vm291, %v144, 0
  %v1432 = vsel %vm291, %v145, 0
  %v1435 = vsel %vm291, %v146, 0
  %v1438 = vsel %vm291, %v147, 0
  %v1441 = vsel %vm291, %v148, 0
  %v1444 = vsel %vm291, %v149, 0
  %v1447 = vsel %vm291, %v150, 0
  %v1450 = vsel %vm291, %v151, 0
  %v1453 = vsel %vm291, %v152, 0
  %v1456 = vsel %vm291, %v153, 0
  %v1459 = vsel %vm291, %v154, 0
  %1461 = vmatpush.msra.mxu0 0.0
  %1462 = vmatpush.msra.mxu0 0.0
  %1463 = vmatpush.msra.mxu0 0.0
  %1464 = vmatpush.msra.mxu0 0.0
  %1465 = vmatpush.msra.mxu0 0.0
  %1466 = vmatpush.msra.mxu0 0.0
  %1467 = vmatpush.msra.mxu0 0.0
  %1468 = vmatpush.msra.mxu0 0.0
  %1469 = vmatpush.msra.mxu0 0.0
  %1470 = vmatpush.msra.mxu0 0.0
  %1471 = vmatpush.msra.mxu0 0.0
  %1472 = vmatpush.msra.mxu0 0.0
  %1473 = vmatpush.msra.mxu0 %v158
  %1474 = vmatpush.msra.mxu0 %v157
  %1475 = vmatpush.msra.mxu0 %v156
  %1476 = vmatpush.msra.mxu0 %v155
  %1477 = vmatmul.f32.gmra.mxu0 %v1078
  %v1478 = vpop.f32.mrf.mxu0
  %v1479 = vadd.f32 %v694, %v1478
  %1480 = vmatmul.f32.gmra.mxu0 %v1081
  %v1481 = vpop.f32.mrf.mxu0
  %v1482 = vadd.f32 %v697, %v1481
  %1483 = vmatmul.f32.gmra.mxu0 %v1084
  %v1484 = vpop.f32.mrf.mxu0
  %v1485 = vadd.f32 %v700, %v1484
  %1486 = vmatmul.f32.gmra.mxu0 %v1087
  %v1487 = vpop.f32.mrf.mxu0
  %v1488 = vadd.f32 %v703, %v1487
  %1489 = vmatmul.f32.gmra.mxu0 %v1090
  %v1490 = vpop.f32.mrf.mxu0
  %v1491 = vadd.f32 %v706, %v1490
  %1492 = vmatmul.f32.gmra.mxu0 %v1093
  %v1493 = vpop.f32.mrf.mxu0
  %v1494 = vadd.f32 %v709, %v1493
  %1495 = vmatmul.f32.gmra.mxu0 %v1096
  %v1496 = vpop.f32.mrf.mxu0
  %v1497 = vadd.f32 %v712, %v1496
  %1498 = vmatmul.f32.gmra.mxu0 %v1099
  %v1499 = vpop.f32.mrf.mxu0
  %v1500 = vadd.f32 %v715, %v1499
  %1501 = vmatmul.f32.gmra.mxu0 %v1102
  %v1502 = vpop.f32.mrf.mxu0
  %v1503 = vadd.f32 %v718, %v1502
  %1504 = vmatmul.f32.gmra.mxu0 %v1105
  %v1505 = vpop.f32.mrf.mxu0
  %v1506 = vadd.f32 %v721, %v1505
  %1507 = vmatmul.f32.gmra.mxu0 %v1108
  %v1508 = vpop.f32.mrf.mxu0
  %v1509 = vadd.f32 %v724, %v1508
  %1510 = vmatmul.f32.gmra.mxu0 %v1111
  %v1511 = vpop.f32.mrf.mxu0
  %v1512 = vadd.f32 %v727, %v1511
  %1513 = vmatmul.f32.gmra.mxu0 %v1114
  %v1514 = vpop.f32.mrf.mxu0
  %v1515 = vadd.f32 %v730, %v1514
  %1516 = vmatmul.f32.gmra.mxu0 %v1117
  %v1517 = vpop.f32.mrf.mxu0
  %v1518 = vadd.f32 %v733, %v1517
  %1519 = vmatmul.f32.gmra.mxu0 %v1120
  %v1520 = vpop.f32.mrf.mxu0
  %v1521 = vadd.f32 %v736, %v1520
  %1522 = vmatmul.f32.gmra.mxu0 %v1123
  %v1523 = vpop.f32.mrf.mxu0
  %v1524 = vadd.f32 %v739, %v1523
  %1525 = vmatmul.f32.gmra.mxu0 %v1126
  %v1526 = vpop.f32.mrf.mxu0
  %v1527 = vadd.f32 %v742, %v1526
  %1528 = vmatmul.f32.gmra.mxu0 %v1129
  %v1529 = vpop.f32.mrf.mxu0
  %v1530 = vadd.f32 %v745, %v1529
  %1531 = vmatmul.f32.gmra.mxu0 %v1132
  %v1532 = vpop.f32.mrf.mxu0
  %v1533 = vadd.f32 %v748, %v1532
  %1534 = vmatmul.f32.gmra.mxu0 %v1135
  %v1535 = vpop.f32.mrf.mxu0
  %v1536 = vadd.f32 %v751, %v1535
  %1537 = vmatmul.f32.gmra.mxu0 %v1138
  %v1538 = vpop.f32.mrf.mxu0
  %v1539 = vadd.f32 %v754, %v1538
  %1540 = vmatmul.f32.gmra.mxu0 %v1141
  %v1541 = vpop.f32.mrf.mxu0
  %v1542 = vadd.f32 %v757, %v1541
  %1543 = vmatmul.f32.gmra.mxu0 %v1144
  %v1544 = vpop.f32.mrf.mxu0
  %v1545 = vadd.f32 %v760, %v1544
  %1546 = vmatmul.f32.gmra.mxu0 %v1147
  %v1547 = vpop.f32.mrf.mxu0
  %v1548 = vadd.f32 %v763, %v1547
  %1549 = vmatmul.f32.gmra.mxu0 %v1150
  %v1550 = vpop.f32.mrf.mxu0
  %v1551 = vadd.f32 %v766, %v1550
  %1552 = vmatmul.f32.gmra.mxu0 %v1153
  %v1553 = vpop.f32.mrf.mxu0
  %v1554 = vadd.f32 %v769, %v1553
  %1555 = vmatmul.f32.gmra.mxu0 %v1156
  %v1556 = vpop.f32.mrf.mxu0
  %v1557 = vadd.f32 %v772, %v1556
  %1558 = vmatmul.f32.gmra.mxu0 %v1159
  %v1559 = vpop.f32.mrf.mxu0
  %v1560 = vadd.f32 %v775, %v1559
  %1561 = vmatmul.f32.gmra.mxu0 %v1162
  %v1562 = vpop.f32.mrf.mxu0
  %v1563 = vadd.f32 %v778, %v1562
  %1564 = vmatmul.f32.gmra.mxu0 %v1165
  %v1565 = vpop.f32.mrf.mxu0
  %v1566 = vadd.f32 %v781, %v1565
  %1567 = vmatmul.f32.gmra.mxu0 %v1168
  %v1568 = vpop.f32.mrf.mxu0
  %v1569 = vadd.f32 %v784, %v1568
  %1570 = vmatmul.f32.gmra.mxu0 %v1171
  %v1571 = vpop.f32.mrf.mxu0
  %v1572 = vadd.f32 %v787, %v1571
  %1573 = vmatmul.f32.gmra.mxu0 %v1174
  %v1574 = vpop.f32.mrf.mxu0
  %v1575 = vadd.f32 %v790, %v1574
  %1576 = vmatmul.f32.gmra.mxu0 %v1177
  %v1577 = vpop.f32.mrf.mxu0
  %v1578 = vadd.f32 %v793, %v1577
  %1579 = vmatmul.f32.gmra.mxu0 %v1180
  %v1580 = vpop.f32.mrf.mxu0
  %v1581 = vadd.f32 %v796, %v1580
  %1582 = vmatmul.f32.gmra.mxu0 %v1183
  %v1583 = vpop.f32.mrf.mxu0
  %v1584 = vadd.f32 %v799, %v1583
  %1585 = vmatmul.f32.gmra.mxu0 %v1186
  %v1586 = vpop.f32.mrf.mxu0
  %v1587 = vadd.f32 %v802, %v1586
  %1588 = vmatmul.f32.gmra.mxu0 %v1189
  %v1589 = vpop.f32.mrf.mxu0
  %v1590 = vadd.f32 %v805, %v1589
  %1591 = vmatmul.f32.gmra.mxu0 %v1192
  %v1592 = vpop.f32.mrf.mxu0
  %v1593 = vadd.f32 %v808, %v1592
  %1594 = vmatmul.f32.gmra.mxu0 %v1195
  %v1595 = vpop.f32.mrf.mxu0
  %v1596 = vadd.f32 %v811, %v1595
  %1597 = vmatmul.f32.gmra.mxu0 %v1198
  %v1598 = vpop.f32.mrf.mxu0
  %v1599 = vadd.f32 %v814, %v1598
  %1600 = vmatmul.f32.gmra.mxu0 %v1201
  %v1601 = vpop.f32.mrf.mxu0
  %v1602 = vadd.f32 %v817, %v1601
  %1603 = vmatmul.f32.gmra.mxu0 %v1204
  %v1604 = vpop.f32.mrf.mxu0
  %v1605 = vadd.f32 %v820, %v1604
  %1606 = vmatmul.f32.gmra.mxu0 %v1207
  %v1607 = vpop.f32.mrf.mxu0
  %v1608 = vadd.f32 %v823, %v1607
  %1609 = vmatmul.f32.gmra.mxu0 %v1210
  %v1610 = vpop.f32.mrf.mxu0
  %v1611 = vadd.f32 %v826, %v1610
  %1612 = vmatmul.f32.gmra.mxu0 %v1213
  %v1613 = vpop.f32.mrf.mxu0
  %v1614 = vadd.f32 %v829, %v1613
  %1615 = vmatmul.f32.gmra.mxu0 %v1216
  %v1616 = vpop.f32.mrf.mxu0
  %v1617 = vadd.f32 %v832, %v1616
  %1618 = vmatmul.f32.gmra.mxu0 %v1219
  %v1619 = vpop.f32.mrf.mxu0
  %v1620 = vadd.f32 %v835, %v1619
  %1621 = vmatmul.f32.gmra.mxu0 %v1222
  %v1622 = vpop.f32.mrf.mxu0
  %v1623 = vadd.f32 %v838, %v1622
  %1624 = vmatmul.f32.gmra.mxu0 %v1225
  %v1625 = vpop.f32.mrf.mxu0
  %v1626 = vadd.f32 %v841, %v1625
  %1627 = vmatmul.f32.gmra.mxu0 %v1228
  %v1628 = vpop.f32.mrf.mxu0
  %v1629 = vadd.f32 %v844, %v1628
  %1630 = vmatmul.f32.gmra.mxu0 %v1231
  %v1631 = vpop.f32.mrf.mxu0
  %v1632 = vadd.f32 %v847, %v1631
  %1633 = vmatmul.f32.gmra.mxu0 %v1234
  %v1634 = vpop.f32.mrf.mxu0
  %v1635 = vadd.f32 %v850, %v1634
  %1636 = vmatmul.f32.gmra.mxu0 %v1237
  %v1637 = vpop.f32.mrf.mxu0
  %v1638 = vadd.f32 %v853, %v1637
  %1639 = vmatmul.f32.gmra.mxu0 %v1240
  %v1640 = vpop.f32.mrf.mxu0
  %v1641 = vadd.f32 %v856, %v1640
  %1642 = vmatmul.f32.gmra.mxu0 %v1243
  %v1643 = vpop.f32.mrf.mxu0
  %v1644 = vadd.f32 %v859, %v1643
  %1645 = vmatmul.f32.gmra.mxu0 %v1246
  %v1646 = vpop.f32.mrf.mxu0
  %v1647 = vadd.f32 %v862, %v1646
  %1648 = vmatmul.f32.gmra.mxu0 %v1249
  %v1649 = vpop.f32.mrf.mxu0
  %v1650 = vadd.f32 %v865, %v1649
  %1651 = vmatmul.f32.gmra.mxu0 %v1252
  %v1652 = vpop.f32.mrf.mxu0
  %v1653 = vadd.f32 %v868, %v1652
  %1654 = vmatmul.f32.gmra.mxu0 %v1255
  %v1655 = vpop.f32.mrf.mxu0
  %v1656 = vadd.f32 %v871, %v1655
  %1657 = vmatmul.f32.gmra.mxu0 %v1258
  %v1658 = vpop.f32.mrf.mxu0
  %v1659 = vadd.f32 %v874, %v1658
  %1660 = vmatmul.f32.gmra.mxu0 %v1261
  %v1661 = vpop.f32.mrf.mxu0
  %v1662 = vadd.f32 %v877, %v1661
  %1663 = vmatmul.f32.gmra.mxu0 %v1264
  %v1664 = vpop.f32.mrf.mxu0
  %v1665 = vadd.f32 %v880, %v1664
  %1666 = vmatmul.f32.gmra.mxu0 %v1267
  %v1667 = vpop.f32.mrf.mxu0
  %v1668 = vadd.f32 %v883, %v1667
  %1669 = vmatmul.f32.gmra.mxu0 %v1270
  %v1670 = vpop.f32.mrf.mxu0
  %v1671 = vadd.f32 %v886, %v1670
  %1672 = vmatmul.f32.gmra.mxu0 %v1273
  %v1673 = vpop.f32.mrf.mxu0
  %v1674 = vadd.f32 %v889, %v1673
  %1675 = vmatmul.f32.gmra.mxu0 %v1276
  %v1676 = vpop.f32.mrf.mxu0
  %v1677 = vadd.f32 %v892, %v1676
  %1678 = vmatmul.f32.gmra.mxu0 %v1279
  %v1679 = vpop.f32.mrf.mxu0
  %v1680 = vadd.f32 %v895, %v1679
  %1681 = vmatmul.f32.gmra.mxu0 %v1282
  %v1682 = vpop.f32.mrf.mxu0
  %v1683 = vadd.f32 %v898, %v1682
  %1684 = vmatmul.f32.gmra.mxu0 %v1285
  %v1685 = vpop.f32.mrf.mxu0
  %v1686 = vadd.f32 %v901, %v1685
  %1687 = vmatmul.f32.gmra.mxu0 %v1288
  %v1688 = vpop.f32.mrf.mxu0
  %v1689 = vadd.f32 %v904, %v1688
  %1690 = vmatmul.f32.gmra.mxu0 %v1291
  %v1691 = vpop.f32.mrf.mxu0
  %v1692 = vadd.f32 %v907, %v1691
  %1693 = vmatmul.f32.gmra.mxu0 %v1294
  %v1694 = vpop.f32.mrf.mxu0
  %v1695 = vadd.f32 %v910, %v1694
  %1696 = vmatmul.f32.gmra.mxu0 %v1297
  %v1697 = vpop.f32.mrf.mxu0
  %v1698 = vadd.f32 %v913, %v1697
  %1699 = vmatmul.f32.gmra.mxu0 %v1300
  %v1700 = vpop.f32.mrf.mxu0
  %v1701 = vadd.f32 %v916, %v1700
  %1702 = vmatmul.f32.gmra.mxu0 %v1303
  %v1703 = vpop.f32.mrf.mxu0
  %v1704 = vadd.f32 %v919, %v1703
  %1705 = vmatmul.f32.gmra.mxu0 %v1306
  %v1706 = vpop.f32.mrf.mxu0
  %v1707 = vadd.f32 %v922, %v1706
  %1708 = vmatmul.f32.gmra.mxu0 %v1309
  %v1709 = vpop.f32.mrf.mxu0
  %v1710 = vadd.f32 %v925, %v1709
  %1711 = vmatmul.f32.gmra.mxu0 %v1312
  %v1712 = vpop.f32.mrf.mxu0
  %v1713 = vadd.f32 %v928, %v1712
  %1714 = vmatmul.f32.gmra.mxu0 %v1315
  %v1715 = vpop.f32.mrf.mxu0
  %v1716 = vadd.f32 %v931, %v1715
  %1717 = vmatmul.f32.gmra.mxu0 %v1318
  %v1718 = vpop.f32.mrf.mxu0
  %v1719 = vadd.f32 %v934, %v1718
  %1720 = vmatmul.f32.gmra.mxu0 %v1321
  %v1721 = vpop.f32.mrf.mxu0
  %v1722 = vadd.f32 %v937, %v1721
  %1723 = vmatmul.f32.gmra.mxu0 %v1324
  %v1724 = vpop.f32.mrf.mxu0
  %v1725 = vadd.f32 %v940, %v1724
  %1726 = vmatmul.f32.gmra.mxu0 %v1327
  %v1727 = vpop.f32.mrf.mxu0
  %v1728 = vadd.f32 %v943, %v1727
  %1729 = vmatmul.f32.gmra.mxu0 %v1330
  %v1730 = vpop.f32.mrf.mxu0
  %v1731 = vadd.f32 %v946, %v1730
  %1732 = vmatmul.f32.gmra.mxu0 %v1333
  %v1733 = vpop.f32.mrf.mxu0
  %v1734 = vadd.f32 %v949, %v1733
  %1735 = vmatmul.f32.gmra.mxu0 %v1336
  %v1736 = vpop.f32.mrf.mxu0
  %v1737 = vadd.f32 %v952, %v1736
  %1738 = vmatmul.f32.gmra.mxu0 %v1339
  %v1739 = vpop.f32.mrf.mxu0
  %v1740 = vadd.f32 %v955, %v1739
  %1741 = vmatmul.f32.gmra.mxu0 %v1342
  %v1742 = vpop.f32.mrf.mxu0
  %v1743 = vadd.f32 %v958, %v1742
  %1744 = vmatmul.f32.gmra.mxu0 %v1345
  %v1745 = vpop.f32.mrf.mxu0
  %v1746 = vadd.f32 %v961, %v1745
  %1747 = vmatmul.f32.gmra.mxu0 %v1348
  %v1748 = vpop.f32.mrf.mxu0
  %v1749 = vadd.f32 %v964, %v1748
  %1750 = vmatmul.f32.gmra.mxu0 %v1351
  %v1751 = vpop.f32.mrf.mxu0
  %v1752 = vadd.f32 %v967, %v1751
  %1753 = vmatmul.f32.gmra.mxu0 %v1354
  %v1754 = vpop.f32.mrf.mxu0
  %v1755 = vadd.f32 %v970, %v1754
  %1756 = vmatmul.f32.gmra.mxu0 %v1357
  %v1757 = vpop.f32.mrf.mxu0
  %v1758 = vadd.f32 %v973, %v1757
  %1759 = vmatmul.f32.gmra.mxu0 %v1360
  %v1760 = vpop.f32.mrf.mxu0
  %v1761 = vadd.f32 %v976, %v1760
  %1762 = vmatmul.f32.gmra.mxu0 %v1363
  %v1763 = vpop.f32.mrf.mxu0
  %v1764 = vadd.f32 %v979, %v1763
  %1765 = vmatmul.f32.gmra.mxu0 %v1366
  %v1766 = vpop.f32.mrf.mxu0
  %v1767 = vadd.f32 %v982, %v1766
  %1768 = vmatmul.f32.gmra.mxu0 %v1369
  %v1769 = vpop.f32.mrf.mxu0
  %v1770 = vadd.f32 %v985, %v1769
  %1771 = vmatmul.f32.gmra.mxu0 %v1372
  %v1772 = vpop.f32.mrf.mxu0
  %v1773 = vadd.f32 %v988, %v1772
  %1774 = vmatmul.f32.gmra.mxu0 %v1375
  %v1775 = vpop.f32.mrf.mxu0
  %v1776 = vadd.f32 %v991, %v1775
  %1777 = vmatmul.f32.gmra.mxu0 %v1378
  %v1778 = vpop.f32.mrf.mxu0
  %v1779 = vadd.f32 %v994, %v1778
  %1780 = vmatmul.f32.gmra.mxu0 %v1381
  %v1781 = vpop.f32.mrf.mxu0
  %v1782 = vadd.f32 %v997, %v1781
  %1783 = vmatmul.f32.gmra.mxu0 %v1384
  %v1784 = vpop.f32.mrf.mxu0
  %v1785 = vadd.f32 %v1000, %v1784
  %1786 = vmatmul.f32.gmra.mxu0 %v1387
  %v1787 = vpop.f32.mrf.mxu0
  %v1788 = vadd.f32 %v1003, %v1787
  %1789 = vmatmul.f32.gmra.mxu0 %v1390
  %v1790 = vpop.f32.mrf.mxu0
  %v1791 = vadd.f32 %v1006, %v1790
  %1792 = vmatmul.f32.gmra.mxu0 %v1393
  %v1793 = vpop.f32.mrf.mxu0
  %v1794 = vadd.f32 %v1009, %v1793
  %1795 = vmatmul.f32.gmra.mxu0 %v1396
  %v1796 = vpop.f32.mrf.mxu0
  %v1797 = vadd.f32 %v1012, %v1796
  %1798 = vmatmul.f32.gmra.mxu0 %v1399
  %v1799 = vpop.f32.mrf.mxu0
  %v1800 = vadd.f32 %v1015, %v1799
  %1801 = vmatmul.f32.gmra.mxu0 %v1402
  %v1802 = vpop.f32.mrf.mxu0
  %v1803 = vadd.f32 %v1018, %v1802
  %1804 = vmatmul.f32.gmra.mxu0 %v1405
  %v1805 = vpop.f32.mrf.mxu0
  %v1806 = vadd.f32 %v1021, %v1805
  %1807 = vmatmul.f32.gmra.mxu0 %v1408
  %v1808 = vpop.f32.mrf.mxu0
  %v1809 = vadd.f32 %v1024, %v1808
  %1810 = vmatmul.f32.gmra.mxu0 %v1411
  %v1811 = vpop.f32.mrf.mxu0
  %v1812 = vadd.f32 %v1027, %v1811
  %1813 = vmatmul.f32.gmra.mxu0 %v1414
  %v1814 = vpop.f32.mrf.mxu0
  %v1815 = vadd.f32 %v1030, %v1814
  %1816 = vmatmul.f32.gmra.mxu0 %v1417
  %v1817 = vpop.f32.mrf.mxu0
  %v1818 = vadd.f32 %v1033, %v1817
  %1819 = vmatmul.f32.gmra.mxu0 %v1420
  %v1820 = vpop.f32.mrf.mxu0
  %v1821 = vadd.f32 %v1036, %v1820
  %1822 = vmatmul.f32.gmra.mxu0 %v1423
  %v1823 = vpop.f32.mrf.mxu0
  %v1824 = vadd.f32 %v1039, %v1823
  %1825 = vmatmul.f32.gmra.mxu0 %v1426
  %v1826 = vpop.f32.mrf.mxu0
  %v1827 = vadd.f32 %v1042, %v1826
  %1828 = vmatmul.f32.gmra.mxu0 %v1429
  %v1829 = vpop.f32.mrf.mxu0
  %v1830 = vadd.f32 %v1045, %v1829
  %1831 = vmatmul.f32.gmra.mxu0 %v1432
  %v1832 = vpop.f32.mrf.mxu0
  %v1833 = vadd.f32 %v1048, %v1832
  %1834 = vmatmul.f32.gmra.mxu0 %v1435
  %v1835 = vpop.f32.mrf.mxu0
  %v1836 = vadd.f32 %v1051, %v1835
  %1837 = vmatmul.f32.gmra.mxu0 %v1438
  %v1838 = vpop.f32.mrf.mxu0
  %v1839 = vadd.f32 %v1054, %v1838
  %1840 = vmatmul.f32.gmra.mxu0 %v1441
  %v1841 = vpop.f32.mrf.mxu0
  %v1842 = vadd.f32 %v1057, %v1841
  %1843 = vmatmul.f32.gmra.mxu0 %v1444
  %v1844 = vpop.f32.mrf.mxu0
  %v1845 = vadd.f32 %v1060, %v1844
  %1846 = vmatmul.f32.gmra.mxu0 %v1447
  %v1847 = vpop.f32.mrf.mxu0
  %v1848 = vadd.f32 %v1063, %v1847
  %1849 = vmatmul.f32.gmra.mxu0 %v1450
  %v1850 = vpop.f32.mrf.mxu0
  %v1851 = vadd.f32 %v1066, %v1850
  %1852 = vmatmul.f32.gmra.mxu0 %v1453
  %v1853 = vpop.f32.mrf.mxu0
  %v1854 = vadd.f32 %v1069, %v1853
  %1855 = vmatmul.f32.gmra.mxu0 %v1456
  %v1856 = vpop.f32.mrf.mxu0
  %v1857 = vadd.f32 %v1072, %v1856
  %1858 = vmatmul.f32.gmra.mxu0 %v1459
  %v1859 = vpop.f32.mrf.mxu0
  %v1860 = vadd.f32 %v1075, %v1859
  %1861 = vdwg.mxu0
  %v1862 = vld [vmem:[%s4] sm:$0x1]
  %v1864 = vperm.slane %v1862, 0
  %v1866 = vadd.f32 %v1479, %v1864
  %v1867 = vadd.f32 %v1482, %v1864
  %v1868 = vadd.f32 %v1485, %v1864
  %v1869 = vadd.f32 %v1488, %v1864
  %v1870 = vadd.f32 %v1491, %v1864
  %v1871 = vadd.f32 %v1494, %v1864
  %v1872 = vadd.f32 %v1497, %v1864
  %v1873 = vadd.f32 %v1500, %v1864
  %v1874 = vadd.f32 %v1503, %v1864
  %v1875 = vadd.f32 %v1506, %v1864
  %v1876 = vadd.f32 %v1509, %v1864
  %v1877 = vadd.f32 %v1512, %v1864
  %v1878 = vadd.f32 %v1515, %v1864
  %v1879 = vadd.f32 %v1518, %v1864
  %v1880 = vadd.f32 %v1521, %v1864
  %v1881 = vadd.f32 %v1524, %v1864
  %v1882 = vadd.f32 %v1527, %v1864
  %v1883 = vadd.f32 %v1530, %v1864
  %v1884 = vadd.f32 %v1533, %v1864
  %v1885 = vadd.f32 %v1536, %v1864
  %v1886 = vadd.f32 %v1539, %v1864
  %v1887 = vadd.f32 %v1542, %v1864
  %v1888 = vadd.f32 %v1545, %v1864
  %v1889 = vadd.f32 %v1548, %v1864
  %v1890 = vadd.f32 %v1551, %v1864
  %v1891 = vadd.f32 %v1554, %v1864
  %v1892 = vadd.f32 %v1557, %v1864
  %v1893 = vadd.f32 %v1560, %v1864
  %v1894 = vadd.f32 %v1563, %v1864
  %v1895 = vadd.f32 %v1566, %v1864
  %v1896 = vadd.f32 %v1569, %v1864
  %v1897 = vadd.f32 %v1572, %v1864
  %v1898 = vadd.f32 %v1575, %v1864
  %v1899 = vadd.f32 %v1578, %v1864
  %v1900 = vadd.f32 %v1581, %v1864
  %v1901 = vadd.f32 %v1584, %v1864
  %v1902 = vadd.f32 %v1587, %v1864
  %v1903 = vadd.f32 %v1590, %v1864
  %v1904 = vadd.f32 %v1593, %v1864
  %v1905 = vadd.f32 %v1596, %v1864
  %v1906 = vadd.f32 %v1599, %v1864
  %v1907 = vadd.f32 %v1602, %v1864
  %v1908 = vadd.f32 %v1605, %v1864
  %v1909 = vadd.f32 %v1608, %v1864
  %v1910 = vadd.f32 %v1611, %v1864
  %v1911 = vadd.f32 %v1614, %v1864
  %v1912 = vadd.f32 %v1617, %v1864
  %v1913 = vadd.f32 %v1620, %v1864
  %v1914 = vadd.f32 %v1623, %v1864
  %v1915 = vadd.f32 %v1626, %v1864
  %v1916 = vadd.f32 %v1629, %v1864
  %v1917 = vadd.f32 %v1632, %v1864
  %v1918 = vadd.f32 %v1635, %v1864
  %v1919 = vadd.f32 %v1638, %v1864
  %v1920 = vadd.f32 %v1641, %v1864
  %v1921 = vadd.f32 %v1644, %v1864
  %v1922 = vadd.f32 %v1647, %v1864
  %v1923 = vadd.f32 %v1650, %v1864
  %v1924 = vadd.f32 %v1653, %v1864
  %v1925 = vadd.f32 %v1656, %v1864
  %v1926 = vadd.f32 %v1659, %v1864
  %v1927 = vadd.f32 %v1662, %v1864
  %v1928 = vadd.f32 %v1665, %v1864
  %v1929 = vadd.f32 %v1668, %v1864
  %v1930 = vadd.f32 %v1671, %v1864
  %v1931 = vadd.f32 %v1674, %v1864
  %v1932 = vadd.f32 %v1677, %v1864
  %v1933 = vadd.f32 %v1680, %v1864
  %v1934 = vadd.f32 %v1683, %v1864
  %v1935 = vadd.f32 %v1686, %v1864
  %v1936 = vadd.f32 %v1689, %v1864
  %v1937 = vadd.f32 %v1692, %v1864
  %v1938 = vadd.f32 %v1695, %v1864
  %v1939 = vadd.f32 %v1698, %v1864
  %v1940 = vadd.f32 %v1701, %v1864
  %v1941 = vadd.f32 %v1704, %v1864
  %v1942 = vadd.f32 %v1707, %v1864
  %v1943 = vadd.f32 %v1710, %v1864
  %v1944 = vadd.f32 %v1713, %v1864
  %v1945 = vadd.f32 %v1716, %v1864
  %v1946 = vadd.f32 %v1719, %v1864
  %v1947 = vadd.f32 %v1722, %v1864
  %v1948 = vadd.f32 %v1725, %v1864
  %v1949 = vadd.f32 %v1728, %v1864
  %v1950 = vadd.f32 %v1731, %v1864
  %v1951 = vadd.f32 %v1734, %v1864
  %v1952 = vadd.f32 %v1737, %v1864
  %v1953 = vadd.f32 %v1740, %v1864
  %v1954 = vadd.f32 %v1743, %v1864
  %v1955 = vadd.f32 %v1746, %v1864
  %v1956 = vadd.f32 %v1749, %v1864
  %v1957 = vadd.f32 %v1752, %v1864
  %v1958 = vadd.f32 %v1755, %v1864
  %v1959 = vadd.f32 %v1758, %v1864
  %v1960 = vadd.f32 %v1761, %v1864
  %v1961 = vadd.f32 %v1764, %v1864
  %v1962 = vadd.f32 %v1767, %v1864
  %v1963 = vadd.f32 %v1770, %v1864
  %v1964 = vadd.f32 %v1773, %v1864
  %v1965 = vadd.f32 %v1776, %v1864
  %v1966 = vadd.f32 %v1779, %v1864
  %v1967 = vadd.f32 %v1782, %v1864
  %v1968 = vadd.f32 %v1785, %v1864
  %v1969 = vadd.f32 %v1788, %v1864
  %v1970 = vadd.f32 %v1791, %v1864
  %v1971 = vadd.f32 %v1794, %v1864
  %v1972 = vadd.f32 %v1797, %v1864
  %v1973 = vadd.f32 %v1800, %v1864
  %v1974 = vadd.f32 %v1803, %v1864
  %v1975 = vadd.f32 %v1806, %v1864
  %v1976 = vadd.f32 %v1809, %v1864
  %v1977 = vadd.f32 %v1812, %v1864
  %v1978 = vadd.f32 %v1815, %v1864
  %v1979 = vadd.f32 %v1818, %v1864
  %v1980 = vadd.f32 %v1821, %v1864
  %v1981 = vadd.f32 %v1824, %v1864
  %v1982 = vadd.f32 %v1827, %v1864
  %v1983 = vadd.f32 %v1830, %v1864
  %v1984 = vadd.f32 %v1833, %v1864
  %v1985 = vadd.f32 %v1836, %v1864
  %v1986 = vadd.f32 %v1839, %v1864
  %v1987 = vadd.f32 %v1842, %v1864
  %v1988 = vadd.f32 %v1845, %v1864
  %v1989 = vadd.f32 %v1848, %v1864
  %v1990 = vadd.f32 %v1851, %v1864
  %v1991 = vadd.f32 %v1854, %v1864
  %v1992 = vadd.f32 %v1857, %v1864
  %v1993 = vadd.f32 %v1860, %v1864
  %v1994 = vmul.f32 %v1866, 0.01
  %v1995 = vmul.f32 %v1867, 0.01
  %v1996 = vmul.f32 %v1868, 0.01
  %v1997 = vmul.f32 %v1869, 0.01
  %v1998 = vmul.f32 %v1870, 0.01
  %v1999 = vmul.f32 %v1871, 0.01
  %v2000 = vmul.f32 %v1872, 0.01
  %v2001 = vmul.f32 %v1873, 0.01
  %v2002 = vmul.f32 %v1874, 0.01
  %v2003 = vmul.f32 %v1875, 0.01
  %v2004 = vmul.f32 %v1876, 0.01
  %v2005 = vmul.f32 %v1877, 0.01
  %v2006 = vmul.f32 %v1878, 0.01
  %v2007 = vmul.f32 %v1879, 0.01
  %v2008 = vmul.f32 %v1880, 0.01
  %v2009 = vmul.f32 %v1881, 0.01
  %v2010 = vmul.f32 %v1882, 0.01
  %v2011 = vmul.f32 %v1883, 0.01
  %v2012 = vmul.f32 %v1884, 0.01
  %v2013 = vmul.f32 %v1885, 0.01
  %v2014 = vmul.f32 %v1886, 0.01
  %v2015 = vmul.f32 %v1887, 0.01
  %v2016 = vmul.f32 %v1888, 0.01
  %v2017 = vmul.f32 %v1889, 0.01
  %v2018 = vmul.f32 %v1890, 0.01
  %v2019 = vmul.f32 %v1891, 0.01
  %v2020 = vmul.f32 %v1892, 0.01
  %v2021 = vmul.f32 %v1893, 0.01
  %v2022 = vmul.f32 %v1894, 0.01
  %v2023 = vmul.f32 %v1895, 0.01
  %v2024 = vmul.f32 %v1896, 0.01
  %v2025 = vmul.f32 %v1897, 0.01
  %v2026 = vmul.f32 %v1898, 0.01
  %v2027 = vmul.f32 %v1899, 0.01
  %v2028 = vmul.f32 %v1900, 0.01
  %v2029 = vmul.f32 %v1901, 0.01
  %v2030 = vmul.f32 %v1902, 0.01
  %v2031 = vmul.f32 %v1903, 0.01
  %v2032 = vmul.f32 %v1904, 0.01
  %v2033 = vmul.f32 %v1905, 0.01
  %v2034 = vmul.f32 %v1906, 0.01
  %v2035 = vmul.f32 %v1907, 0.01
  %v2036 = vmul.f32 %v1908, 0.01
  %v2037 = vmul.f32 %v1909, 0.01
  %v2038 = vmul.f32 %v1910, 0.01
  %v2039 = vmul.f32 %v1911, 0.01
  %v2040 = vmul.f32 %v1912, 0.01
  %v2041 = vmul.f32 %v1913, 0.01
  %v2042 = vmul.f32 %v1914, 0.01
  %v2043 = vmul.f32 %v1915, 0.01
  %v2044 = vmul.f32 %v1916, 0.01
  %v2045 = vmul.f32 %v1917, 0.01
  %v2046 = vmul.f32 %v1918, 0.01
  %v2047 = vmul.f32 %v1919, 0.01
  %v2048 = vmul.f32 %v1920, 0.01
  %v2049 = vmul.f32 %v1921, 0.01
  %v2050 = vmul.f32 %v1922, 0.01
  %v2051 = vmul.f32 %v1923, 0.01
  %v2052 = vmul.f32 %v1924, 0.01
  %v2053 = vmul.f32 %v1925, 0.01
  %v2054 = vmul.f32 %v1926, 0.01
  %v2055 = vmul.f32 %v1927, 0.01
  %v2056 = vmul.f32 %v1928, 0.01
  %v2057 = vmul.f32 %v1929, 0.01
  %v2058 = vmul.f32 %v1930, 0.01
  %v2059 = vmul.f32 %v1931, 0.01
  %v2060 = vmul.f32 %v1932, 0.01
  %v2061 = vmul.f32 %v1933, 0.01
  %v2062 = vmul.f32 %v1934, 0.01
  %v2063 = vmul.f32 %v1935, 0.01
  %v2064 = vmul.f32 %v1936, 0.01
  %v2065 = vmul.f32 %v1937, 0.01
  %v2066 = vmul.f32 %v1938, 0.01
  %v2067 = vmul.f32 %v1939, 0.01
  %v2068 = vmul.f32 %v1940, 0.01
  %v2069 = vmul.f32 %v1941, 0.01
  %v2070 = vmul.f32 %v1942, 0.01
  %v2071 = vmul.f32 %v1943, 0.01
  %v2072 = vmul.f32 %v1944, 0.01
  %v2073 = vmul.f32 %v1945, 0.01
  %v2074 = vmul.f32 %v1946, 0.01
  %v2075 = vmul.f32 %v1947, 0.01
  %v2076 = vmul.f32 %v1948, 0.01
  %v2077 = vmul.f32 %v1949, 0.01
  %v2078 = vmul.f32 %v1950, 0.01
  %v2079 = vmul.f32 %v1951, 0.01
  %v2080 = vmul.f32 %v1952, 0.01
  %v2081 = vmul.f32 %v1953, 0.01
  %v2082 = vmul.f32 %v1954, 0.01
  %v2083 = vmul.f32 %v1955, 0.01
  %v2084 = vmul.f32 %v1956, 0.01
  %v2085 = vmul.f32 %v1957, 0.01
  %v2086 = vmul.f32 %v1958, 0.01
  %v2087 = vmul.f32 %v1959, 0.01
  %v2088 = vmul.f32 %v1960, 0.01
  %v2089 = vmul.f32 %v1961, 0.01
  %v2090 = vmul.f32 %v1962, 0.01
  %v2091 = vmul.f32 %v1963, 0.01
  %v2092 = vmul.f32 %v1964, 0.01
  %v2093 = vmul.f32 %v1965, 0.01
  %v2094 = vmul.f32 %v1966, 0.01
  %v2095 = vmul.f32 %v1967, 0.01
  %v2096 = vmul.f32 %v1968, 0.01
  %v2097 = vmul.f32 %v1969, 0.01
  %v2098 = vmul.f32 %v1970, 0.01
  %v2099 = vmul.f32 %v1971, 0.01
  %v2100 = vmul.f32 %v1972, 0.01
  %v2101 = vmul.f32 %v1973, 0.01
  %v2102 = vmul.f32 %v1974, 0.01
  %v2103 = vmul.f32 %v1975, 0.01
  %v2104 = vmul.f32 %v1976, 0.01
  %v2105 = vmul.f32 %v1977, 0.01
  %v2106 = vmul.f32 %v1978, 0.01
  %v2107 = vmul.f32 %v1979, 0.01
  %v2108 = vmul.f32 %v1980, 0.01
  %v2109 = vmul.f32 %v1981, 0.01
  %v2110 = vmul.f32 %v1982, 0.01
  %v2111 = vmul.f32 %v1983, 0.01
  %v2112 = vmul.f32 %v1984, 0.01
  %v2113 = vmul.f32 %v1985, 0.01
  %v2114 = vmul.f32 %v1986, 0.01
  %v2115 = vmul.f32 %v1987, 0.01
  %v2116 = vmul.f32 %v1988, 0.01
  %v2117 = vmul.f32 %v1989, 0.01
  %v2118 = vmul.f32 %v1990, 0.01
  %v2119 = vmul.f32 %v1991, 0.01
  %v2120 = vmul.f32 %v1992, 0.01
  %v2121 = vmul.f32 %v1993, 0.01
  %v2122 = vmax.f32 %v1866, %v1994
  %v2123 = vmax.f32 %v1867, %v1995
  %v2124 = vmax.f32 %v1868, %v1996
  %v2125 = vmax.f32 %v1869, %v1997
  %v2126 = vmax.f32 %v1870, %v1998
  %v2127 = vmax.f32 %v1871, %v1999
  %v2128 = vmax.f32 %v1872, %v2000
  %v2129 = vmax.f32 %v1873, %v2001
  %v2130 = vmax.f32 %v1874, %v2002
  %v2131 = vmax.f32 %v1875, %v2003
  %v2132 = vmax.f32 %v1876, %v2004
  %v2133 = vmax.f32 %v1877, %v2005
  %v2134 = vmax.f32 %v1878, %v2006
  %v2135 = vmax.f32 %v1879, %v2007
  %v2136 = vmax.f32 %v1880, %v2008
  %v2137 = vmax.f32 %v1881, %v2009
  %v2138 = vmax.f32 %v1882, %v2010
  %v2139 = vmax.f32 %v1883, %v2011
  %v2140 = vmax.f32 %v1884, %v2012
  %v2141 = vmax.f32 %v1885, %v2013
  %v2142 = vmax.f32 %v1886, %v2014
  %v2143 = vmax.f32 %v1887, %v2015
  %v2144 = vmax.f32 %v1888, %v2016
  %v2145 = vmax.f32 %v1889, %v2017
  %v2146 = vmax.f32 %v1890, %v2018
  %v2147 = vmax.f32 %v1891, %v2019
  %v2148 = vmax.f32 %v1892, %v2020
  %v2149 = vmax.f32 %v1893, %v2021
  %v2150 = vmax.f32 %v1894, %v2022
  %v2151 = vmax.f32 %v1895, %v2023
  %v2152 = vmax.f32 %v1896, %v2024
  %v2153 = vmax.f32 %v1897, %v2025
  %v2154 = vmax.f32 %v1898, %v2026
  %v2155 = vmax.f32 %v1899, %v2027
  %v2156 = vmax.f32 %v1900, %v2028
  %v2157 = vmax.f32 %v1901, %v2029
  %v2158 = vmax.f32 %v1902, %v2030
  %v2159 = vmax.f32 %v1903, %v2031
  %v2160 = vmax.f32 %v1904, %v2032
  %v2161 = vmax.f32 %v1905, %v2033
  %v2162 = vmax.f32 %v1906, %v2034
  %v2163 = vmax.f32 %v1907, %v2035
  %v2164 = vmax.f32 %v1908, %v2036
  %v2165 = vmax.f32 %v1909, %v2037
  %v2166 = vmax.f32 %v1910, %v2038
  %v2167 = vmax.f32 %v1911, %v2039
  %v2168 = vmax.f32 %v1912, %v2040
  %v2169 = vmax.f32 %v1913, %v2041
  %v2170 = vmax.f32 %v1914, %v2042
  %v2171 = vmax.f32 %v1915, %v2043
  %v2172 = vmax.f32 %v1916, %v2044
  %v2173 = vmax.f32 %v1917, %v2045
  %v2174 = vmax.f32 %v1918, %v2046
  %v2175 = vmax.f32 %v1919, %v2047
  %v2176 = vmax.f32 %v1920, %v2048
  %v2177 = vmax.f32 %v1921, %v2049
  %v2178 = vmax.f32 %v1922, %v2050
  %v2179 = vmax.f32 %v1923, %v2051
  %v2180 = vmax.f32 %v1924, %v2052
  %v2181 = vmax.f32 %v1925, %v2053
  %v2182 = vmax.f32 %v1926, %v2054
  %v2183 = vmax.f32 %v1927, %v2055
  %v2184 = vmax.f32 %v1928, %v2056
  %v2185 = vmax.f32 %v1929, %v2057
  %v2186 = vmax.f32 %v1930, %v2058
  %v2187 = vmax.f32 %v1931, %v2059
  %v2188 = vmax.f32 %v1932, %v2060
  %v2189 = vmax.f32 %v1933, %v2061
  %v2190 = vmax.f32 %v1934, %v2062
  %v2191 = vmax.f32 %v1935, %v2063
  %v2192 = vmax.f32 %v1936, %v2064
  %v2193 = vmax.f32 %v1937, %v2065
  %v2194 = vmax.f32 %v1938, %v2066
  %v2195 = vmax.f32 %v1939, %v2067
  %v2196 = vmax.f32 %v1940, %v2068
  %v2197 = vmax.f32 %v1941, %v2069
  %v2198 = vmax.f32 %v1942, %v2070
  %v2199 = vmax.f32 %v1943, %v2071
  %v2200 = vmax.f32 %v1944, %v2072
  %v2201 = vmax.f32 %v1945, %v2073
  %v2202 = vmax.f32 %v1946, %v2074
  %v2203 = vmax.f32 %v1947, %v2075
  %v2204 = vmax.f32 %v1948, %v2076
  %v2205 = vmax.f32 %v1949, %v2077
  %v2206 = vmax.f32 %v1950, %v2078
  %v2207 = vmax.f32 %v1951, %v2079
  %v2208 = vmax.f32 %v1952, %v2080
  %v2209 = vmax.f32 %v1953, %v2081
  %v2210 = vmax.f32 %v1954, %v2082
  %v2211 = vmax.f32 %v1955, %v2083
  %v2212 = vmax.f32 %v1956, %v2084
  %v2213 = vmax.f32 %v1957, %v2085
  %v2214 = vmax.f32 %v1958, %v2086
  %v2215 = vmax.f32 %v1959, %v2087
  %v2216 = vmax.f32 %v1960, %v2088
  %v2217 = vmax.f32 %v1961, %v2089
  %v2218 = vmax.f32 %v1962, %v2090
  %v2219 = vmax.f32 %v1963, %v2091
  %v2220 = vmax.f32 %v1964, %v2092
  %v2221 = vmax.f32 %v1965, %v2093
  %v2222 = vmax.f32 %v1966, %v2094
  %v2223 = vmax.f32 %v1967, %v2095
  %v2224 = vmax.f32 %v1968, %v2096
  %v2225 = vmax.f32 %v1969, %v2097
  %v2226 = vmax.f32 %v1970, %v2098
  %v2227 = vmax.f32 %v1971, %v2099
  %v2228 = vmax.f32 %v1972, %v2100
  %v2229 = vmax.f32 %v1973, %v2101
  %v2230 = vmax.f32 %v1974, %v2102
  %v2231 = vmax.f32 %v1975, %v2103
  %v2232 = vmax.f32 %v1976, %v2104
  %v2233 = vmax.f32 %v1977, %v2105
  %v2234 = vmax.f32 %v1978, %v2106
  %v2235 = vmax.f32 %v1979, %v2107
  %v2236 = vmax.f32 %v1980, %v2108
  %v2237 = vmax.f32 %v1981, %v2109
  %v2238 = vmax.f32 %v1982, %v2110
  %v2239 = vmax.f32 %v1983, %v2111
  %v2240 = vmax.f32 %v1984, %v2112
  %v2241 = vmax.f32 %v1985, %v2113
  %v2242 = vmax.f32 %v1986, %v2114
  %v2243 = vmax.f32 %v1987, %v2115
  %v2244 = vmax.f32 %v1988, %v2116
  %v2245 = vmax.f32 %v1989, %v2117
  %v2246 = vmax.f32 %v1990, %v2118
  %v2247 = vmax.f32 %v1991, %v2119
  %v2248 = vmax.f32 %v1992, %v2120
  %v2249 = vmax.f32 %v1993, %v2121
  %v2250 = vld [vmem:[%s5] sm:$0x1]
  %v2252 = vperm.slane %v2250, 0
  %v2254 = vmul.f32 %v2122, %v2252
  %v2255 = vmul.f32 %v2123, %v2252
  %v2256 = vmul.f32 %v2124, %v2252
  %v2257 = vmul.f32 %v2125, %v2252
  %v2258 = vmul.f32 %v2126, %v2252
  %v2259 = vmul.f32 %v2127, %v2252
  %v2260 = vmul.f32 %v2128, %v2252
  %v2261 = vmul.f32 %v2129, %v2252
  %v2262 = vmul.f32 %v2130, %v2252
  %v2263 = vmul.f32 %v2131, %v2252
  %v2264 = vmul.f32 %v2132, %v2252
  %v2265 = vmul.f32 %v2133, %v2252
  %v2266 = vmul.f32 %v2134, %v2252
  %v2267 = vmul.f32 %v2135, %v2252
  %v2268 = vmul.f32 %v2136, %v2252
  %v2269 = vmul.f32 %v2137, %v2252
  %v2270 = vmul.f32 %v2138, %v2252
  %v2271 = vmul.f32 %v2139, %v2252
  %v2272 = vmul.f32 %v2140, %v2252
  %v2273 = vmul.f32 %v2141, %v2252
  %v2274 = vmul.f32 %v2142, %v2252
  %v2275 = vmul.f32 %v2143, %v2252
  %v2276 = vmul.f32 %v2144, %v2252
  %v2277 = vmul.f32 %v2145, %v2252
  %v2278 = vmul.f32 %v2146, %v2252
  %v2279 = vmul.f32 %v2147, %v2252
  %v2280 = vmul.f32 %v2148, %v2252
  %v2281 = vmul.f32 %v2149, %v2252
  %v2282 = vmul.f32 %v2150, %v2252
  %v2283 = vmul.f32 %v2151, %v2252
  %v2284 = vmul.f32 %v2152, %v2252
  %v2285 = vmul.f32 %v2153, %v2252
  %v2286 = vmul.f32 %v2154, %v2252
  %v2287 = vmul.f32 %v2155, %v2252
  %v2288 = vmul.f32 %v2156, %v2252
  %v2289 = vmul.f32 %v2157, %v2252
  %v2290 = vmul.f32 %v2158, %v2252
  %v2291 = vmul.f32 %v2159, %v2252
  %v2292 = vmul.f32 %v2160, %v2252
  %v2293 = vmul.f32 %v2161, %v2252
  %v2294 = vmul.f32 %v2162, %v2252
  %v2295 = vmul.f32 %v2163, %v2252
  %v2296 = vmul.f32 %v2164, %v2252
  %v2297 = vmul.f32 %v2165, %v2252
  %v2298 = vmul.f32 %v2166, %v2252
  %v2299 = vmul.f32 %v2167, %v2252
  %v2300 = vmul.f32 %v2168, %v2252
  %v2301 = vmul.f32 %v2169, %v2252
  %v2302 = vmul.f32 %v2170, %v2252
  %v2303 = vmul.f32 %v2171, %v2252
  %v2304 = vmul.f32 %v2172, %v2252
  %v2305 = vmul.f32 %v2173, %v2252
  %v2306 = vmul.f32 %v2174, %v2252
  %v2307 = vmul.f32 %v2175, %v2252
  %v2308 = vmul.f32 %v2176, %v2252
  %v2309 = vmul.f32 %v2177, %v2252
  %v2310 = vmul.f32 %v2178, %v2252
  %v2311 = vmul.f32 %v2179, %v2252
  %v2312 = vmul.f32 %v2180, %v2252
  %v2313 = vmul.f32 %v2181, %v2252
  %v2314 = vmul.f32 %v2182, %v2252
  %v2315 = vmul.f32 %v2183, %v2252
  %v2316 = vmul.f32 %v2184, %v2252
  %v2317 = vmul.f32 %v2185, %v2252
  %v2318 = vmul.f32 %v2186, %v2252
  %v2319 = vmul.f32 %v2187, %v2252
  %v2320 = vmul.f32 %v2188, %v2252
  %v2321 = vmul.f32 %v2189, %v2252
  %v2322 = vmul.f32 %v2190, %v2252
  %v2323 = vmul.f32 %v2191, %v2252
  %v2324 = vmul.f32 %v2192, %v2252
  %v2325 = vmul.f32 %v2193, %v2252
  %v2326 = vmul.f32 %v2194, %v2252
  %v2327 = vmul.f32 %v2195, %v2252
  %v2328 = vmul.f32 %v2196, %v2252
  %v2329 = vmul.f32 %v2197, %v2252
  %v2330 = vmul.f32 %v2198, %v2252
  %v2331 = vmul.f32 %v2199, %v2252
  %v2332 = vmul.f32 %v2200, %v2252
  %v2333 = vmul.f32 %v2201, %v2252
  %v2334 = vmul.f32 %v2202, %v2252
  %v2335 = vmul.f32 %v2203, %v2252
  %v2336 = vmul.f32 %v2204, %v2252
  %v2337 = vmul.f32 %v2205, %v2252
  %v2338 = vmul.f32 %v2206, %v2252
  %v2339 = vmul.f32 %v2207, %v2252
  %v2340 = vmul.f32 %v2208, %v2252
  %v2341 = vmul.f32 %v2209, %v2252
  %v2342 = vmul.f32 %v2210, %v2252
  %v2343 = vmul.f32 %v2211, %v2252
  %v2344 = vmul.f32 %v2212, %v2252
  %v2345 = vmul.f32 %v2213, %v2252
  %v2346 = vmul.f32 %v2214, %v2252
  %v2347 = vmul.f32 %v2215, %v2252
  %v2348 = vmul.f32 %v2216, %v2252
  %v2349 = vmul.f32 %v2217, %v2252
  %v2350 = vmul.f32 %v2218, %v2252
  %v2351 = vmul.f32 %v2219, %v2252
  %v2352 = vmul.f32 %v2220, %v2252
  %v2353 = vmul.f32 %v2221, %v2252
  %v2354 = vmul.f32 %v2222, %v2252
  %v2355 = vmul.f32 %v2223, %v2252
  %v2356 = vmul.f32 %v2224, %v2252
  %v2357 = vmul.f32 %v2225, %v2252
  %v2358 = vmul.f32 %v2226, %v2252
  %v2359 = vmul.f32 %v2227, %v2252
  %v2360 = vmul.f32 %v2228, %v2252
  %v2361 = vmul.f32 %v2229, %v2252
  %v2362 = vmul.f32 %v2230, %v2252
  %v2363 = vmul.f32 %v2231, %v2252
  %v2364 = vmul.f32 %v2232, %v2252
  %v2365 = vmul.f32 %v2233, %v2252
  %v2366 = vmul.f32 %v2234, %v2252
  %v2367 = vmul.f32 %v2235, %v2252
  %v2368 = vmul.f32 %v2236, %v2252
  %v2369 = vmul.f32 %v2237, %v2252
  %v2370 = vmul.f32 %v2238, %v2252
  %v2371 = vmul.f32 %v2239, %v2252
  %v2372 = vmul.f32 %v2240, %v2252
  %v2373 = vmul.f32 %v2241, %v2252
  %v2374 = vmul.f32 %v2242, %v2252
  %v2375 = vmul.f32 %v2243, %v2252
  %v2376 = vmul.f32 %v2244, %v2252
  %v2377 = vmul.f32 %v2245, %v2252
  %v2378 = vmul.f32 %v2246, %v2252
  %v2379 = vmul.f32 %v2247, %v2252
  %v2380 = vmul.f32 %v2248, %v2252
  %v2381 = vmul.f32 %v2249, %v2252
  %v2382 = vsel %vm291, %v2254, 0.0
  %2383 = vadd.xlane.f32.xlu0 %v2382
  %v2384 = vpop.xlane.xlu0 %2383
  %v2385 = vsel %vm291, %v2255, 0.0
  %2386 = vadd.xlane.f32.xlu0 %v2385
  %v2387 = vpop.xlane.xlu0 %2386
  %v2388 = vsel %vm291, %v2256, 0.0
  %2389 = vadd.xlane.f32.xlu0 %v2388
  %v2390 = vpop.xlane.xlu0 %2389
  %v2391 = vsel %vm291, %v2257, 0.0
  %2392 = vadd.xlane.f32.xlu0 %v2391
  %v2393 = vpop.xlane.xlu0 %2392
  %v2394 = vsel %vm291, %v2258, 0.0
  %2395 = vadd.xlane.f32.xlu0 %v2394
  %v2396 = vpop.xlane.xlu0 %2395
  %v2397 = vsel %vm291, %v2259, 0.0
  %2398 = vadd.xlane.f32.xlu0 %v2397
  %v2399 = vpop.xlane.xlu0 %2398
  %v2400 = vsel %vm291, %v2260, 0.0
  %2401 = vadd.xlane.f32.xlu0 %v2400
  %v2402 = vpop.xlane.xlu0 %2401
  %v2403 = vsel %vm291, %v2261, 0.0
  %2404 = vadd.xlane.f32.xlu0 %v2403
  %v2405 = vpop.xlane.xlu0 %2404
  %v2406 = vsel %vm291, %v2262, 0.0
  %2407 = vadd.xlane.f32.xlu0 %v2406
  %v2408 = vpop.xlane.xlu0 %2407
  %v2409 = vsel %vm291, %v2263, 0.0
  %2410 = vadd.xlane.f32.xlu0 %v2409
  %v2411 = vpop.xlane.xlu0 %2410
  %v2412 = vsel %vm291, %v2264, 0.0
  %2413 = vadd.xlane.f32.xlu0 %v2412
  %v2414 = vpop.xlane.xlu0 %2413
  %v2415 = vsel %vm291, %v2265, 0.0
  %2416 = vadd.xlane.f32.xlu0 %v2415
  %v2417 = vpop.xlane.xlu0 %2416
  %v2418 = vsel %vm291, %v2266, 0.0
  %2419 = vadd.xlane.f32.xlu0 %v2418
  %v2420 = vpop.xlane.xlu0 %2419
  %v2421 = vsel %vm291, %v2267, 0.0
  %2422 = vadd.xlane.f32.xlu0 %v2421
  %v2423 = vpop.xlane.xlu0 %2422
  %v2424 = vsel %vm291, %v2268, 0.0
  %2425 = vadd.xlane.f32.xlu0 %v2424
  %v2426 = vpop.xlane.xlu0 %2425
  %v2427 = vsel %vm291, %v2269, 0.0
  %2428 = vadd.xlane.f32.xlu0 %v2427
  %v2429 = vpop.xlane.xlu0 %2428
  %v2430 = vsel %vm291, %v2270, 0.0
  %2431 = vadd.xlane.f32.xlu0 %v2430
  %v2432 = vpop.xlane.xlu0 %2431
  %v2433 = vsel %vm291, %v2271, 0.0
  %2434 = vadd.xlane.f32.xlu0 %v2433
  %v2435 = vpop.xlane.xlu0 %2434
  %v2436 = vsel %vm291, %v2272, 0.0
  %2437 = vadd.xlane.f32.xlu0 %v2436
  %v2438 = vpop.xlane.xlu0 %2437
  %v2439 = vsel %vm291, %v2273, 0.0
  %2440 = vadd.xlane.f32.xlu0 %v2439
  %v2441 = vpop.xlane.xlu0 %2440
  %v2442 = vsel %vm291, %v2274, 0.0
  %2443 = vadd.xlane.f32.xlu0 %v2442
  %v2444 = vpop.xlane.xlu0 %2443
  %v2445 = vsel %vm291, %v2275, 0.0
  %2446 = vadd.xlane.f32.xlu0 %v2445
  %v2447 = vpop.xlane.xlu0 %2446
  %v2448 = vsel %vm291, %v2276, 0.0
  %2449 = vadd.xlane.f32.xlu0 %v2448
  %v2450 = vpop.xlane.xlu0 %2449
  %v2451 = vsel %vm291, %v2277, 0.0
  %2452 = vadd.xlane.f32.xlu0 %v2451
  %v2453 = vpop.xlane.xlu0 %2452
  %v2454 = vsel %vm291, %v2278, 0.0
  %2455 = vadd.xlane.f32.xlu0 %v2454
  %v2456 = vpop.xlane.xlu0 %2455
  %v2457 = vsel %vm291, %v2279, 0.0
  %2458 = vadd.xlane.f32.xlu0 %v2457
  %v2459 = vpop.xlane.xlu0 %2458
  %v2460 = vsel %vm291, %v2280, 0.0
  %2461 = vadd.xlane.f32.xlu0 %v2460
  %v2462 = vpop.xlane.xlu0 %2461
  %v2463 = vsel %vm291, %v2281, 0.0
  %2464 = vadd.xlane.f32.xlu0 %v2463
  %v2465 = vpop.xlane.xlu0 %2464
  %v2466 = vsel %vm291, %v2282, 0.0
  %2467 = vadd.xlane.f32.xlu0 %v2466
  %v2468 = vpop.xlane.xlu0 %2467
  %v2469 = vsel %vm291, %v2283, 0.0
  %2470 = vadd.xlane.f32.xlu0 %v2469
  %v2471 = vpop.xlane.xlu0 %2470
  %v2472 = vsel %vm291, %v2284, 0.0
  %2473 = vadd.xlane.f32.xlu0 %v2472
  %v2474 = vpop.xlane.xlu0 %2473
  %v2475 = vsel %vm291, %v2285, 0.0
  %2476 = vadd.xlane.f32.xlu0 %v2475
  %v2477 = vpop.xlane.xlu0 %2476
  %v2478 = vsel %vm291, %v2286, 0.0
  %2479 = vadd.xlane.f32.xlu0 %v2478
  %v2480 = vpop.xlane.xlu0 %2479
  %v2481 = vsel %vm291, %v2287, 0.0
  %2482 = vadd.xlane.f32.xlu0 %v2481
  %v2483 = vpop.xlane.xlu0 %2482
  %v2484 = vsel %vm291, %v2288, 0.0
  %2485 = vadd.xlane.f32.xlu0 %v2484
  %v2486 = vpop.xlane.xlu0 %2485
  %v2487 = vsel %vm291, %v2289, 0.0
  %2488 = vadd.xlane.f32.xlu0 %v2487
  %v2489 = vpop.xlane.xlu0 %2488
  %v2490 = vsel %vm291, %v2290, 0.0
  %2491 = vadd.xlane.f32.xlu0 %v2490
  %v2492 = vpop.xlane.xlu0 %2491
  %v2493 = vsel %vm291, %v2291, 0.0
  %2494 = vadd.xlane.f32.xlu0 %v2493
  %v2495 = vpop.xlane.xlu0 %2494
  %v2496 = vsel %vm291, %v2292, 0.0
  %2497 = vadd.xlane.f32.xlu0 %v2496
  %v2498 = vpop.xlane.xlu0 %2497
  %v2499 = vsel %vm291, %v2293, 0.0
  %2500 = vadd.xlane.f32.xlu0 %v2499
  %v2501 = vpop.xlane.xlu0 %2500
  %v2502 = vsel %vm291, %v2294, 0.0
  %2503 = vadd.xlane.f32.xlu0 %v2502
  %v2504 = vpop.xlane.xlu0 %2503
  %v2505 = vsel %vm291, %v2295, 0.0
  %2506 = vadd.xlane.f32.xlu0 %v2505
  %v2507 = vpop.xlane.xlu0 %2506
  %v2508 = vsel %vm291, %v2296, 0.0
  %2509 = vadd.xlane.f32.xlu0 %v2508
  %v2510 = vpop.xlane.xlu0 %2509
  %v2511 = vsel %vm291, %v2297, 0.0
  %2512 = vadd.xlane.f32.xlu0 %v2511
  %v2513 = vpop.xlane.xlu0 %2512
  %v2514 = vsel %vm291, %v2298, 0.0
  %2515 = vadd.xlane.f32.xlu0 %v2514
  %v2516 = vpop.xlane.xlu0 %2515
  %v2517 = vsel %vm291, %v2299, 0.0
  %2518 = vadd.xlane.f32.xlu0 %v2517
  %v2519 = vpop.xlane.xlu0 %2518
  %v2520 = vsel %vm291, %v2300, 0.0
  %2521 = vadd.xlane.f32.xlu0 %v2520
  %v2522 = vpop.xlane.xlu0 %2521
  %v2523 = vsel %vm291, %v2301, 0.0
  %2524 = vadd.xlane.f32.xlu0 %v2523
  %v2525 = vpop.xlane.xlu0 %2524
  %v2526 = vsel %vm291, %v2302, 0.0
  %2527 = vadd.xlane.f32.xlu0 %v2526
  %v2528 = vpop.xlane.xlu0 %2527
  %v2529 = vsel %vm291, %v2303, 0.0
  %2530 = vadd.xlane.f32.xlu0 %v2529
  %v2531 = vpop.xlane.xlu0 %2530
  %v2532 = vsel %vm291, %v2304, 0.0
  %2533 = vadd.xlane.f32.xlu0 %v2532
  %v2534 = vpop.xlane.xlu0 %2533
  %v2535 = vsel %vm291, %v2305, 0.0
  %2536 = vadd.xlane.f32.xlu0 %v2535
  %v2537 = vpop.xlane.xlu0 %2536
  %v2538 = vsel %vm291, %v2306, 0.0
  %2539 = vadd.xlane.f32.xlu0 %v2538
  %v2540 = vpop.xlane.xlu0 %2539
  %v2541 = vsel %vm291, %v2307, 0.0
  %2542 = vadd.xlane.f32.xlu0 %v2541
  %v2543 = vpop.xlane.xlu0 %2542
  %v2544 = vsel %vm291, %v2308, 0.0
  %2545 = vadd.xlane.f32.xlu0 %v2544
  %v2546 = vpop.xlane.xlu0 %2545
  %v2547 = vsel %vm291, %v2309, 0.0
  %2548 = vadd.xlane.f32.xlu0 %v2547
  %v2549 = vpop.xlane.xlu0 %2548
  %v2550 = vsel %vm291, %v2310, 0.0
  %2551 = vadd.xlane.f32.xlu0 %v2550
  %v2552 = vpop.xlane.xlu0 %2551
  %v2553 = vsel %vm291, %v2311, 0.0
  %2554 = vadd.xlane.f32.xlu0 %v2553
  %v2555 = vpop.xlane.xlu0 %2554
  %v2556 = vsel %vm291, %v2312, 0.0
  %2557 = vadd.xlane.f32.xlu0 %v2556
  %v2558 = vpop.xlane.xlu0 %2557
  %v2559 = vsel %vm291, %v2313, 0.0
  %2560 = vadd.xlane.f32.xlu0 %v2559
  %v2561 = vpop.xlane.xlu0 %2560
  %v2562 = vsel %vm291, %v2314, 0.0
  %2563 = vadd.xlane.f32.xlu0 %v2562
  %v2564 = vpop.xlane.xlu0 %2563
  %v2565 = vsel %vm291, %v2315, 0.0
  %2566 = vadd.xlane.f32.xlu0 %v2565
  %v2567 = vpop.xlane.xlu0 %2566
  %v2568 = vsel %vm291, %v2316, 0.0
  %2569 = vadd.xlane.f32.xlu0 %v2568
  %v2570 = vpop.xlane.xlu0 %2569
  %v2571 = vsel %vm291, %v2317, 0.0
  %2572 = vadd.xlane.f32.xlu0 %v2571
  %v2573 = vpop.xlane.xlu0 %2572
  %v2574 = vsel %vm291, %v2318, 0.0
  %2575 = vadd.xlane.f32.xlu0 %v2574
  %v2576 = vpop.xlane.xlu0 %2575
  %v2577 = vsel %vm291, %v2319, 0.0
  %2578 = vadd.xlane.f32.xlu0 %v2577
  %v2579 = vpop.xlane.xlu0 %2578
  %v2580 = vsel %vm291, %v2320, 0.0
  %2581 = vadd.xlane.f32.xlu0 %v2580
  %v2582 = vpop.xlane.xlu0 %2581
  %v2583 = vsel %vm291, %v2321, 0.0
  %2584 = vadd.xlane.f32.xlu0 %v2583
  %v2585 = vpop.xlane.xlu0 %2584
  %v2586 = vsel %vm291, %v2322, 0.0
  %2587 = vadd.xlane.f32.xlu0 %v2586
  %v2588 = vpop.xlane.xlu0 %2587
  %v2589 = vsel %vm291, %v2323, 0.0
  %2590 = vadd.xlane.f32.xlu0 %v2589
  %v2591 = vpop.xlane.xlu0 %2590
  %v2592 = vsel %vm291, %v2324, 0.0
  %2593 = vadd.xlane.f32.xlu0 %v2592
  %v2594 = vpop.xlane.xlu0 %2593
  %v2595 = vsel %vm291, %v2325, 0.0
  %2596 = vadd.xlane.f32.xlu0 %v2595
  %v2597 = vpop.xlane.xlu0 %2596
  %v2598 = vsel %vm291, %v2326, 0.0
  %2599 = vadd.xlane.f32.xlu0 %v2598
  %v2600 = vpop.xlane.xlu0 %2599
  %v2601 = vsel %vm291, %v2327, 0.0
  %2602 = vadd.xlane.f32.xlu0 %v2601
  %v2603 = vpop.xlane.xlu0 %2602
  %v2604 = vsel %vm291, %v2328, 0.0
  %2605 = vadd.xlane.f32.xlu0 %v2604
  %v2606 = vpop.xlane.xlu0 %2605
  %v2607 = vsel %vm291, %v2329, 0.0
  %2608 = vadd.xlane.f32.xlu0 %v2607
  %v2609 = vpop.xlane.xlu0 %2608
  %v2610 = vsel %vm291, %v2330, 0.0
  %2611 = vadd.xlane.f32.xlu0 %v2610
  %v2612 = vpop.xlane.xlu0 %2611
  %v2613 = vsel %vm291, %v2331, 0.0
  %2614 = vadd.xlane.f32.xlu0 %v2613
  %v2615 = vpop.xlane.xlu0 %2614
  %v2616 = vsel %vm291, %v2332, 0.0
  %2617 = vadd.xlane.f32.xlu0 %v2616
  %v2618 = vpop.xlane.xlu0 %2617
  %v2619 = vsel %vm291, %v2333, 0.0
  %2620 = vadd.xlane.f32.xlu0 %v2619
  %v2621 = vpop.xlane.xlu0 %2620
  %v2622 = vsel %vm291, %v2334, 0.0
  %2623 = vadd.xlane.f32.xlu0 %v2622
  %v2624 = vpop.xlane.xlu0 %2623
  %v2625 = vsel %vm291, %v2335, 0.0
  %2626 = vadd.xlane.f32.xlu0 %v2625
  %v2627 = vpop.xlane.xlu0 %2626
  %v2628 = vsel %vm291, %v2336, 0.0
  %2629 = vadd.xlane.f32.xlu0 %v2628
  %v2630 = vpop.xlane.xlu0 %2629
  %v2631 = vsel %vm291, %v2337, 0.0
  %2632 = vadd.xlane.f32.xlu0 %v2631
  %v2633 = vpop.xlane.xlu0 %2632
  %v2634 = vsel %vm291, %v2338, 0.0
  %2635 = vadd.xlane.f32.xlu0 %v2634
  %v2636 = vpop.xlane.xlu0 %2635
  %v2637 = vsel %vm291, %v2339, 0.0
  %2638 = vadd.xlane.f32.xlu0 %v2637
  %v2639 = vpop.xlane.xlu0 %2638
  %v2640 = vsel %vm291, %v2340, 0.0
  %2641 = vadd.xlane.f32.xlu0 %v2640
  %v2642 = vpop.xlane.xlu0 %2641
  %v2643 = vsel %vm291, %v2341, 0.0
  %2644 = vadd.xlane.f32.xlu0 %v2643
  %v2645 = vpop.xlane.xlu0 %2644
  %v2646 = vsel %vm291, %v2342, 0.0
  %2647 = vadd.xlane.f32.xlu0 %v2646
  %v2648 = vpop.xlane.xlu0 %2647
  %v2649 = vsel %vm291, %v2343, 0.0
  %2650 = vadd.xlane.f32.xlu0 %v2649
  %v2651 = vpop.xlane.xlu0 %2650
  %v2652 = vsel %vm291, %v2344, 0.0
  %2653 = vadd.xlane.f32.xlu0 %v2652
  %v2654 = vpop.xlane.xlu0 %2653
  %v2655 = vsel %vm291, %v2345, 0.0
  %2656 = vadd.xlane.f32.xlu0 %v2655
  %v2657 = vpop.xlane.xlu0 %2656
  %v2658 = vsel %vm291, %v2346, 0.0
  %2659 = vadd.xlane.f32.xlu0 %v2658
  %v2660 = vpop.xlane.xlu0 %2659
  %v2661 = vsel %vm291, %v2347, 0.0
  %2662 = vadd.xlane.f32.xlu0 %v2661
  %v2663 = vpop.xlane.xlu0 %2662
  %v2664 = vsel %vm291, %v2348, 0.0
  %2665 = vadd.xlane.f32.xlu0 %v2664
  %v2666 = vpop.xlane.xlu0 %2665
  %v2667 = vsel %vm291, %v2349, 0.0
  %2668 = vadd.xlane.f32.xlu0 %v2667
  %v2669 = vpop.xlane.xlu0 %2668
  %v2670 = vsel %vm291, %v2350, 0.0
  %2671 = vadd.xlane.f32.xlu0 %v2670
  %v2672 = vpop.xlane.xlu0 %2671
  %v2673 = vsel %vm291, %v2351, 0.0
  %2674 = vadd.xlane.f32.xlu0 %v2673
  %v2675 = vpop.xlane.xlu0 %2674
  %v2676 = vsel %vm291, %v2352, 0.0
  %2677 = vadd.xlane.f32.xlu0 %v2676
  %v2678 = vpop.xlane.xlu0 %2677
  %v2679 = vsel %vm291, %v2353, 0.0
  %2680 = vadd.xlane.f32.xlu0 %v2679
  %v2681 = vpop.xlane.xlu0 %2680
  %v2682 = vsel %vm291, %v2354, 0.0
  %2683 = vadd.xlane.f32.xlu0 %v2682
  %v2684 = vpop.xlane.xlu0 %2683
  %v2685 = vsel %vm291, %v2355, 0.0
  %2686 = vadd.xlane.f32.xlu0 %v2685
  %v2687 = vpop.xlane.xlu0 %2686
  %v2688 = vsel %vm291, %v2356, 0.0
  %2689 = vadd.xlane.f32.xlu0 %v2688
  %v2690 = vpop.xlane.xlu0 %2689
  %v2691 = vsel %vm291, %v2357, 0.0
  %2692 = vadd.xlane.f32.xlu0 %v2691
  %v2693 = vpop.xlane.xlu0 %2692
  %v2694 = vsel %vm291, %v2358, 0.0
  %2695 = vadd.xlane.f32.xlu0 %v2694
  %v2696 = vpop.xlane.xlu0 %2695
  %v2697 = vsel %vm291, %v2359, 0.0
  %2698 = vadd.xlane.f32.xlu0 %v2697
  %v2699 = vpop.xlane.xlu0 %2698
  %v2700 = vsel %vm291, %v2360, 0.0
  %2701 = vadd.xlane.f32.xlu0 %v2700
  %v2702 = vpop.xlane.xlu0 %2701
  %v2703 = vsel %vm291, %v2361, 0.0
  %2704 = vadd.xlane.f32.xlu0 %v2703
  %v2705 = vpop.xlane.xlu0 %2704
  %v2706 = vsel %vm291, %v2362, 0.0
  %2707 = vadd.xlane.f32.xlu0 %v2706
  %v2708 = vpop.xlane.xlu0 %2707
  %v2709 = vsel %vm291, %v2363, 0.0
  %2710 = vadd.xlane.f32.xlu0 %v2709
  %v2711 = vpop.xlane.xlu0 %2710
  %v2712 = vsel %vm291, %v2364, 0.0
  %2713 = vadd.xlane.f32.xlu0 %v2712
  %v2714 = vpop.xlane.xlu0 %2713
  %v2715 = vsel %vm291, %v2365, 0.0
  %2716 = vadd.xlane.f32.xlu0 %v2715
  %v2717 = vpop.xlane.xlu0 %2716
  %v2718 = vsel %vm291, %v2366, 0.0
  %2719 = vadd.xlane.f32.xlu0 %v2718
  %v2720 = vpop.xlane.xlu0 %2719
  %v2721 = vsel %vm291, %v2367, 0.0
  %2722 = vadd.xlane.f32.xlu0 %v2721
  %v2723 = vpop.xlane.xlu0 %2722
  %v2724 = vsel %vm291, %v2368, 0.0
  %2725 = vadd.xlane.f32.xlu0 %v2724
  %v2726 = vpop.xlane.xlu0 %2725
  %v2727 = vsel %vm291, %v2369, 0.0
  %2728 = vadd.xlane.f32.xlu0 %v2727
  %v2729 = vpop.xlane.xlu0 %2728
  %v2730 = vsel %vm291, %v2370, 0.0
  %2731 = vadd.xlane.f32.xlu0 %v2730
  %v2732 = vpop.xlane.xlu0 %2731
  %v2733 = vsel %vm291, %v2371, 0.0
  %2734 = vadd.xlane.f32.xlu0 %v2733
  %v2735 = vpop.xlane.xlu0 %2734
  %v2736 = vsel %vm291, %v2372, 0.0
  %2737 = vadd.xlane.f32.xlu0 %v2736
  %v2738 = vpop.xlane.xlu0 %2737
  %v2739 = vsel %vm291, %v2373, 0.0
  %2740 = vadd.xlane.f32.xlu0 %v2739
  %v2741 = vpop.xlane.xlu0 %2740
  %v2742 = vsel %vm291, %v2374, 0.0
  %2743 = vadd.xlane.f32.xlu0 %v2742
  %v2744 = vpop.xlane.xlu0 %2743
  %v2745 = vsel %vm291, %v2375, 0.0
  %2746 = vadd.xlane.f32.xlu0 %v2745
  %v2747 = vpop.xlane.xlu0 %2746
  %v2748 = vsel %vm291, %v2376, 0.0
  %2749 = vadd.xlane.f32.xlu0 %v2748
  %v2750 = vpop.xlane.xlu0 %2749
  %v2751 = vsel %vm291, %v2377, 0.0
  %2752 = vadd.xlane.f32.xlu0 %v2751
  %v2753 = vpop.xlane.xlu0 %2752
  %v2754 = vsel %vm291, %v2378, 0.0
  %2755 = vadd.xlane.f32.xlu0 %v2754
  %v2756 = vpop.xlane.xlu0 %2755
  %v2757 = vsel %vm291, %v2379, 0.0
  %2758 = vadd.xlane.f32.xlu0 %v2757
  %v2759 = vpop.xlane.xlu0 %2758
  %v2760 = vsel %vm291, %v2380, 0.0
  %2761 = vadd.xlane.f32.xlu0 %v2760
  %v2762 = vpop.xlane.xlu0 %2761
  %v2763 = vsel %vm291, %v2381, 0.0
  %2764 = vadd.xlane.f32.xlu0 %v2763
  %v2765 = vpop.xlane.xlu0 %2764
  %s2766 = sld [smem:[#allocation2]]
  %v2767 = vstv %s2766
  %v2768 = vadd.f32 %v2384, %v2767
  %v2769 = vadd.f32 %v2387, %v2767
  %v2770 = vadd.f32 %v2390, %v2767
  %v2771 = vadd.f32 %v2393, %v2767
  %v2772 = vadd.f32 %v2396, %v2767
  %v2773 = vadd.f32 %v2399, %v2767
  %v2774 = vadd.f32 %v2402, %v2767
  %v2775 = vadd.f32 %v2405, %v2767
  %v2776 = vadd.f32 %v2408, %v2767
  %v2777 = vadd.f32 %v2411, %v2767
  %v2778 = vadd.f32 %v2414, %v2767
  %v2779 = vadd.f32 %v2417, %v2767
  %v2780 = vadd.f32 %v2420, %v2767
  %v2781 = vadd.f32 %v2423, %v2767
  %v2782 = vadd.f32 %v2426, %v2767
  %v2783 = vadd.f32 %v2429, %v2767
  %v2784 = vadd.f32 %v2432, %v2767
  %v2785 = vadd.f32 %v2435, %v2767
  %v2786 = vadd.f32 %v2438, %v2767
  %v2787 = vadd.f32 %v2441, %v2767
  %v2788 = vadd.f32 %v2444, %v2767
  %v2789 = vadd.f32 %v2447, %v2767
  %v2790 = vadd.f32 %v2450, %v2767
  %v2791 = vadd.f32 %v2453, %v2767
  %v2792 = vadd.f32 %v2456, %v2767
  %v2793 = vadd.f32 %v2459, %v2767
  %v2794 = vadd.f32 %v2462, %v2767
  %v2795 = vadd.f32 %v2465, %v2767
  %v2796 = vadd.f32 %v2468, %v2767
  %v2797 = vadd.f32 %v2471, %v2767
  %v2798 = vadd.f32 %v2474, %v2767
  %v2799 = vadd.f32 %v2477, %v2767
  %v2800 = vadd.f32 %v2480, %v2767
  %v2801 = vadd.f32 %v2483, %v2767
  %v2802 = vadd.f32 %v2486, %v2767
  %v2803 = vadd.f32 %v2489, %v2767
  %v2804 = vadd.f32 %v2492, %v2767
  %v2805 = vadd.f32 %v2495, %v2767
  %v2806 = vadd.f32 %v2498, %v2767
  %v2807 = vadd.f32 %v2501, %v2767
  %v2808 = vadd.f32 %v2504, %v2767
  %v2809 = vadd.f32 %v2507, %v2767
  %v2810 = vadd.f32 %v2510, %v2767
  %v2811 = vadd.f32 %v2513, %v2767
  %v2812 = vadd.f32 %v2516, %v2767
  %v2813 = vadd.f32 %v2519, %v2767
  %v2814 = vadd.f32 %v2522, %v2767
  %v2815 = vadd.f32 %v2525, %v2767
  %v2816 = vadd.f32 %v2528, %v2767
  %v2817 = vadd.f32 %v2531, %v2767
  %v2818 = vadd.f32 %v2534, %v2767
  %v2819 = vadd.f32 %v2537, %v2767
  %v2820 = vadd.f32 %v2540, %v2767
  %v2821 = vadd.f32 %v2543, %v2767
  %v2822 = vadd.f32 %v2546, %v2767
  %v2823 = vadd.f32 %v2549, %v2767
  %v2824 = vadd.f32 %v2552, %v2767
  %v2825 = vadd.f32 %v2555, %v2767
  %v2826 = vadd.f32 %v2558, %v2767
  %v2827 = vadd.f32 %v2561, %v2767
  %v2828 = vadd.f32 %v2564, %v2767
  %v2829 = vadd.f32 %v2567, %v2767
  %v2830 = vadd.f32 %v2570, %v2767
  %v2831 = vadd.f32 %v2573, %v2767
  %v2832 = vadd.f32 %v2576, %v2767
  %v2833 = vadd.f32 %v2579, %v2767
  %v2834 = vadd.f32 %v2582, %v2767
  %v2835 = vadd.f32 %v2585, %v2767
  %v2836 = vadd.f32 %v2588, %v2767
  %v2837 = vadd.f32 %v2591, %v2767
  %v2838 = vadd.f32 %v2594, %v2767
  %v2839 = vadd.f32 %v2597, %v2767
  %v2840 = vadd.f32 %v2600, %v2767
  %v2841 = vadd.f32 %v2603, %v2767
  %v2842 = vadd.f32 %v2606, %v2767
  %v2843 = vadd.f32 %v2609, %v2767
  %v2844 = vadd.f32 %v2612, %v2767
  %v2845 = vadd.f32 %v2615, %v2767
  %v2846 = vadd.f32 %v2618, %v2767
  %v2847 = vadd.f32 %v2621, %v2767
  %v2848 = vadd.f32 %v2624, %v2767
  %v2849 = vadd.f32 %v2627, %v2767
  %v2850 = vadd.f32 %v2630, %v2767
  %v2851 = vadd.f32 %v2633, %v2767
  %v2852 = vadd.f32 %v2636, %v2767
  %v2853 = vadd.f32 %v2639, %v2767
  %v2854 = vadd.f32 %v2642, %v2767
  %v2855 = vadd.f32 %v2645, %v2767
  %v2856 = vadd.f32 %v2648, %v2767
  %v2857 = vadd.f32 %v2651, %v2767
  %v2858 = vadd.f32 %v2654, %v2767
  %v2859 = vadd.f32 %v2657, %v2767
  %v2860 = vadd.f32 %v2660, %v2767
  %v2861 = vadd.f32 %v2663, %v2767
  %v2862 = vadd.f32 %v2666, %v2767
  %v2863 = vadd.f32 %v2669, %v2767
  %v2864 = vadd.f32 %v2672, %v2767
  %v2865 = vadd.f32 %v2675, %v2767
  %v2866 = vadd.f32 %v2678, %v2767
  %v2867 = vadd.f32 %v2681, %v2767
  %v2868 = vadd.f32 %v2684, %v2767
  %v2869 = vadd.f32 %v2687, %v2767
  %v2870 = vadd.f32 %v2690, %v2767
  %v2871 = vadd.f32 %v2693, %v2767
  %v2872 = vadd.f32 %v2696, %v2767
  %v2873 = vadd.f32 %v2699, %v2767
  %v2874 = vadd.f32 %v2702, %v2767
  %v2875 = vadd.f32 %v2705, %v2767
  %v2876 = vadd.f32 %v2708, %v2767
  %v2877 = vadd.f32 %v2711, %v2767
  %v2878 = vadd.f32 %v2714, %v2767
  %v2879 = vadd.f32 %v2717, %v2767
  %v2880 = vadd.f32 %v2720, %v2767
  %v2881 = vadd.f32 %v2723, %v2767
  %v2882 = vadd.f32 %v2726, %v2767
  %v2883 = vadd.f32 %v2729, %v2767
  %v2884 = vadd.f32 %v2732, %v2767
  %v2885 = vadd.f32 %v2735, %v2767
  %v2886 = vadd.f32 %v2738, %v2767
  %v2887 = vadd.f32 %v2741, %v2767
  %v2888 = vadd.f32 %v2744, %v2767
  %v2889 = vadd.f32 %v2747, %v2767
  %v2890 = vadd.f32 %v2750, %v2767
  %v2891 = vadd.f32 %v2753, %v2767
  %v2892 = vadd.f32 %v2756, %v2767
  %v2893 = vadd.f32 %v2759, %v2767
  %v2894 = vadd.f32 %v2762, %v2767
  %v2895 = vadd.f32 %v2765, %v2767
  %v2896 = vxor.u32 %v2768, 2147483648
  %v2897 = vxor.u32 %v2769, 2147483648
  %v2898 = vxor.u32 %v2770, 2147483648
  %v2899 = vxor.u32 %v2771, 2147483648
  %v2900 = vxor.u32 %v2772, 2147483648
  %v2901 = vxor.u32 %v2773, 2147483648
  %v2902 = vxor.u32 %v2774, 2147483648
  %v2903 = vxor.u32 %v2775, 2147483648
  %v2904 = vxor.u32 %v2776, 2147483648
  %v2905 = vxor.u32 %v2777, 2147483648
  %v2906 = vxor.u32 %v2778, 2147483648
  %v2907 = vxor.u32 %v2779, 2147483648
  %v2908 = vxor.u32 %v2780, 2147483648
  %v2909 = vxor.u32 %v2781, 2147483648
  %v2910 = vxor.u32 %v2782, 2147483648
  %v2911 = vxor.u32 %v2783, 2147483648
  %v2912 = vxor.u32 %v2784, 2147483648
  %v2913 = vxor.u32 %v2785, 2147483648
  %v2914 = vxor.u32 %v2786, 2147483648
  %v2915 = vxor.u32 %v2787, 2147483648
  %v2916 = vxor.u32 %v2788, 2147483648
  %v2917 = vxor.u32 %v2789, 2147483648
  %v2918 = vxor.u32 %v2790, 2147483648
  %v2919 = vxor.u32 %v2791, 2147483648
  %v2920 = vxor.u32 %v2792, 2147483648
  %v2921 = vxor.u32 %v2793, 2147483648
  %v2922 = vxor.u32 %v2794, 2147483648
  %v2923 = vxor.u32 %v2795, 2147483648
  %v2924 = vxor.u32 %v2796, 2147483648
  %v2925 = vxor.u32 %v2797, 2147483648
  %v2926 = vxor.u32 %v2798, 2147483648
  %v2927 = vxor.u32 %v2799, 2147483648
  %v2928 = vxor.u32 %v2800, 2147483648
  %v2929 = vxor.u32 %v2801, 2147483648
  %v2930 = vxor.u32 %v2802, 2147483648
  %v2931 = vxor.u32 %v2803, 2147483648
  %v2932 = vxor.u32 %v2804, 2147483648
  %v2933 = vxor.u32 %v2805, 2147483648
  %v2934 = vxor.u32 %v2806, 2147483648
  %v2935 = vxor.u32 %v2807, 2147483648
  %v2936 = vxor.u32 %v2808, 2147483648
  %v2937 = vxor.u32 %v2809, 2147483648
  %v2938 = vxor.u32 %v2810, 2147483648
  %v2939 = vxor.u32 %v2811, 2147483648
  %v2940 = vxor.u32 %v2812, 2147483648
  %v2941 = vxor.u32 %v2813, 2147483648
  %v2942 = vxor.u32 %v2814, 2147483648
  %v2943 = vxor.u32 %v2815, 2147483648
  %v2944 = vxor.u32 %v2816, 2147483648
  %v2945 = vxor.u32 %v2817, 2147483648
  %v2946 = vxor.u32 %v2818, 2147483648
  %v2947 = vxor.u32 %v2819, 2147483648
  %v2948 = vxor.u32 %v2820, 2147483648
  %v2949 = vxor.u32 %v2821, 2147483648
  %v2950 = vxor.u32 %v2822, 2147483648
  %v2951 = vxor.u32 %v2823, 2147483648
  %v2952 = vxor.u32 %v2824, 2147483648
  %v2953 = vxor.u32 %v2825, 2147483648
  %v2954 = vxor.u32 %v2826, 2147483648
  %v2955 = vxor.u32 %v2827, 2147483648
  %v2956 = vxor.u32 %v2828, 2147483648
  %v2957 = vxor.u32 %v2829, 2147483648
  %v2958 = vxor.u32 %v2830, 2147483648
  %v2959 = vxor.u32 %v2831, 2147483648
  %v2960 = vxor.u32 %v2832, 2147483648
  %v2961 = vxor.u32 %v2833, 2147483648
  %v2962 = vxor.u32 %v2834, 2147483648
  %v2963 = vxor.u32 %v2835, 2147483648
  %v2964 = vxor.u32 %v2836, 2147483648
  %v2965 = vxor.u32 %v2837, 2147483648
  %v2966 = vxor.u32 %v2838, 2147483648
  %v2967 = vxor.u32 %v2839, 2147483648
  %v2968 = vxor.u32 %v2840, 2147483648
  %v2969 = vxor.u32 %v2841, 2147483648
  %v2970 = vxor.u32 %v2842, 2147483648
  %v2971 = vxor.u32 %v2843, 2147483648
  %v2972 = vxor.u32 %v2844, 2147483648
  %v2973 = vxor.u32 %v2845, 2147483648
  %v2974 = vxor.u32 %v2846, 2147483648
  %v2975 = vxor.u32 %v2847, 2147483648
  %v2976 = vxor.u32 %v2848, 2147483648
  %v2977 = vxor.u32 %v2849, 2147483648
  %v2978 = vxor.u32 %v2850, 2147483648
  %v2979 = vxor.u32 %v2851, 2147483648
  %v2980 = vxor.u32 %v2852, 2147483648
  %v2981 = vxor.u32 %v2853, 2147483648
  %v2982 = vxor.u32 %v2854, 2147483648
  %v2983 = vxor.u32 %v2855, 2147483648
  %v2984 = vxor.u32 %v2856, 2147483648
  %v2985 = vxor.u32 %v2857, 2147483648
  %v2986 = vxor.u32 %v2858, 2147483648
  %v2987 = vxor.u32 %v2859, 2147483648
  %v2988 = vxor.u32 %v2860, 2147483648
  %v2989 = vxor.u32 %v2861, 2147483648
  %v2990 = vxor.u32 %v2862, 2147483648
  %v2991 = vxor.u32 %v2863, 2147483648
  %v2992 = vxor.u32 %v2864, 2147483648
  %v2993 = vxor.u32 %v2865, 2147483648
  %v2994 = vxor.u32 %v2866, 2147483648
  %v2995 = vxor.u32 %v2867, 2147483648
  %v2996 = vxor.u32 %v2868, 2147483648
  %v2997 = vxor.u32 %v2869, 2147483648
  %v2998 = vxor.u32 %v2870, 2147483648
  %v2999 = vxor.u32 %v2871, 2147483648
  %v3000 = vxor.u32 %v2872, 2147483648
  %v3001 = vxor.u32 %v2873, 2147483648
  %v3002 = vxor.u32 %v2874, 2147483648
  %v3003 = vxor.u32 %v2875, 2147483648
  %v3004 = vxor.u32 %v2876, 2147483648
  %v3005 = vxor.u32 %v2877, 2147483648
  %v3006 = vxor.u32 %v2878, 2147483648
  %v3007 = vxor.u32 %v2879, 2147483648
  %v3008 = vxor.u32 %v2880, 2147483648
  %v3009 = vxor.u32 %v2881, 2147483648
  %v3010 = vxor.u32 %v2882, 2147483648
  %v3011 = vxor.u32 %v2883, 2147483648
  %v3012 = vxor.u32 %v2884, 2147483648
  %v3013 = vxor.u32 %v2885, 2147483648
  %v3014 = vxor.u32 %v2886, 2147483648
  %v3015 = vxor.u32 %v2887, 2147483648
  %v3016 = vxor.u32 %v2888, 2147483648
  %v3017 = vxor.u32 %v2889, 2147483648
  %v3018 = vxor.u32 %v2890, 2147483648
  %v3019 = vxor.u32 %v2891, 2147483648
  %v3020 = vxor.u32 %v2892, 2147483648
  %v3021 = vxor.u32 %v2893, 2147483648
  %v3022 = vxor.u32 %v2894, 2147483648
  %v3023 = vxor.u32 %v2895, 2147483648
  %v3024 = vmul.f32 %v2896, 1.442695
  %v3025 = vpow.pop %v3024
  %v3026 = vmul.f32 %v2897, 1.442695
  %v3027 = vpow.pop %v3026
  %v3028 = vmul.f32 %v2898, 1.442695
  %v3029 = vpow.pop %v3028
  %v3030 = vmul.f32 %v2899, 1.442695
  %v3031 = vpow.pop %v3030
  %v3032 = vmul.f32 %v2900, 1.442695
  %v3033 = vpow.pop %v3032
  %v3034 = vmul.f32 %v2901, 1.442695
  %v3035 = vpow.pop %v3034
  %v3036 = vmul.f32 %v2902, 1.442695
  %v3037 = vpow.pop %v3036
  %v3038 = vmul.f32 %v2903, 1.442695
  %v3039 = vpow.pop %v3038
  %v3040 = vmul.f32 %v2904, 1.442695
  %v3041 = vpow.pop %v3040
  %v3042 = vmul.f32 %v2905, 1.442695
  %v3043 = vpow.pop %v3042
  %v3044 = vmul.f32 %v2906, 1.442695
  %v3045 = vpow.pop %v3044
  %v3046 = vmul.f32 %v2907, 1.442695
  %v3047 = vpow.pop %v3046
  %v3048 = vmul.f32 %v2908, 1.442695
  %v3049 = vpow.pop %v3048
  %v3050 = vmul.f32 %v2909, 1.442695
  %v3051 = vpow.pop %v3050
  %v3052 = vmul.f32 %v2910, 1.442695
  %v3053 = vpow.pop %v3052
  %v3054 = vmul.f32 %v2911, 1.442695
  %v3055 = vpow.pop %v3054
  %v3056 = vmul.f32 %v2912, 1.442695
  %v3057 = vpow.pop %v3056
  %v3058 = vmul.f32 %v2913, 1.442695
  %v3059 = vpow.pop %v3058
  %v3060 = vmul.f32 %v2914, 1.442695
  %v3061 = vpow.pop %v3060
  %v3062 = vmul.f32 %v2915, 1.442695
  %v3063 = vpow.pop %v3062
  %v3064 = vmul.f32 %v2916, 1.442695
  %v3065 = vpow.pop %v3064
  %v3066 = vmul.f32 %v2917, 1.442695
  %v3067 = vpow.pop %v3066
  %v3068 = vmul.f32 %v2918, 1.442695
  %v3069 = vpow.pop %v3068
  %v3070 = vmul.f32 %v2919, 1.442695
  %v3071 = vpow.pop %v3070
  %v3072 = vmul.f32 %v2920, 1.442695
  %v3073 = vpow.pop %v3072
  %v3074 = vmul.f32 %v2921, 1.442695
  %v3075 = vpow.pop %v3074
  %v3076 = vmul.f32 %v2922, 1.442695
  %v3077 = vpow.pop %v3076
  %v3078 = vmul.f32 %v2923, 1.442695
  %v3079 = vpow.pop %v3078
  %v3080 = vmul.f32 %v2924, 1.442695
  %v3081 = vpow.pop %v3080
  %v3082 = vmul.f32 %v2925, 1.442695
  %v3083 = vpow.pop %v3082
  %v3084 = vmul.f32 %v2926, 1.442695
  %v3085 = vpow.pop %v3084
  %v3086 = vmul.f32 %v2927, 1.442695
  %v3087 = vpow.pop %v3086
  %v3088 = vmul.f32 %v2928, 1.442695
  %v3089 = vpow.pop %v3088
  %v3090 = vmul.f32 %v2929, 1.442695
  %v3091 = vpow.pop %v3090
  %v3092 = vmul.f32 %v2930, 1.442695
  %v3093 = vpow.pop %v3092
  %v3094 = vmul.f32 %v2931, 1.442695
  %v3095 = vpow.pop %v3094
  %v3096 = vmul.f32 %v2932, 1.442695
  %v3097 = vpow.pop %v3096
  %v3098 = vmul.f32 %v2933, 1.442695
  %v3099 = vpow.pop %v3098
  %v3100 = vmul.f32 %v2934, 1.442695
  %v3101 = vpow.pop %v3100
  %v3102 = vmul.f32 %v2935, 1.442695
  %v3103 = vpow.pop %v3102
  %v3104 = vmul.f32 %v2936, 1.442695
  %v3105 = vpow.pop %v3104
  %v3106 = vmul.f32 %v2937, 1.442695
  %v3107 = vpow.pop %v3106
  %v3108 = vmul.f32 %v2938, 1.442695
  %v3109 = vpow.pop %v3108
  %v3110 = vmul.f32 %v2939, 1.442695
  %v3111 = vpow.pop %v3110
  %v3112 = vmul.f32 %v2940, 1.442695
  %v3113 = vpow.pop %v3112
  %v3114 = vmul.f32 %v2941, 1.442695
  %v3115 = vpow.pop %v3114
  %v3116 = vmul.f32 %v2942, 1.442695
  %v3117 = vpow.pop %v3116
  %v3118 = vmul.f32 %v2943, 1.442695
  %v3119 = vpow.pop %v3118
  %v3120 = vmul.f32 %v2944, 1.442695
  %v3121 = vpow.pop %v3120
  %v3122 = vmul.f32 %v2945, 1.442695
  %v3123 = vpow.pop %v3122
  %v3124 = vmul.f32 %v2946, 1.442695
  %v3125 = vpow.pop %v3124
  %v3126 = vmul.f32 %v2947, 1.442695
  %v3127 = vpow.pop %v3126
  %v3128 = vmul.f32 %v2948, 1.442695
  %v3129 = vpow.pop %v3128
  %v3130 = vmul.f32 %v2949, 1.442695
  %v3131 = vpow.pop %v3130
  %v3132 = vmul.f32 %v2950, 1.442695
  %v3133 = vpow.pop %v3132
  %v3134 = vmul.f32 %v2951, 1.442695
  %v3135 = vpow.pop %v3134
  %v3136 = vmul.f32 %v2952, 1.442695
  %v3137 = vpow.pop %v3136
  %v3138 = vmul.f32 %v2953, 1.442695
  %v3139 = vpow.pop %v3138
  %v3140 = vmul.f32 %v2954, 1.442695
  %v3141 = vpow.pop %v3140
  %v3142 = vmul.f32 %v2955, 1.442695
  %v3143 = vpow.pop %v3142
  %v3144 = vmul.f32 %v2956, 1.442695
  %v3145 = vpow.pop %v3144
  %v3146 = vmul.f32 %v2957, 1.442695
  %v3147 = vpow.pop %v3146
  %v3148 = vmul.f32 %v2958, 1.442695
  %v3149 = vpow.pop %v3148
  %v3150 = vmul.f32 %v2959, 1.442695
  %v3151 = vpow.pop %v3150
  %v3152 = vmul.f32 %v2960, 1.442695
  %v3153 = vpow.pop %v3152
  %v3154 = vmul.f32 %v2961, 1.442695
  %v3155 = vpow.pop %v3154
  %v3156 = vmul.f32 %v2962, 1.442695
  %v3157 = vpow.pop %v3156
  %v3158 = vmul.f32 %v2963, 1.442695
  %v3159 = vpow.pop %v3158
  %v3160 = vmul.f32 %v2964, 1.442695
  %v3161 = vpow.pop %v3160
  %v3162 = vmul.f32 %v2965, 1.442695
  %v3163 = vpow.pop %v3162
  %v3164 = vmul.f32 %v2966, 1.442695
  %v3165 = vpow.pop %v3164
  %v3166 = vmul.f32 %v2967, 1.442695
  %v3167 = vpow.pop %v3166
  %v3168 = vmul.f32 %v2968, 1.442695
  %v3169 = vpow.pop %v3168
  %v3170 = vmul.f32 %v2969, 1.442695
  %v3171 = vpow.pop %v3170
  %v3172 = vmul.f32 %v2970, 1.442695
  %v3173 = vpow.pop %v3172
  %v3174 = vmul.f32 %v2971, 1.442695
  %v3175 = vpow.pop %v3174
  %v3176 = vmul.f32 %v2972, 1.442695
  %v3177 = vpow.pop %v3176
  %v3178 = vmul.f32 %v2973, 1.442695
  %v3179 = vpow.pop %v3178
  %v3180 = vmul.f32 %v2974, 1.442695
  %v3181 = vpow.pop %v3180
  %v3182 = vmul.f32 %v2975, 1.442695
  %v3183 = vpow.pop %v3182
  %v3184 = vmul.f32 %v2976, 1.442695
  %v3185 = vpow.pop %v3184
  %v3186 = vmul.f32 %v2977, 1.442695
  %v3187 = vpow.pop %v3186
  %v3188 = vmul.f32 %v2978, 1.442695
  %v3189 = vpow.pop %v3188
  %v3190 = vmul.f32 %v2979, 1.442695
  %v3191 = vpow.pop %v3190
  %v3192 = vmul.f32 %v2980, 1.442695
  %v3193 = vpow.pop %v3192
  %v3194 = vmul.f32 %v2981, 1.442695
  %v3195 = vpow.pop %v3194
  %v3196 = vmul.f32 %v2982, 1.442695
  %v3197 = vpow.pop %v3196
  %v3198 = vmul.f32 %v2983, 1.442695
  %v3199 = vpow.pop %v3198
  %v3200 = vmul.f32 %v2984, 1.442695
  %v3201 = vpow.pop %v3200
  %v3202 = vmul.f32 %v2985, 1.442695
  %v3203 = vpow.pop %v3202
  %v3204 = vmul.f32 %v2986, 1.442695
  %v3205 = vpow.pop %v3204
  %v3206 = vmul.f32 %v2987, 1.442695
  %v3207 = vpow.pop %v3206
  %v3208 = vmul.f32 %v2988, 1.442695
  %v3209 = vpow.pop %v3208
  %v3210 = vmul.f32 %v2989, 1.442695
  %v3211 = vpow.pop %v3210
  %v3212 = vmul.f32 %v2990, 1.442695
  %v3213 = vpow.pop %v3212
  %v3214 = vmul.f32 %v2991, 1.442695
  %v3215 = vpow.pop %v3214
  %v3216 = vmul.f32 %v2992, 1.442695
  %v3217 = vpow.pop %v3216
  %v3218 = vmul.f32 %v2993, 1.442695
  %v3219 = vpow.pop %v3218
  %v3220 = vmul.f32 %v2994, 1.442695
  %v3221 = vpow.pop %v3220
  %v3222 = vmul.f32 %v2995, 1.442695
  %v3223 = vpow.pop %v3222
  %v3224 = vmul.f32 %v2996, 1.442695
  %v3225 = vpow.pop %v3224
  %v3226 = vmul.f32 %v2997, 1.442695
  %v3227 = vpow.pop %v3226
  %v3228 = vmul.f32 %v2998, 1.442695
  %v3229 = vpow.pop %v3228
  %v3230 = vmul.f32 %v2999, 1.442695
  %v3231 = vpow.pop %v3230
  %v3232 = vmul.f32 %v3000, 1.442695
  %v3233 = vpow.pop %v3232
  %v3234 = vmul.f32 %v3001, 1.442695
  %v3235 = vpow.pop %v3234
  %v3236 = vmul.f32 %v3002, 1.442695
  %v3237 = vpow.pop %v3236
  %v3238 = vmul.f32 %v3003, 1.442695
  %v3239 = vpow.pop %v3238
  %v3240 = vmul.f32 %v3004, 1.442695
  %v3241 = vpow.pop %v3240
  %v3242 = vmul.f32 %v3005, 1.442695
  %v3243 = vpow.pop %v3242
  %v3244 = vmul.f32 %v3006, 1.442695
  %v3245 = vpow.pop %v3244
  %v3246 = vmul.f32 %v3007, 1.442695
  %v3247 = vpow.pop %v3246
  %v3248 = vmul.f32 %v3008, 1.442695
  %v3249 = vpow.pop %v3248
  %v3250 = vmul.f32 %v3009, 1.442695
  %v3251 = vpow.pop %v3250
  %v3252 = vmul.f32 %v3010, 1.442695
  %v3253 = vpow.pop %v3252
  %v3254 = vmul.f32 %v3011, 1.442695
  %v3255 = vpow.pop %v3254
  %v3256 = vmul.f32 %v3012, 1.442695
  %v3257 = vpow.pop %v3256
  %v3258 = vmul.f32 %v3013, 1.442695
  %v3259 = vpow.pop %v3258
  %v3260 = vmul.f32 %v3014, 1.442695
  %v3261 = vpow.pop %v3260
  %v3262 = vmul.f32 %v3015, 1.442695
  %v3263 = vpow.pop %v3262
  %v3264 = vmul.f32 %v3016, 1.442695
  %v3265 = vpow.pop %v3264
  %v3266 = vmul.f32 %v3017, 1.442695
  %v3267 = vpow.pop %v3266
  %v3268 = vmul.f32 %v3018, 1.442695
  %v3269 = vpow.pop %v3268
  %v3270 = vmul.f32 %v3019, 1.442695
  %v3271 = vpow.pop %v3270
  %v3272 = vmul.f32 %v3020, 1.442695
  %v3273 = vpow.pop %v3272
  %v3274 = vmul.f32 %v3021, 1.442695
  %v3275 = vpow.pop %v3274
  %v3276 = vmul.f32 %v3022, 1.442695
  %v3277 = vpow.pop %v3276
  %v3278 = vmul.f32 %v3023, 1.442695
  %v3279 = vpow.pop %v3278
  %v3280 = vadd.f32 %v3025, 1.0
  %v3281 = vadd.f32 %v3027, 1.0
  %v3282 = vadd.f32 %v3029, 1.0
  %v3283 = vadd.f32 %v3031, 1.0
  %v3284 = vadd.f32 %v3033, 1.0
  %v3285 = vadd.f32 %v3035, 1.0
  %v3286 = vadd.f32 %v3037, 1.0
  %v3287 = vadd.f32 %v3039, 1.0
  %v3288 = vadd.f32 %v3041, 1.0
  %v3289 = vadd.f32 %v3043, 1.0
  %v3290 = vadd.f32 %v3045, 1.0
  %v3291 = vadd.f32 %v3047, 1.0
  %v3292 = vadd.f32 %v3049, 1.0
  %v3293 = vadd.f32 %v3051, 1.0
  %v3294 = vadd.f32 %v3053, 1.0
  %v3295 = vadd.f32 %v3055, 1.0
  %v3296 = vadd.f32 %v3057, 1.0
  %v3297 = vadd.f32 %v3059, 1.0
  %v3298 = vadd.f32 %v3061, 1.0
  %v3299 = vadd.f32 %v3063, 1.0
  %v3300 = vadd.f32 %v3065, 1.0
  %v3301 = vadd.f32 %v3067, 1.0
  %v3302 = vadd.f32 %v3069, 1.0
  %v3303 = vadd.f32 %v3071, 1.0
  %v3304 = vadd.f32 %v3073, 1.0
  %v3305 = vadd.f32 %v3075, 1.0
  %v3306 = vadd.f32 %v3077, 1.0
  %v3307 = vadd.f32 %v3079, 1.0
  %v3308 = vadd.f32 %v3081, 1.0
  %v3309 = vadd.f32 %v3083, 1.0
  %v3310 = vadd.f32 %v3085, 1.0
  %v3311 = vadd.f32 %v3087, 1.0
  %v3312 = vadd.f32 %v3089, 1.0
  %v3313 = vadd.f32 %v3091, 1.0
  %v3314 = vadd.f32 %v3093, 1.0
  %v3315 = vadd.f32 %v3095, 1.0
  %v3316 = vadd.f32 %v3097, 1.0
  %v3317 = vadd.f32 %v3099, 1.0
  %v3318 = vadd.f32 %v3101, 1.0
  %v3319 = vadd.f32 %v3103, 1.0
  %v3320 = vadd.f32 %v3105, 1.0
  %v3321 = vadd.f32 %v3107, 1.0
  %v3322 = vadd.f32 %v3109, 1.0
  %v3323 = vadd.f32 %v3111, 1.0
  %v3324 = vadd.f32 %v3113, 1.0
  %v3325 = vadd.f32 %v3115, 1.0
  %v3326 = vadd.f32 %v3117, 1.0
  %v3327 = vadd.f32 %v3119, 1.0
  %v3328 = vadd.f32 %v3121, 1.0
  %v3329 = vadd.f32 %v3123, 1.0
  %v3330 = vadd.f32 %v3125, 1.0
  %v3331 = vadd.f32 %v3127, 1.0
  %v3332 = vadd.f32 %v3129, 1.0
  %v3333 = vadd.f32 %v3131, 1.0
  %v3334 = vadd.f32 %v3133, 1.0
  %v3335 = vadd.f32 %v3135, 1.0
  %v3336 = vadd.f32 %v3137, 1.0
  %v3337 = vadd.f32 %v3139, 1.0
  %v3338 = vadd.f32 %v3141, 1.0
  %v3339 = vadd.f32 %v3143, 1.0
  %v3340 = vadd.f32 %v3145, 1.0
  %v3341 = vadd.f32 %v3147, 1.0
  %v3342 = vadd.f32 %v3149, 1.0
  %v3343 = vadd.f32 %v3151, 1.0
  %v3344 = vadd.f32 %v3153, 1.0
  %v3345 = vadd.f32 %v3155, 1.0
  %v3346 = vadd.f32 %v3157, 1.0
  %v3347 = vadd.f32 %v3159, 1.0
  %v3348 = vadd.f32 %v3161, 1.0
  %v3349 = vadd.f32 %v3163, 1.0
  %v3350 = vadd.f32 %v3165, 1.0
  %v3351 = vadd.f32 %v3167, 1.0
  %v3352 = vadd.f32 %v3169, 1.0
  %v3353 = vadd.f32 %v3171, 1.0
  %v3354 = vadd.f32 %v3173, 1.0
  %v3355 = vadd.f32 %v3175, 1.0
  %v3356 = vadd.f32 %v3177, 1.0
  %v3357 = vadd.f32 %v3179, 1.0
  %v3358 = vadd.f32 %v3181, 1.0
  %v3359 = vadd.f32 %v3183, 1.0
  %v3360 = vadd.f32 %v3185, 1.0
  %v3361 = vadd.f32 %v3187, 1.0
  %v3362 = vadd.f32 %v3189, 1.0
  %v3363 = vadd.f32 %v3191, 1.0
  %v3364 = vadd.f32 %v3193, 1.0
  %v3365 = vadd.f32 %v3195, 1.0
  %v3366 = vadd.f32 %v3197, 1.0
  %v3367 = vadd.f32 %v3199, 1.0
  %v3368 = vadd.f32 %v3201, 1.0
  %v3369 = vadd.f32 %v3203, 1.0
  %v3370 = vadd.f32 %v3205, 1.0
  %v3371 = vadd.f32 %v3207, 1.0
  %v3372 = vadd.f32 %v3209, 1.0
  %v3373 = vadd.f32 %v3211, 1.0
  %v3374 = vadd.f32 %v3213, 1.0
  %v3375 = vadd.f32 %v3215, 1.0
  %v3376 = vadd.f32 %v3217, 1.0
  %v3377 = vadd.f32 %v3219, 1.0
  %v3378 = vadd.f32 %v3221, 1.0
  %v3379 = vadd.f32 %v3223, 1.0
  %v3380 = vadd.f32 %v3225, 1.0
  %v3381 = vadd.f32 %v3227, 1.0
  %v3382 = vadd.f32 %v3229, 1.0
  %v3383 = vadd.f32 %v3231, 1.0
  %v3384 = vadd.f32 %v3233, 1.0
  %v3385 = vadd.f32 %v3235, 1.0
  %v3386 = vadd.f32 %v3237, 1.0
  %v3387 = vadd.f32 %v3239, 1.0
  %v3388 = vadd.f32 %v3241, 1.0
  %v3389 = vadd.f32 %v3243, 1.0
  %v3390 = vadd.f32 %v3245, 1.0
  %v3391 = vadd.f32 %v3247, 1.0
  %v3392 = vadd.f32 %v3249, 1.0
  %v3393 = vadd.f32 %v3251, 1.0
  %v3394 = vadd.f32 %v3253, 1.0
  %v3395 = vadd.f32 %v3255, 1.0
  %v3396 = vadd.f32 %v3257, 1.0
  %v3397 = vadd.f32 %v3259, 1.0
  %v3398 = vadd.f32 %v3261, 1.0
  %v3399 = vadd.f32 %v3263, 1.0
  %v3400 = vadd.f32 %v3265, 1.0
  %v3401 = vadd.f32 %v3267, 1.0
  %v3402 = vadd.f32 %v3269, 1.0
  %v3403 = vadd.f32 %v3271, 1.0
  %v3404 = vadd.f32 %v3273, 1.0
  %v3405 = vadd.f32 %v3275, 1.0
  %v3406 = vadd.f32 %v3277, 1.0
  %v3407 = vadd.f32 %v3279, 1.0
  %v3408 = vrcp.pop %v3280
  %v3409 = vmul.f32 %v3280, %v3408
  %v3410 = vsub.f32 1.0, %v3409
  %v3411 = vmul.f32 %v3408, %v3410
  %v3412 = vadd.f32 %v3408, %v3411
  %vm3413 = vweird.f32 %v3280
  %vm3414 = vweird.f32 %v3408
  %vm3415 = vmor %vm3413, %vm3414
  %v3416 = vsel %vm3415, %v3408, %v3412
  %v3417 = vand.u32 2147483647, %v3280
  %vm3418 = vcmp.eq.f32.partialorder %v3417, 8.507059e+37
  %v3419 = vand.u32 %v3280, 2147483648
  %v3420 = vor.u32 1.1754944e-38, %v3419
  %v3421 = vsel %vm3418, %v3420, %v3416
  %v3422 = vmul.f32 1.0, %v3421
  %v3423 = vrcp.pop %v3281
  %v3424 = vmul.f32 %v3281, %v3423
  %v3425 = vsub.f32 1.0, %v3424
  %v3426 = vmul.f32 %v3423, %v3425
  %v3427 = vadd.f32 %v3423, %v3426
  %vm3428 = vweird.f32 %v3281
  %vm3429 = vweird.f32 %v3423
  %vm3430 = vmor %vm3428, %vm3429
  %v3431 = vsel %vm3430, %v3423, %v3427
  %v3432 = vand.u32 2147483647, %v3281
  %vm3433 = vcmp.eq.f32.partialorder %v3432, 8.507059e+37
  %v3434 = vand.u32 %v3281, 2147483648
  %v3435 = vor.u32 1.1754944e-38, %v3434
  %v3436 = vsel %vm3433, %v3435, %v3431
  %v3437 = vmul.f32 1.0, %v3436
  %v3438 = vrcp.pop %v3282
  %v3439 = vmul.f32 %v3282, %v3438
  %v3440 = vsub.f32 1.0, %v3439
  %v3441 = vmul.f32 %v3438, %v3440
  %v3442 = vadd.f32 %v3438, %v3441
  %vm3443 = vweird.f32 %v3282
  %vm3444 = vweird.f32 %v3438
  %vm3445 = vmor %vm3443, %vm3444
  %v3446 = vsel %vm3445, %v3438, %v3442
  %v3447 = vand.u32 2147483647, %v3282
  %vm3448 = vcmp.eq.f32.partialorder %v3447, 8.507059e+37
  %v3449 = vand.u32 %v3282, 2147483648
  %v3450 = vor.u32 1.1754944e-38, %v3449
  %v3451 = vsel %vm3448, %v3450, %v3446
  %v3452 = vmul.f32 1.0, %v3451
  %v3453 = vrcp.pop %v3283
  %v3454 = vmul.f32 %v3283, %v3453
  %v3455 = vsub.f32 1.0, %v3454
  %v3456 = vmul.f32 %v3453, %v3455
  %v3457 = vadd.f32 %v3453, %v3456
  %vm3458 = vweird.f32 %v3283
  %vm3459 = vweird.f32 %v3453
  %vm3460 = vmor %vm3458, %vm3459
  %v3461 = vsel %vm3460, %v3453, %v3457
  %v3462 = vand.u32 2147483647, %v3283
  %vm3463 = vcmp.eq.f32.partialorder %v3462, 8.507059e+37
  %v3464 = vand.u32 %v3283, 2147483648
  %v3465 = vor.u32 1.1754944e-38, %v3464
  %v3466 = vsel %vm3463, %v3465, %v3461
  %v3467 = vmul.f32 1.0, %v3466
  %v3468 = vrcp.pop %v3284
  %v3469 = vmul.f32 %v3284, %v3468
  %v3470 = vsub.f32 1.0, %v3469
  %v3471 = vmul.f32 %v3468, %v3470
  %v3472 = vadd.f32 %v3468, %v3471
  %vm3473 = vweird.f32 %v3284
  %vm3474 = vweird.f32 %v3468
  %vm3475 = vmor %vm3473, %vm3474
  %v3476 = vsel %vm3475, %v3468, %v3472
  %v3477 = vand.u32 2147483647, %v3284
  %vm3478 = vcmp.eq.f32.partialorder %v3477, 8.507059e+37
  %v3479 = vand.u32 %v3284, 2147483648
  %v3480 = vor.u32 1.1754944e-38, %v3479
  %v3481 = vsel %vm3478, %v3480, %v3476
  %v3482 = vmul.f32 1.0, %v3481
  %v3483 = vrcp.pop %v3285
  %v3484 = vmul.f32 %v3285, %v3483
  %v3485 = vsub.f32 1.0, %v3484
  %v3486 = vmul.f32 %v3483, %v3485
  %v3487 = vadd.f32 %v3483, %v3486
  %vm3488 = vweird.f32 %v3285
  %vm3489 = vweird.f32 %v3483
  %vm3490 = vmor %vm3488, %vm3489
  %v3491 = vsel %vm3490, %v3483, %v3487
  %v3492 = vand.u32 2147483647, %v3285
  %vm3493 = vcmp.eq.f32.partialorder %v3492, 8.507059e+37
  %v3494 = vand.u32 %v3285, 2147483648
  %v3495 = vor.u32 1.1754944e-38, %v3494
  %v3496 = vsel %vm3493, %v3495, %v3491
  %v3497 = vmul.f32 1.0, %v3496
  %v3498 = vrcp.pop %v3286
  %v3499 = vmul.f32 %v3286, %v3498
  %v3500 = vsub.f32 1.0, %v3499
  %v3501 = vmul.f32 %v3498, %v3500
  %v3502 = vadd.f32 %v3498, %v3501
  %vm3503 = vweird.f32 %v3286
  %vm3504 = vweird.f32 %v3498
  %vm3505 = vmor %vm3503, %vm3504
  %v3506 = vsel %vm3505, %v3498, %v3502
  %v3507 = vand.u32 2147483647, %v3286
  %vm3508 = vcmp.eq.f32.partialorder %v3507, 8.507059e+37
  %v3509 = vand.u32 %v3286, 2147483648
  %v3510 = vor.u32 1.1754944e-38, %v3509
  %v3511 = vsel %vm3508, %v3510, %v3506
  %v3512 = vmul.f32 1.0, %v3511
  %v3513 = vrcp.pop %v3287
  %v3514 = vmul.f32 %v3287, %v3513
  %v3515 = vsub.f32 1.0, %v3514
  %v3516 = vmul.f32 %v3513, %v3515
  %v3517 = vadd.f32 %v3513, %v3516
  %vm3518 = vweird.f32 %v3287
  %vm3519 = vweird.f32 %v3513
  %vm3520 = vmor %vm3518, %vm3519
  %v3521 = vsel %vm3520, %v3513, %v3517
  %v3522 = vand.u32 2147483647, %v3287
  %vm3523 = vcmp.eq.f32.partialorder %v3522, 8.507059e+37
  %v3524 = vand.u32 %v3287, 2147483648
  %v3525 = vor.u32 1.1754944e-38, %v3524
  %v3526 = vsel %vm3523, %v3525, %v3521
  %v3527 = vmul.f32 1.0, %v3526
  %v3528 = vrcp.pop %v3288
  %v3529 = vmul.f32 %v3288, %v3528
  %v3530 = vsub.f32 1.0, %v3529
  %v3531 = vmul.f32 %v3528, %v3530
  %v3532 = vadd.f32 %v3528, %v3531
  %vm3533 = vweird.f32 %v3288
  %vm3534 = vweird.f32 %v3528
  %vm3535 = vmor %vm3533, %vm3534
  %v3536 = vsel %vm3535, %v3528, %v3532
  %v3537 = vand.u32 2147483647, %v3288
  %vm3538 = vcmp.eq.f32.partialorder %v3537, 8.507059e+37
  %v3539 = vand.u32 %v3288, 2147483648
  %v3540 = vor.u32 1.1754944e-38, %v3539
  %v3541 = vsel %vm3538, %v3540, %v3536
  %v3542 = vmul.f32 1.0, %v3541
  %v3543 = vrcp.pop %v3289
  %v3544 = vmul.f32 %v3289, %v3543
  %v3545 = vsub.f32 1.0, %v3544
  %v3546 = vmul.f32 %v3543, %v3545
  %v3547 = vadd.f32 %v3543, %v3546
  %vm3548 = vweird.f32 %v3289
  %vm3549 = vweird.f32 %v3543
  %vm3550 = vmor %vm3548, %vm3549
  %v3551 = vsel %vm3550, %v3543, %v3547
  %v3552 = vand.u32 2147483647, %v3289
  %vm3553 = vcmp.eq.f32.partialorder %v3552, 8.507059e+37
  %v3554 = vand.u32 %v3289, 2147483648
  %v3555 = vor.u32 1.1754944e-38, %v3554
  %v3556 = vsel %vm3553, %v3555, %v3551
  %v3557 = vmul.f32 1.0, %v3556
  %v3558 = vrcp.pop %v3290
  %v3559 = vmul.f32 %v3290, %v3558
  %v3560 = vsub.f32 1.0, %v3559
  %v3561 = vmul.f32 %v3558, %v3560
  %v3562 = vadd.f32 %v3558, %v3561
  %vm3563 = vweird.f32 %v3290
  %vm3564 = vweird.f32 %v3558
  %vm3565 = vmor %vm3563, %vm3564
  %v3566 = vsel %vm3565, %v3558, %v3562
  %v3567 = vand.u32 2147483647, %v3290
  %vm3568 = vcmp.eq.f32.partialorder %v3567, 8.507059e+37
  %v3569 = vand.u32 %v3290, 2147483648
  %v3570 = vor.u32 1.1754944e-38, %v3569
  %v3571 = vsel %vm3568, %v3570, %v3566
  %v3572 = vmul.f32 1.0, %v3571
  %v3573 = vrcp.pop %v3291
  %v3574 = vmul.f32 %v3291, %v3573
  %v3575 = vsub.f32 1.0, %v3574
  %v3576 = vmul.f32 %v3573, %v3575
  %v3577 = vadd.f32 %v3573, %v3576
  %vm3578 = vweird.f32 %v3291
  %vm3579 = vweird.f32 %v3573
  %vm3580 = vmor %vm3578, %vm3579
  %v3581 = vsel %vm3580, %v3573, %v3577
  %v3582 = vand.u32 2147483647, %v3291
  %vm3583 = vcmp.eq.f32.partialorder %v3582, 8.507059e+37
  %v3584 = vand.u32 %v3291, 2147483648
  %v3585 = vor.u32 1.1754944e-38, %v3584
  %v3586 = vsel %vm3583, %v3585, %v3581
  %v3587 = vmul.f32 1.0, %v3586
  %v3588 = vrcp.pop %v3292
  %v3589 = vmul.f32 %v3292, %v3588
  %v3590 = vsub.f32 1.0, %v3589
  %v3591 = vmul.f32 %v3588, %v3590
  %v3592 = vadd.f32 %v3588, %v3591
  %vm3593 = vweird.f32 %v3292
  %vm3594 = vweird.f32 %v3588
  %vm3595 = vmor %vm3593, %vm3594
  %v3596 = vsel %vm3595, %v3588, %v3592
  %v3597 = vand.u32 2147483647, %v3292
  %vm3598 = vcmp.eq.f32.partialorder %v3597, 8.507059e+37
  %v3599 = vand.u32 %v3292, 2147483648
  %v3600 = vor.u32 1.1754944e-38, %v3599
  %v3601 = vsel %vm3598, %v3600, %v3596
  %v3602 = vmul.f32 1.0, %v3601
  %v3603 = vrcp.pop %v3293
  %v3604 = vmul.f32 %v3293, %v3603
  %v3605 = vsub.f32 1.0, %v3604
  %v3606 = vmul.f32 %v3603, %v3605
  %v3607 = vadd.f32 %v3603, %v3606
  %vm3608 = vweird.f32 %v3293
  %vm3609 = vweird.f32 %v3603
  %vm3610 = vmor %vm3608, %vm3609
  %v3611 = vsel %vm3610, %v3603, %v3607
  %v3612 = vand.u32 2147483647, %v3293
  %vm3613 = vcmp.eq.f32.partialorder %v3612, 8.507059e+37
  %v3614 = vand.u32 %v3293, 2147483648
  %v3615 = vor.u32 1.1754944e-38, %v3614
  %v3616 = vsel %vm3613, %v3615, %v3611
  %v3617 = vmul.f32 1.0, %v3616
  %v3618 = vrcp.pop %v3294
  %v3619 = vmul.f32 %v3294, %v3618
  %v3620 = vsub.f32 1.0, %v3619
  %v3621 = vmul.f32 %v3618, %v3620
  %v3622 = vadd.f32 %v3618, %v3621
  %vm3623 = vweird.f32 %v3294
  %vm3624 = vweird.f32 %v3618
  %vm3625 = vmor %vm3623, %vm3624
  %v3626 = vsel %vm3625, %v3618, %v3622
  %v3627 = vand.u32 2147483647, %v3294
  %vm3628 = vcmp.eq.f32.partialorder %v3627, 8.507059e+37
  %v3629 = vand.u32 %v3294, 2147483648
  %v3630 = vor.u32 1.1754944e-38, %v3629
  %v3631 = vsel %vm3628, %v3630, %v3626
  %v3632 = vmul.f32 1.0, %v3631
  %v3633 = vrcp.pop %v3295
  %v3634 = vmul.f32 %v3295, %v3633
  %v3635 = vsub.f32 1.0, %v3634
  %v3636 = vmul.f32 %v3633, %v3635
  %v3637 = vadd.f32 %v3633, %v3636
  %vm3638 = vweird.f32 %v3295
  %vm3639 = vweird.f32 %v3633
  %vm3640 = vmor %vm3638, %vm3639
  %v3641 = vsel %vm3640, %v3633, %v3637
  %v3642 = vand.u32 2147483647, %v3295
  %vm3643 = vcmp.eq.f32.partialorder %v3642, 8.507059e+37
  %v3644 = vand.u32 %v3295, 2147483648
  %v3645 = vor.u32 1.1754944e-38, %v3644
  %v3646 = vsel %vm3643, %v3645, %v3641
  %v3647 = vmul.f32 1.0, %v3646
  %v3648 = vrcp.pop %v3296
  %v3649 = vmul.f32 %v3296, %v3648
  %v3650 = vsub.f32 1.0, %v3649
  %v3651 = vmul.f32 %v3648, %v3650
  %v3652 = vadd.f32 %v3648, %v3651
  %vm3653 = vweird.f32 %v3296
  %vm3654 = vweird.f32 %v3648
  %vm3655 = vmor %vm3653, %vm3654
  %v3656 = vsel %vm3655, %v3648, %v3652
  %v3657 = vand.u32 2147483647, %v3296
  %vm3658 = vcmp.eq.f32.partialorder %v3657, 8.507059e+37
  %v3659 = vand.u32 %v3296, 2147483648
  %v3660 = vor.u32 1.1754944e-38, %v3659
  %v3661 = vsel %vm3658, %v3660, %v3656
  %v3662 = vmul.f32 1.0, %v3661
  %v3663 = vrcp.pop %v3297
  %v3664 = vmul.f32 %v3297, %v3663
  %v3665 = vsub.f32 1.0, %v3664
  %v3666 = vmul.f32 %v3663, %v3665
  %v3667 = vadd.f32 %v3663, %v3666
  %vm3668 = vweird.f32 %v3297
  %vm3669 = vweird.f32 %v3663
  %vm3670 = vmor %vm3668, %vm3669
  %v3671 = vsel %vm3670, %v3663, %v3667
  %v3672 = vand.u32 2147483647, %v3297
  %vm3673 = vcmp.eq.f32.partialorder %v3672, 8.507059e+37
  %v3674 = vand.u32 %v3297, 2147483648
  %v3675 = vor.u32 1.1754944e-38, %v3674
  %v3676 = vsel %vm3673, %v3675, %v3671
  %v3677 = vmul.f32 1.0, %v3676
  %v3678 = vrcp.pop %v3298
  %v3679 = vmul.f32 %v3298, %v3678
  %v3680 = vsub.f32 1.0, %v3679
  %v3681 = vmul.f32 %v3678, %v3680
  %v3682 = vadd.f32 %v3678, %v3681
  %vm3683 = vweird.f32 %v3298
  %vm3684 = vweird.f32 %v3678
  %vm3685 = vmor %vm3683, %vm3684
  %v3686 = vsel %vm3685, %v3678, %v3682
  %v3687 = vand.u32 2147483647, %v3298
  %vm3688 = vcmp.eq.f32.partialorder %v3687, 8.507059e+37
  %v3689 = vand.u32 %v3298, 2147483648
  %v3690 = vor.u32 1.1754944e-38, %v3689
  %v3691 = vsel %vm3688, %v3690, %v3686
  %v3692 = vmul.f32 1.0, %v3691
  %v3693 = vrcp.pop %v3299
  %v3694 = vmul.f32 %v3299, %v3693
  %v3695 = vsub.f32 1.0, %v3694
  %v3696 = vmul.f32 %v3693, %v3695
  %v3697 = vadd.f32 %v3693, %v3696
  %vm3698 = vweird.f32 %v3299
  %vm3699 = vweird.f32 %v3693
  %vm3700 = vmor %vm3698, %vm3699
  %v3701 = vsel %vm3700, %v3693, %v3697
  %v3702 = vand.u32 2147483647, %v3299
  %vm3703 = vcmp.eq.f32.partialorder %v3702, 8.507059e+37
  %v3704 = vand.u32 %v3299, 2147483648
  %v3705 = vor.u32 1.1754944e-38, %v3704
  %v3706 = vsel %vm3703, %v3705, %v3701
  %v3707 = vmul.f32 1.0, %v3706
  %v3708 = vrcp.pop %v3300
  %v3709 = vmul.f32 %v3300, %v3708
  %v3710 = vsub.f32 1.0, %v3709
  %v3711 = vmul.f32 %v3708, %v3710
  %v3712 = vadd.f32 %v3708, %v3711
  %vm3713 = vweird.f32 %v3300
  %vm3714 = vweird.f32 %v3708
  %vm3715 = vmor %vm3713, %vm3714
  %v3716 = vsel %vm3715, %v3708, %v3712
  %v3717 = vand.u32 2147483647, %v3300
  %vm3718 = vcmp.eq.f32.partialorder %v3717, 8.507059e+37
  %v3719 = vand.u32 %v3300, 2147483648
  %v3720 = vor.u32 1.1754944e-38, %v3719
  %v3721 = vsel %vm3718, %v3720, %v3716
  %v3722 = vmul.f32 1.0, %v3721
  %v3723 = vrcp.pop %v3301
  %v3724 = vmul.f32 %v3301, %v3723
  %v3725 = vsub.f32 1.0, %v3724
  %v3726 = vmul.f32 %v3723, %v3725
  %v3727 = vadd.f32 %v3723, %v3726
  %vm3728 = vweird.f32 %v3301
  %vm3729 = vweird.f32 %v3723
  %vm3730 = vmor %vm3728, %vm3729
  %v3731 = vsel %vm3730, %v3723, %v3727
  %v3732 = vand.u32 2147483647, %v3301
  %vm3733 = vcmp.eq.f32.partialorder %v3732, 8.507059e+37
  %v3734 = vand.u32 %v3301, 2147483648
  %v3735 = vor.u32 1.1754944e-38, %v3734
  %v3736 = vsel %vm3733, %v3735, %v3731
  %v3737 = vmul.f32 1.0, %v3736
  %v3738 = vrcp.pop %v3302
  %v3739 = vmul.f32 %v3302, %v3738
  %v3740 = vsub.f32 1.0, %v3739
  %v3741 = vmul.f32 %v3738, %v3740
  %v3742 = vadd.f32 %v3738, %v3741
  %vm3743 = vweird.f32 %v3302
  %vm3744 = vweird.f32 %v3738
  %vm3745 = vmor %vm3743, %vm3744
  %v3746 = vsel %vm3745, %v3738, %v3742
  %v3747 = vand.u32 2147483647, %v3302
  %vm3748 = vcmp.eq.f32.partialorder %v3747, 8.507059e+37
  %v3749 = vand.u32 %v3302, 2147483648
  %v3750 = vor.u32 1.1754944e-38, %v3749
  %v3751 = vsel %vm3748, %v3750, %v3746
  %v3752 = vmul.f32 1.0, %v3751
  %v3753 = vrcp.pop %v3303
  %v3754 = vmul.f32 %v3303, %v3753
  %v3755 = vsub.f32 1.0, %v3754
  %v3756 = vmul.f32 %v3753, %v3755
  %v3757 = vadd.f32 %v3753, %v3756
  %vm3758 = vweird.f32 %v3303
  %vm3759 = vweird.f32 %v3753
  %vm3760 = vmor %vm3758, %vm3759
  %v3761 = vsel %vm3760, %v3753, %v3757
  %v3762 = vand.u32 2147483647, %v3303
  %vm3763 = vcmp.eq.f32.partialorder %v3762, 8.507059e+37
  %v3764 = vand.u32 %v3303, 2147483648
  %v3765 = vor.u32 1.1754944e-38, %v3764
  %v3766 = vsel %vm3763, %v3765, %v3761
  %v3767 = vmul.f32 1.0, %v3766
  %v3768 = vrcp.pop %v3304
  %v3769 = vmul.f32 %v3304, %v3768
  %v3770 = vsub.f32 1.0, %v3769
  %v3771 = vmul.f32 %v3768, %v3770
  %v3772 = vadd.f32 %v3768, %v3771
  %vm3773 = vweird.f32 %v3304
  %vm3774 = vweird.f32 %v3768
  %vm3775 = vmor %vm3773, %vm3774
  %v3776 = vsel %vm3775, %v3768, %v3772
  %v3777 = vand.u32 2147483647, %v3304
  %vm3778 = vcmp.eq.f32.partialorder %v3777, 8.507059e+37
  %v3779 = vand.u32 %v3304, 2147483648
  %v3780 = vor.u32 1.1754944e-38, %v3779
  %v3781 = vsel %vm3778, %v3780, %v3776
  %v3782 = vmul.f32 1.0, %v3781
  %v3783 = vrcp.pop %v3305
  %v3784 = vmul.f32 %v3305, %v3783
  %v3785 = vsub.f32 1.0, %v3784
  %v3786 = vmul.f32 %v3783, %v3785
  %v3787 = vadd.f32 %v3783, %v3786
  %vm3788 = vweird.f32 %v3305
  %vm3789 = vweird.f32 %v3783
  %vm3790 = vmor %vm3788, %vm3789
  %v3791 = vsel %vm3790, %v3783, %v3787
  %v3792 = vand.u32 2147483647, %v3305
  %vm3793 = vcmp.eq.f32.partialorder %v3792, 8.507059e+37
  %v3794 = vand.u32 %v3305, 2147483648
  %v3795 = vor.u32 1.1754944e-38, %v3794
  %v3796 = vsel %vm3793, %v3795, %v3791
  %v3797 = vmul.f32 1.0, %v3796
  %v3798 = vrcp.pop %v3306
  %v3799 = vmul.f32 %v3306, %v3798
  %v3800 = vsub.f32 1.0, %v3799
  %v3801 = vmul.f32 %v3798, %v3800
  %v3802 = vadd.f32 %v3798, %v3801
  %vm3803 = vweird.f32 %v3306
  %vm3804 = vweird.f32 %v3798
  %vm3805 = vmor %vm3803, %vm3804
  %v3806 = vsel %vm3805, %v3798, %v3802
  %v3807 = vand.u32 2147483647, %v3306
  %vm3808 = vcmp.eq.f32.partialorder %v3807, 8.507059e+37
  %v3809 = vand.u32 %v3306, 2147483648
  %v3810 = vor.u32 1.1754944e-38, %v3809
  %v3811 = vsel %vm3808, %v3810, %v3806
  %v3812 = vmul.f32 1.0, %v3811
  %v3813 = vrcp.pop %v3307
  %v3814 = vmul.f32 %v3307, %v3813
  %v3815 = vsub.f32 1.0, %v3814
  %v3816 = vmul.f32 %v3813, %v3815
  %v3817 = vadd.f32 %v3813, %v3816
  %vm3818 = vweird.f32 %v3307
  %vm3819 = vweird.f32 %v3813
  %vm3820 = vmor %vm3818, %vm3819
  %v3821 = vsel %vm3820, %v3813, %v3817
  %v3822 = vand.u32 2147483647, %v3307
  %vm3823 = vcmp.eq.f32.partialorder %v3822, 8.507059e+37
  %v3824 = vand.u32 %v3307, 2147483648
  %v3825 = vor.u32 1.1754944e-38, %v3824
  %v3826 = vsel %vm3823, %v3825, %v3821
  %v3827 = vmul.f32 1.0, %v3826
  %v3828 = vrcp.pop %v3308
  %v3829 = vmul.f32 %v3308, %v3828
  %v3830 = vsub.f32 1.0, %v3829
  %v3831 = vmul.f32 %v3828, %v3830
  %v3832 = vadd.f32 %v3828, %v3831
  %vm3833 = vweird.f32 %v3308
  %vm3834 = vweird.f32 %v3828
  %vm3835 = vmor %vm3833, %vm3834
  %v3836 = vsel %vm3835, %v3828, %v3832
  %v3837 = vand.u32 2147483647, %v3308
  %vm3838 = vcmp.eq.f32.partialorder %v3837, 8.507059e+37
  %v3839 = vand.u32 %v3308, 2147483648
  %v3840 = vor.u32 1.1754944e-38, %v3839
  %v3841 = vsel %vm3838, %v3840, %v3836
  %v3842 = vmul.f32 1.0, %v3841
  %v3843 = vrcp.pop %v3309
  %v3844 = vmul.f32 %v3309, %v3843
  %v3845 = vsub.f32 1.0, %v3844
  %v3846 = vmul.f32 %v3843, %v3845
  %v3847 = vadd.f32 %v3843, %v3846
  %vm3848 = vweird.f32 %v3309
  %vm3849 = vweird.f32 %v3843
  %vm3850 = vmor %vm3848, %vm3849
  %v3851 = vsel %vm3850, %v3843, %v3847
  %v3852 = vand.u32 2147483647, %v3309
  %vm3853 = vcmp.eq.f32.partialorder %v3852, 8.507059e+37
  %v3854 = vand.u32 %v3309, 2147483648
  %v3855 = vor.u32 1.1754944e-38, %v3854
  %v3856 = vsel %vm3853, %v3855, %v3851
  %v3857 = vmul.f32 1.0, %v3856
  %v3858 = vrcp.pop %v3310
  %v3859 = vmul.f32 %v3310, %v3858
  %v3860 = vsub.f32 1.0, %v3859
  %v3861 = vmul.f32 %v3858, %v3860
  %v3862 = vadd.f32 %v3858, %v3861
  %vm3863 = vweird.f32 %v3310
  %vm3864 = vweird.f32 %v3858
  %vm3865 = vmor %vm3863, %vm3864
  %v3866 = vsel %vm3865, %v3858, %v3862
  %v3867 = vand.u32 2147483647, %v3310
  %vm3868 = vcmp.eq.f32.partialorder %v3867, 8.507059e+37
  %v3869 = vand.u32 %v3310, 2147483648
  %v3870 = vor.u32 1.1754944e-38, %v3869
  %v3871 = vsel %vm3868, %v3870, %v3866
  %v3872 = vmul.f32 1.0, %v3871
  %v3873 = vrcp.pop %v3311
  %v3874 = vmul.f32 %v3311, %v3873
  %v3875 = vsub.f32 1.0, %v3874
  %v3876 = vmul.f32 %v3873, %v3875
  %v3877 = vadd.f32 %v3873, %v3876
  %vm3878 = vweird.f32 %v3311
  %vm3879 = vweird.f32 %v3873
  %vm3880 = vmor %vm3878, %vm3879
  %v3881 = vsel %vm3880, %v3873, %v3877
  %v3882 = vand.u32 2147483647, %v3311
  %vm3883 = vcmp.eq.f32.partialorder %v3882, 8.507059e+37
  %v3884 = vand.u32 %v3311, 2147483648
  %v3885 = vor.u32 1.1754944e-38, %v3884
  %v3886 = vsel %vm3883, %v3885, %v3881
  %v3887 = vmul.f32 1.0, %v3886
  %v3888 = vrcp.pop %v3312
  %v3889 = vmul.f32 %v3312, %v3888
  %v3890 = vsub.f32 1.0, %v3889
  %v3891 = vmul.f32 %v3888, %v3890
  %v3892 = vadd.f32 %v3888, %v3891
  %vm3893 = vweird.f32 %v3312
  %vm3894 = vweird.f32 %v3888
  %vm3895 = vmor %vm3893, %vm3894
  %v3896 = vsel %vm3895, %v3888, %v3892
  %v3897 = vand.u32 2147483647, %v3312
  %vm3898 = vcmp.eq.f32.partialorder %v3897, 8.507059e+37
  %v3899 = vand.u32 %v3312, 2147483648
  %v3900 = vor.u32 1.1754944e-38, %v3899
  %v3901 = vsel %vm3898, %v3900, %v3896
  %v3902 = vmul.f32 1.0, %v3901
  %v3903 = vrcp.pop %v3313
  %v3904 = vmul.f32 %v3313, %v3903
  %v3905 = vsub.f32 1.0, %v3904
  %v3906 = vmul.f32 %v3903, %v3905
  %v3907 = vadd.f32 %v3903, %v3906
  %vm3908 = vweird.f32 %v3313
  %vm3909 = vweird.f32 %v3903
  %vm3910 = vmor %vm3908, %vm3909
  %v3911 = vsel %vm3910, %v3903, %v3907
  %v3912 = vand.u32 2147483647, %v3313
  %vm3913 = vcmp.eq.f32.partialorder %v3912, 8.507059e+37
  %v3914 = vand.u32 %v3313, 2147483648
  %v3915 = vor.u32 1.1754944e-38, %v3914
  %v3916 = vsel %vm3913, %v3915, %v3911
  %v3917 = vmul.f32 1.0, %v3916
  %v3918 = vrcp.pop %v3314
  %v3919 = vmul.f32 %v3314, %v3918
  %v3920 = vsub.f32 1.0, %v3919
  %v3921 = vmul.f32 %v3918, %v3920
  %v3922 = vadd.f32 %v3918, %v3921
  %vm3923 = vweird.f32 %v3314
  %vm3924 = vweird.f32 %v3918
  %vm3925 = vmor %vm3923, %vm3924
  %v3926 = vsel %vm3925, %v3918, %v3922
  %v3927 = vand.u32 2147483647, %v3314
  %vm3928 = vcmp.eq.f32.partialorder %v3927, 8.507059e+37
  %v3929 = vand.u32 %v3314, 2147483648
  %v3930 = vor.u32 1.1754944e-38, %v3929
  %v3931 = vsel %vm3928, %v3930, %v3926
  %v3932 = vmul.f32 1.0, %v3931
  %v3933 = vrcp.pop %v3315
  %v3934 = vmul.f32 %v3315, %v3933
  %v3935 = vsub.f32 1.0, %v3934
  %v3936 = vmul.f32 %v3933, %v3935
  %v3937 = vadd.f32 %v3933, %v3936
  %vm3938 = vweird.f32 %v3315
  %vm3939 = vweird.f32 %v3933
  %vm3940 = vmor %vm3938, %vm3939
  %v3941 = vsel %vm3940, %v3933, %v3937
  %v3942 = vand.u32 2147483647, %v3315
  %vm3943 = vcmp.eq.f32.partialorder %v3942, 8.507059e+37
  %v3944 = vand.u32 %v3315, 2147483648
  %v3945 = vor.u32 1.1754944e-38, %v3944
  %v3946 = vsel %vm3943, %v3945, %v3941
  %v3947 = vmul.f32 1.0, %v3946
  %v3948 = vrcp.pop %v3316
  %v3949 = vmul.f32 %v3316, %v3948
  %v3950 = vsub.f32 1.0, %v3949
  %v3951 = vmul.f32 %v3948, %v3950
  %v3952 = vadd.f32 %v3948, %v3951
  %vm3953 = vweird.f32 %v3316
  %vm3954 = vweird.f32 %v3948
  %vm3955 = vmor %vm3953, %vm3954
  %v3956 = vsel %vm3955, %v3948, %v3952
  %v3957 = vand.u32 2147483647, %v3316
  %vm3958 = vcmp.eq.f32.partialorder %v3957, 8.507059e+37
  %v3959 = vand.u32 %v3316, 2147483648
  %v3960 = vor.u32 1.1754944e-38, %v3959
  %v3961 = vsel %vm3958, %v3960, %v3956
  %v3962 = vmul.f32 1.0, %v3961
  %v3963 = vrcp.pop %v3317
  %v3964 = vmul.f32 %v3317, %v3963
  %v3965 = vsub.f32 1.0, %v3964
  %v3966 = vmul.f32 %v3963, %v3965
  %v3967 = vadd.f32 %v3963, %v3966
  %vm3968 = vweird.f32 %v3317
  %vm3969 = vweird.f32 %v3963
  %vm3970 = vmor %vm3968, %vm3969
  %v3971 = vsel %vm3970, %v3963, %v3967
  %v3972 = vand.u32 2147483647, %v3317
  %vm3973 = vcmp.eq.f32.partialorder %v3972, 8.507059e+37
  %v3974 = vand.u32 %v3317, 2147483648
  %v3975 = vor.u32 1.1754944e-38, %v3974
  %v3976 = vsel %vm3973, %v3975, %v3971
  %v3977 = vmul.f32 1.0, %v3976
  %v3978 = vrcp.pop %v3318
  %v3979 = vmul.f32 %v3318, %v3978
  %v3980 = vsub.f32 1.0, %v3979
  %v3981 = vmul.f32 %v3978, %v3980
  %v3982 = vadd.f32 %v3978, %v3981
  %vm3983 = vweird.f32 %v3318
  %vm3984 = vweird.f32 %v3978
  %vm3985 = vmor %vm3983, %vm3984
  %v3986 = vsel %vm3985, %v3978, %v3982
  %v3987 = vand.u32 2147483647, %v3318
  %vm3988 = vcmp.eq.f32.partialorder %v3987, 8.507059e+37
  %v3989 = vand.u32 %v3318, 2147483648
  %v3990 = vor.u32 1.1754944e-38, %v3989
  %v3991 = vsel %vm3988, %v3990, %v3986
  %v3992 = vmul.f32 1.0, %v3991
  %v3993 = vrcp.pop %v3319
  %v3994 = vmul.f32 %v3319, %v3993
  %v3995 = vsub.f32 1.0, %v3994
  %v3996 = vmul.f32 %v3993, %v3995
  %v3997 = vadd.f32 %v3993, %v3996
  %vm3998 = vweird.f32 %v3319
  %vm3999 = vweird.f32 %v3993
  %vm4000 = vmor %vm3998, %vm3999
  %v4001 = vsel %vm4000, %v3993, %v3997
  %v4002 = vand.u32 2147483647, %v3319
  %vm4003 = vcmp.eq.f32.partialorder %v4002, 8.507059e+37
  %v4004 = vand.u32 %v3319, 2147483648
  %v4005 = vor.u32 1.1754944e-38, %v4004
  %v4006 = vsel %vm4003, %v4005, %v4001
  %v4007 = vmul.f32 1.0, %v4006
  %v4008 = vrcp.pop %v3320
  %v4009 = vmul.f32 %v3320, %v4008
  %v4010 = vsub.f32 1.0, %v4009
  %v4011 = vmul.f32 %v4008, %v4010
  %v4012 = vadd.f32 %v4008, %v4011
  %vm4013 = vweird.f32 %v3320
  %vm4014 = vweird.f32 %v4008
  %vm4015 = vmor %vm4013, %vm4014
  %v4016 = vsel %vm4015, %v4008, %v4012
  %v4017 = vand.u32 2147483647, %v3320
  %vm4018 = vcmp.eq.f32.partialorder %v4017, 8.507059e+37
  %v4019 = vand.u32 %v3320, 2147483648
  %v4020 = vor.u32 1.1754944e-38, %v4019
  %v4021 = vsel %vm4018, %v4020, %v4016
  %v4022 = vmul.f32 1.0, %v4021
  %v4023 = vrcp.pop %v3321
  %v4024 = vmul.f32 %v3321, %v4023
  %v4025 = vsub.f32 1.0, %v4024
  %v4026 = vmul.f32 %v4023, %v4025
  %v4027 = vadd.f32 %v4023, %v4026
  %vm4028 = vweird.f32 %v3321
  %vm4029 = vweird.f32 %v4023
  %vm4030 = vmor %vm4028, %vm4029
  %v4031 = vsel %vm4030, %v4023, %v4027
  %v4032 = vand.u32 2147483647, %v3321
  %vm4033 = vcmp.eq.f32.partialorder %v4032, 8.507059e+37
  %v4034 = vand.u32 %v3321, 2147483648
  %v4035 = vor.u32 1.1754944e-38, %v4034
  %v4036 = vsel %vm4033, %v4035, %v4031
  %v4037 = vmul.f32 1.0, %v4036
  %v4038 = vrcp.pop %v3322
  %v4039 = vmul.f32 %v3322, %v4038
  %v4040 = vsub.f32 1.0, %v4039
  %v4041 = vmul.f32 %v4038, %v4040
  %v4042 = vadd.f32 %v4038, %v4041
  %vm4043 = vweird.f32 %v3322
  %vm4044 = vweird.f32 %v4038
  %vm4045 = vmor %vm4043, %vm4044
  %v4046 = vsel %vm4045, %v4038, %v4042
  %v4047 = vand.u32 2147483647, %v3322
  %vm4048 = vcmp.eq.f32.partialorder %v4047, 8.507059e+37
  %v4049 = vand.u32 %v3322, 2147483648
  %v4050 = vor.u32 1.1754944e-38, %v4049
  %v4051 = vsel %vm4048, %v4050, %v4046
  %v4052 = vmul.f32 1.0, %v4051
  %v4053 = vrcp.pop %v3323
  %v4054 = vmul.f32 %v3323, %v4053
  %v4055 = vsub.f32 1.0, %v4054
  %v4056 = vmul.f32 %v4053, %v4055
  %v4057 = vadd.f32 %v4053, %v4056
  %vm4058 = vweird.f32 %v3323
  %vm4059 = vweird.f32 %v4053
  %vm4060 = vmor %vm4058, %vm4059
  %v4061 = vsel %vm4060, %v4053, %v4057
  %v4062 = vand.u32 2147483647, %v3323
  %vm4063 = vcmp.eq.f32.partialorder %v4062, 8.507059e+37
  %v4064 = vand.u32 %v3323, 2147483648
  %v4065 = vor.u32 1.1754944e-38, %v4064
  %v4066 = vsel %vm4063, %v4065, %v4061
  %v4067 = vmul.f32 1.0, %v4066
  %v4068 = vrcp.pop %v3324
  %v4069 = vmul.f32 %v3324, %v4068
  %v4070 = vsub.f32 1.0, %v4069
  %v4071 = vmul.f32 %v4068, %v4070
  %v4072 = vadd.f32 %v4068, %v4071
  %vm4073 = vweird.f32 %v3324
  %vm4074 = vweird.f32 %v4068
  %vm4075 = vmor %vm4073, %vm4074
  %v4076 = vsel %vm4075, %v4068, %v4072
  %v4077 = vand.u32 2147483647, %v3324
  %vm4078 = vcmp.eq.f32.partialorder %v4077, 8.507059e+37
  %v4079 = vand.u32 %v3324, 2147483648
  %v4080 = vor.u32 1.1754944e-38, %v4079
  %v4081 = vsel %vm4078, %v4080, %v4076
  %v4082 = vmul.f32 1.0, %v4081
  %v4083 = vrcp.pop %v3325
  %v4084 = vmul.f32 %v3325, %v4083
  %v4085 = vsub.f32 1.0, %v4084
  %v4086 = vmul.f32 %v4083, %v4085
  %v4087 = vadd.f32 %v4083, %v4086
  %vm4088 = vweird.f32 %v3325
  %vm4089 = vweird.f32 %v4083
  %vm4090 = vmor %vm4088, %vm4089
  %v4091 = vsel %vm4090, %v4083, %v4087
  %v4092 = vand.u32 2147483647, %v3325
  %vm4093 = vcmp.eq.f32.partialorder %v4092, 8.507059e+37
  %v4094 = vand.u32 %v3325, 2147483648
  %v4095 = vor.u32 1.1754944e-38, %v4094
  %v4096 = vsel %vm4093, %v4095, %v4091
  %v4097 = vmul.f32 1.0, %v4096
  %v4098 = vrcp.pop %v3326
  %v4099 = vmul.f32 %v3326, %v4098
  %v4100 = vsub.f32 1.0, %v4099
  %v4101 = vmul.f32 %v4098, %v4100
  %v4102 = vadd.f32 %v4098, %v4101
  %vm4103 = vweird.f32 %v3326
  %vm4104 = vweird.f32 %v4098
  %vm4105 = vmor %vm4103, %vm4104
  %v4106 = vsel %vm4105, %v4098, %v4102
  %v4107 = vand.u32 2147483647, %v3326
  %vm4108 = vcmp.eq.f32.partialorder %v4107, 8.507059e+37
  %v4109 = vand.u32 %v3326, 2147483648
  %v4110 = vor.u32 1.1754944e-38, %v4109
  %v4111 = vsel %vm4108, %v4110, %v4106
  %v4112 = vmul.f32 1.0, %v4111
  %v4113 = vrcp.pop %v3327
  %v4114 = vmul.f32 %v3327, %v4113
  %v4115 = vsub.f32 1.0, %v4114
  %v4116 = vmul.f32 %v4113, %v4115
  %v4117 = vadd.f32 %v4113, %v4116
  %vm4118 = vweird.f32 %v3327
  %vm4119 = vweird.f32 %v4113
  %vm4120 = vmor %vm4118, %vm4119
  %v4121 = vsel %vm4120, %v4113, %v4117
  %v4122 = vand.u32 2147483647, %v3327
  %vm4123 = vcmp.eq.f32.partialorder %v4122, 8.507059e+37
  %v4124 = vand.u32 %v3327, 2147483648
  %v4125 = vor.u32 1.1754944e-38, %v4124
  %v4126 = vsel %vm4123, %v4125, %v4121
  %v4127 = vmul.f32 1.0, %v4126
  %v4128 = vrcp.pop %v3328
  %v4129 = vmul.f32 %v3328, %v4128
  %v4130 = vsub.f32 1.0, %v4129
  %v4131 = vmul.f32 %v4128, %v4130
  %v4132 = vadd.f32 %v4128, %v4131
  %vm4133 = vweird.f32 %v3328
  %vm4134 = vweird.f32 %v4128
  %vm4135 = vmor %vm4133, %vm4134
  %v4136 = vsel %vm4135, %v4128, %v4132
  %v4137 = vand.u32 2147483647, %v3328
  %vm4138 = vcmp.eq.f32.partialorder %v4137, 8.507059e+37
  %v4139 = vand.u32 %v3328, 2147483648
  %v4140 = vor.u32 1.1754944e-38, %v4139
  %v4141 = vsel %vm4138, %v4140, %v4136
  %v4142 = vmul.f32 1.0, %v4141
  %v4143 = vrcp.pop %v3329
  %v4144 = vmul.f32 %v3329, %v4143
  %v4145 = vsub.f32 1.0, %v4144
  %v4146 = vmul.f32 %v4143, %v4145
  %v4147 = vadd.f32 %v4143, %v4146
  %vm4148 = vweird.f32 %v3329
  %vm4149 = vweird.f32 %v4143
  %vm4150 = vmor %vm4148, %vm4149
  %v4151 = vsel %vm4150, %v4143, %v4147
  %v4152 = vand.u32 2147483647, %v3329
  %vm4153 = vcmp.eq.f32.partialorder %v4152, 8.507059e+37
  %v4154 = vand.u32 %v3329, 2147483648
  %v4155 = vor.u32 1.1754944e-38, %v4154
  %v4156 = vsel %vm4153, %v4155, %v4151
  %v4157 = vmul.f32 1.0, %v4156
  %v4158 = vrcp.pop %v3330
  %v4159 = vmul.f32 %v3330, %v4158
  %v4160 = vsub.f32 1.0, %v4159
  %v4161 = vmul.f32 %v4158, %v4160
  %v4162 = vadd.f32 %v4158, %v4161
  %vm4163 = vweird.f32 %v3330
  %vm4164 = vweird.f32 %v4158
  %vm4165 = vmor %vm4163, %vm4164
  %v4166 = vsel %vm4165, %v4158, %v4162
  %v4167 = vand.u32 2147483647, %v3330
  %vm4168 = vcmp.eq.f32.partialorder %v4167, 8.507059e+37
  %v4169 = vand.u32 %v3330, 2147483648
  %v4170 = vor.u32 1.1754944e-38, %v4169
  %v4171 = vsel %vm4168, %v4170, %v4166
  %v4172 = vmul.f32 1.0, %v4171
  %v4173 = vrcp.pop %v3331
  %v4174 = vmul.f32 %v3331, %v4173
  %v4175 = vsub.f32 1.0, %v4174
  %v4176 = vmul.f32 %v4173, %v4175
  %v4177 = vadd.f32 %v4173, %v4176
  %vm4178 = vweird.f32 %v3331
  %vm4179 = vweird.f32 %v4173
  %vm4180 = vmor %vm4178, %vm4179
  %v4181 = vsel %vm4180, %v4173, %v4177
  %v4182 = vand.u32 2147483647, %v3331
  %vm4183 = vcmp.eq.f32.partialorder %v4182, 8.507059e+37
  %v4184 = vand.u32 %v3331, 2147483648
  %v4185 = vor.u32 1.1754944e-38, %v4184
  %v4186 = vsel %vm4183, %v4185, %v4181
  %v4187 = vmul.f32 1.0, %v4186
  %v4188 = vrcp.pop %v3332
  %v4189 = vmul.f32 %v3332, %v4188
  %v4190 = vsub.f32 1.0, %v4189
  %v4191 = vmul.f32 %v4188, %v4190
  %v4192 = vadd.f32 %v4188, %v4191
  %vm4193 = vweird.f32 %v3332
  %vm4194 = vweird.f32 %v4188
  %vm4195 = vmor %vm4193, %vm4194
  %v4196 = vsel %vm4195, %v4188, %v4192
  %v4197 = vand.u32 2147483647, %v3332
  %vm4198 = vcmp.eq.f32.partialorder %v4197, 8.507059e+37
  %v4199 = vand.u32 %v3332, 2147483648
  %v4200 = vor.u32 1.1754944e-38, %v4199
  %v4201 = vsel %vm4198, %v4200, %v4196
  %v4202 = vmul.f32 1.0, %v4201
  %v4203 = vrcp.pop %v3333
  %v4204 = vmul.f32 %v3333, %v4203
  %v4205 = vsub.f32 1.0, %v4204
  %v4206 = vmul.f32 %v4203, %v4205
  %v4207 = vadd.f32 %v4203, %v4206
  %vm4208 = vweird.f32 %v3333
  %vm4209 = vweird.f32 %v4203
  %vm4210 = vmor %vm4208, %vm4209
  %v4211 = vsel %vm4210, %v4203, %v4207
  %v4212 = vand.u32 2147483647, %v3333
  %vm4213 = vcmp.eq.f32.partialorder %v4212, 8.507059e+37
  %v4214 = vand.u32 %v3333, 2147483648
  %v4215 = vor.u32 1.1754944e-38, %v4214
  %v4216 = vsel %vm4213, %v4215, %v4211
  %v4217 = vmul.f32 1.0, %v4216
  %v4218 = vrcp.pop %v3334
  %v4219 = vmul.f32 %v3334, %v4218
  %v4220 = vsub.f32 1.0, %v4219
  %v4221 = vmul.f32 %v4218, %v4220
  %v4222 = vadd.f32 %v4218, %v4221
  %vm4223 = vweird.f32 %v3334
  %vm4224 = vweird.f32 %v4218
  %vm4225 = vmor %vm4223, %vm4224
  %v4226 = vsel %vm4225, %v4218, %v4222
  %v4227 = vand.u32 2147483647, %v3334
  %vm4228 = vcmp.eq.f32.partialorder %v4227, 8.507059e+37
  %v4229 = vand.u32 %v3334, 2147483648
  %v4230 = vor.u32 1.1754944e-38, %v4229
  %v4231 = vsel %vm4228, %v4230, %v4226
  %v4232 = vmul.f32 1.0, %v4231
  %v4233 = vrcp.pop %v3335
  %v4234 = vmul.f32 %v3335, %v4233
  %v4235 = vsub.f32 1.0, %v4234
  %v4236 = vmul.f32 %v4233, %v4235
  %v4237 = vadd.f32 %v4233, %v4236
  %vm4238 = vweird.f32 %v3335
  %vm4239 = vweird.f32 %v4233
  %vm4240 = vmor %vm4238, %vm4239
  %v4241 = vsel %vm4240, %v4233, %v4237
  %v4242 = vand.u32 2147483647, %v3335
  %vm4243 = vcmp.eq.f32.partialorder %v4242, 8.507059e+37
  %v4244 = vand.u32 %v3335, 2147483648
  %v4245 = vor.u32 1.1754944e-38, %v4244
  %v4246 = vsel %vm4243, %v4245, %v4241
  %v4247 = vmul.f32 1.0, %v4246
  %v4248 = vrcp.pop %v3336
  %v4249 = vmul.f32 %v3336, %v4248
  %v4250 = vsub.f32 1.0, %v4249
  %v4251 = vmul.f32 %v4248, %v4250
  %v4252 = vadd.f32 %v4248, %v4251
  %vm4253 = vweird.f32 %v3336
  %vm4254 = vweird.f32 %v4248
  %vm4255 = vmor %vm4253, %vm4254
  %v4256 = vsel %vm4255, %v4248, %v4252
  %v4257 = vand.u32 2147483647, %v3336
  %vm4258 = vcmp.eq.f32.partialorder %v4257, 8.507059e+37
  %v4259 = vand.u32 %v3336, 2147483648
  %v4260 = vor.u32 1.1754944e-38, %v4259
  %v4261 = vsel %vm4258, %v4260, %v4256
  %v4262 = vmul.f32 1.0, %v4261
  %v4263 = vrcp.pop %v3337
  %v4264 = vmul.f32 %v3337, %v4263
  %v4265 = vsub.f32 1.0, %v4264
  %v4266 = vmul.f32 %v4263, %v4265
  %v4267 = vadd.f32 %v4263, %v4266
  %vm4268 = vweird.f32 %v3337
  %vm4269 = vweird.f32 %v4263
  %vm4270 = vmor %vm4268, %vm4269
  %v4271 = vsel %vm4270, %v4263, %v4267
  %v4272 = vand.u32 2147483647, %v3337
  %vm4273 = vcmp.eq.f32.partialorder %v4272, 8.507059e+37
  %v4274 = vand.u32 %v3337, 2147483648
  %v4275 = vor.u32 1.1754944e-38, %v4274
  %v4276 = vsel %vm4273, %v4275, %v4271
  %v4277 = vmul.f32 1.0, %v4276
  %v4278 = vrcp.pop %v3338
  %v4279 = vmul.f32 %v3338, %v4278
  %v4280 = vsub.f32 1.0, %v4279
  %v4281 = vmul.f32 %v4278, %v4280
  %v4282 = vadd.f32 %v4278, %v4281
  %vm4283 = vweird.f32 %v3338
  %vm4284 = vweird.f32 %v4278
  %vm4285 = vmor %vm4283, %vm4284
  %v4286 = vsel %vm4285, %v4278, %v4282
  %v4287 = vand.u32 2147483647, %v3338
  %vm4288 = vcmp.eq.f32.partialorder %v4287, 8.507059e+37
  %v4289 = vand.u32 %v3338, 2147483648
  %v4290 = vor.u32 1.1754944e-38, %v4289
  %v4291 = vsel %vm4288, %v4290, %v4286
  %v4292 = vmul.f32 1.0, %v4291
  %v4293 = vrcp.pop %v3339
  %v4294 = vmul.f32 %v3339, %v4293
  %v4295 = vsub.f32 1.0, %v4294
  %v4296 = vmul.f32 %v4293, %v4295
  %v4297 = vadd.f32 %v4293, %v4296
  %vm4298 = vweird.f32 %v3339
  %vm4299 = vweird.f32 %v4293
  %vm4300 = vmor %vm4298, %vm4299
  %v4301 = vsel %vm4300, %v4293, %v4297
  %v4302 = vand.u32 2147483647, %v3339
  %vm4303 = vcmp.eq.f32.partialorder %v4302, 8.507059e+37
  %v4304 = vand.u32 %v3339, 2147483648
  %v4305 = vor.u32 1.1754944e-38, %v4304
  %v4306 = vsel %vm4303, %v4305, %v4301
  %v4307 = vmul.f32 1.0, %v4306
  %v4308 = vrcp.pop %v3340
  %v4309 = vmul.f32 %v3340, %v4308
  %v4310 = vsub.f32 1.0, %v4309
  %v4311 = vmul.f32 %v4308, %v4310
  %v4312 = vadd.f32 %v4308, %v4311
  %vm4313 = vweird.f32 %v3340
  %vm4314 = vweird.f32 %v4308
  %vm4315 = vmor %vm4313, %vm4314
  %v4316 = vsel %vm4315, %v4308, %v4312
  %v4317 = vand.u32 2147483647, %v3340
  %vm4318 = vcmp.eq.f32.partialorder %v4317, 8.507059e+37
  %v4319 = vand.u32 %v3340, 2147483648
  %v4320 = vor.u32 1.1754944e-38, %v4319
  %v4321 = vsel %vm4318, %v4320, %v4316
  %v4322 = vmul.f32 1.0, %v4321
  %v4323 = vrcp.pop %v3341
  %v4324 = vmul.f32 %v3341, %v4323
  %v4325 = vsub.f32 1.0, %v4324
  %v4326 = vmul.f32 %v4323, %v4325
  %v4327 = vadd.f32 %v4323, %v4326
  %vm4328 = vweird.f32 %v3341
  %vm4329 = vweird.f32 %v4323
  %vm4330 = vmor %vm4328, %vm4329
  %v4331 = vsel %vm4330, %v4323, %v4327
  %v4332 = vand.u32 2147483647, %v3341
  %vm4333 = vcmp.eq.f32.partialorder %v4332, 8.507059e+37
  %v4334 = vand.u32 %v3341, 2147483648
  %v4335 = vor.u32 1.1754944e-38, %v4334
  %v4336 = vsel %vm4333, %v4335, %v4331
  %v4337 = vmul.f32 1.0, %v4336
  %v4338 = vrcp.pop %v3342
  %v4339 = vmul.f32 %v3342, %v4338
  %v4340 = vsub.f32 1.0, %v4339
  %v4341 = vmul.f32 %v4338, %v4340
  %v4342 = vadd.f32 %v4338, %v4341
  %vm4343 = vweird.f32 %v3342
  %vm4344 = vweird.f32 %v4338
  %vm4345 = vmor %vm4343, %vm4344
  %v4346 = vsel %vm4345, %v4338, %v4342
  %v4347 = vand.u32 2147483647, %v3342
  %vm4348 = vcmp.eq.f32.partialorder %v4347, 8.507059e+37
  %v4349 = vand.u32 %v3342, 2147483648
  %v4350 = vor.u32 1.1754944e-38, %v4349
  %v4351 = vsel %vm4348, %v4350, %v4346
  %v4352 = vmul.f32 1.0, %v4351
  %v4353 = vrcp.pop %v3343
  %v4354 = vmul.f32 %v3343, %v4353
  %v4355 = vsub.f32 1.0, %v4354
  %v4356 = vmul.f32 %v4353, %v4355
  %v4357 = vadd.f32 %v4353, %v4356
  %vm4358 = vweird.f32 %v3343
  %vm4359 = vweird.f32 %v4353
  %vm4360 = vmor %vm4358, %vm4359
  %v4361 = vsel %vm4360, %v4353, %v4357
  %v4362 = vand.u32 2147483647, %v3343
  %vm4363 = vcmp.eq.f32.partialorder %v4362, 8.507059e+37
  %v4364 = vand.u32 %v3343, 2147483648
  %v4365 = vor.u32 1.1754944e-38, %v4364
  %v4366 = vsel %vm4363, %v4365, %v4361
  %v4367 = vmul.f32 1.0, %v4366
  %v4368 = vrcp.pop %v3344
  %v4369 = vmul.f32 %v3344, %v4368
  %v4370 = vsub.f32 1.0, %v4369
  %v4371 = vmul.f32 %v4368, %v4370
  %v4372 = vadd.f32 %v4368, %v4371
  %vm4373 = vweird.f32 %v3344
  %vm4374 = vweird.f32 %v4368
  %vm4375 = vmor %vm4373, %vm4374
  %v4376 = vsel %vm4375, %v4368, %v4372
  %v4377 = vand.u32 2147483647, %v3344
  %vm4378 = vcmp.eq.f32.partialorder %v4377, 8.507059e+37
  %v4379 = vand.u32 %v3344, 2147483648
  %v4380 = vor.u32 1.1754944e-38, %v4379
  %v4381 = vsel %vm4378, %v4380, %v4376
  %v4382 = vmul.f32 1.0, %v4381
  %v4383 = vrcp.pop %v3345
  %v4384 = vmul.f32 %v3345, %v4383
  %v4385 = vsub.f32 1.0, %v4384
  %v4386 = vmul.f32 %v4383, %v4385
  %v4387 = vadd.f32 %v4383, %v4386
  %vm4388 = vweird.f32 %v3345
  %vm4389 = vweird.f32 %v4383
  %vm4390 = vmor %vm4388, %vm4389
  %v4391 = vsel %vm4390, %v4383, %v4387
  %v4392 = vand.u32 2147483647, %v3345
  %vm4393 = vcmp.eq.f32.partialorder %v4392, 8.507059e+37
  %v4394 = vand.u32 %v3345, 2147483648
  %v4395 = vor.u32 1.1754944e-38, %v4394
  %v4396 = vsel %vm4393, %v4395, %v4391
  %v4397 = vmul.f32 1.0, %v4396
  %v4398 = vrcp.pop %v3346
  %v4399 = vmul.f32 %v3346, %v4398
  %v4400 = vsub.f32 1.0, %v4399
  %v4401 = vmul.f32 %v4398, %v4400
  %v4402 = vadd.f32 %v4398, %v4401
  %vm4403 = vweird.f32 %v3346
  %vm4404 = vweird.f32 %v4398
  %vm4405 = vmor %vm4403, %vm4404
  %v4406 = vsel %vm4405, %v4398, %v4402
  %v4407 = vand.u32 2147483647, %v3346
  %vm4408 = vcmp.eq.f32.partialorder %v4407, 8.507059e+37
  %v4409 = vand.u32 %v3346, 2147483648
  %v4410 = vor.u32 1.1754944e-38, %v4409
  %v4411 = vsel %vm4408, %v4410, %v4406
  %v4412 = vmul.f32 1.0, %v4411
  %v4413 = vrcp.pop %v3347
  %v4414 = vmul.f32 %v3347, %v4413
  %v4415 = vsub.f32 1.0, %v4414
  %v4416 = vmul.f32 %v4413, %v4415
  %v4417 = vadd.f32 %v4413, %v4416
  %vm4418 = vweird.f32 %v3347
  %vm4419 = vweird.f32 %v4413
  %vm4420 = vmor %vm4418, %vm4419
  %v4421 = vsel %vm4420, %v4413, %v4417
  %v4422 = vand.u32 2147483647, %v3347
  %vm4423 = vcmp.eq.f32.partialorder %v4422, 8.507059e+37
  %v4424 = vand.u32 %v3347, 2147483648
  %v4425 = vor.u32 1.1754944e-38, %v4424
  %v4426 = vsel %vm4423, %v4425, %v4421
  %v4427 = vmul.f32 1.0, %v4426
  %v4428 = vrcp.pop %v3348
  %v4429 = vmul.f32 %v3348, %v4428
  %v4430 = vsub.f32 1.0, %v4429
  %v4431 = vmul.f32 %v4428, %v4430
  %v4432 = vadd.f32 %v4428, %v4431
  %vm4433 = vweird.f32 %v3348
  %vm4434 = vweird.f32 %v4428
  %vm4435 = vmor %vm4433, %vm4434
  %v4436 = vsel %vm4435, %v4428, %v4432
  %v4437 = vand.u32 2147483647, %v3348
  %vm4438 = vcmp.eq.f32.partialorder %v4437, 8.507059e+37
  %v4439 = vand.u32 %v3348, 2147483648
  %v4440 = vor.u32 1.1754944e-38, %v4439
  %v4441 = vsel %vm4438, %v4440, %v4436
  %v4442 = vmul.f32 1.0, %v4441
  %v4443 = vrcp.pop %v3349
  %v4444 = vmul.f32 %v3349, %v4443
  %v4445 = vsub.f32 1.0, %v4444
  %v4446 = vmul.f32 %v4443, %v4445
  %v4447 = vadd.f32 %v4443, %v4446
  %vm4448 = vweird.f32 %v3349
  %vm4449 = vweird.f32 %v4443
  %vm4450 = vmor %vm4448, %vm4449
  %v4451 = vsel %vm4450, %v4443, %v4447
  %v4452 = vand.u32 2147483647, %v3349
  %vm4453 = vcmp.eq.f32.partialorder %v4452, 8.507059e+37
  %v4454 = vand.u32 %v3349, 2147483648
  %v4455 = vor.u32 1.1754944e-38, %v4454
  %v4456 = vsel %vm4453, %v4455, %v4451
  %v4457 = vmul.f32 1.0, %v4456
  %v4458 = vrcp.pop %v3350
  %v4459 = vmul.f32 %v3350, %v4458
  %v4460 = vsub.f32 1.0, %v4459
  %v4461 = vmul.f32 %v4458, %v4460
  %v4462 = vadd.f32 %v4458, %v4461
  %vm4463 = vweird.f32 %v3350
  %vm4464 = vweird.f32 %v4458
  %vm4465 = vmor %vm4463, %vm4464
  %v4466 = vsel %vm4465, %v4458, %v4462
  %v4467 = vand.u32 2147483647, %v3350
  %vm4468 = vcmp.eq.f32.partialorder %v4467, 8.507059e+37
  %v4469 = vand.u32 %v3350, 2147483648
  %v4470 = vor.u32 1.1754944e-38, %v4469
  %v4471 = vsel %vm4468, %v4470, %v4466
  %v4472 = vmul.f32 1.0, %v4471
  %v4473 = vrcp.pop %v3351
  %v4474 = vmul.f32 %v3351, %v4473
  %v4475 = vsub.f32 1.0, %v4474
  %v4476 = vmul.f32 %v4473, %v4475
  %v4477 = vadd.f32 %v4473, %v4476
  %vm4478 = vweird.f32 %v3351
  %vm4479 = vweird.f32 %v4473
  %vm4480 = vmor %vm4478, %vm4479
  %v4481 = vsel %vm4480, %v4473, %v4477
  %v4482 = vand.u32 2147483647, %v3351
  %vm4483 = vcmp.eq.f32.partialorder %v4482, 8.507059e+37
  %v4484 = vand.u32 %v3351, 2147483648
  %v4485 = vor.u32 1.1754944e-38, %v4484
  %v4486 = vsel %vm4483, %v4485, %v4481
  %v4487 = vmul.f32 1.0, %v4486
  %v4488 = vrcp.pop %v3352
  %v4489 = vmul.f32 %v3352, %v4488
  %v4490 = vsub.f32 1.0, %v4489
  %v4491 = vmul.f32 %v4488, %v4490
  %v4492 = vadd.f32 %v4488, %v4491
  %vm4493 = vweird.f32 %v3352
  %vm4494 = vweird.f32 %v4488
  %vm4495 = vmor %vm4493, %vm4494
  %v4496 = vsel %vm4495, %v4488, %v4492
  %v4497 = vand.u32 2147483647, %v3352
  %vm4498 = vcmp.eq.f32.partialorder %v4497, 8.507059e+37
  %v4499 = vand.u32 %v3352, 2147483648
  %v4500 = vor.u32 1.1754944e-38, %v4499
  %v4501 = vsel %vm4498, %v4500, %v4496
  %v4502 = vmul.f32 1.0, %v4501
  %v4503 = vrcp.pop %v3353
  %v4504 = vmul.f32 %v3353, %v4503
  %v4505 = vsub.f32 1.0, %v4504
  %v4506 = vmul.f32 %v4503, %v4505
  %v4507 = vadd.f32 %v4503, %v4506
  %vm4508 = vweird.f32 %v3353
  %vm4509 = vweird.f32 %v4503
  %vm4510 = vmor %vm4508, %vm4509
  %v4511 = vsel %vm4510, %v4503, %v4507
  %v4512 = vand.u32 2147483647, %v3353
  %vm4513 = vcmp.eq.f32.partialorder %v4512, 8.507059e+37
  %v4514 = vand.u32 %v3353, 2147483648
  %v4515 = vor.u32 1.1754944e-38, %v4514
  %v4516 = vsel %vm4513, %v4515, %v4511
  %v4517 = vmul.f32 1.0, %v4516
  %v4518 = vrcp.pop %v3354
  %v4519 = vmul.f32 %v3354, %v4518
  %v4520 = vsub.f32 1.0, %v4519
  %v4521 = vmul.f32 %v4518, %v4520
  %v4522 = vadd.f32 %v4518, %v4521
  %vm4523 = vweird.f32 %v3354
  %vm4524 = vweird.f32 %v4518
  %vm4525 = vmor %vm4523, %vm4524
  %v4526 = vsel %vm4525, %v4518, %v4522
  %v4527 = vand.u32 2147483647, %v3354
  %vm4528 = vcmp.eq.f32.partialorder %v4527, 8.507059e+37
  %v4529 = vand.u32 %v3354, 2147483648
  %v4530 = vor.u32 1.1754944e-38, %v4529
  %v4531 = vsel %vm4528, %v4530, %v4526
  %v4532 = vmul.f32 1.0, %v4531
  %v4533 = vrcp.pop %v3355
  %v4534 = vmul.f32 %v3355, %v4533
  %v4535 = vsub.f32 1.0, %v4534
  %v4536 = vmul.f32 %v4533, %v4535
  %v4537 = vadd.f32 %v4533, %v4536
  %vm4538 = vweird.f32 %v3355
  %vm4539 = vweird.f32 %v4533
  %vm4540 = vmor %vm4538, %vm4539
  %v4541 = vsel %vm4540, %v4533, %v4537
  %v4542 = vand.u32 2147483647, %v3355
  %vm4543 = vcmp.eq.f32.partialorder %v4542, 8.507059e+37
  %v4544 = vand.u32 %v3355, 2147483648
  %v4545 = vor.u32 1.1754944e-38, %v4544
  %v4546 = vsel %vm4543, %v4545, %v4541
  %v4547 = vmul.f32 1.0, %v4546
  %v4548 = vrcp.pop %v3356
  %v4549 = vmul.f32 %v3356, %v4548
  %v4550 = vsub.f32 1.0, %v4549
  %v4551 = vmul.f32 %v4548, %v4550
  %v4552 = vadd.f32 %v4548, %v4551
  %vm4553 = vweird.f32 %v3356
  %vm4554 = vweird.f32 %v4548
  %vm4555 = vmor %vm4553, %vm4554
  %v4556 = vsel %vm4555, %v4548, %v4552
  %v4557 = vand.u32 2147483647, %v3356
  %vm4558 = vcmp.eq.f32.partialorder %v4557, 8.507059e+37
  %v4559 = vand.u32 %v3356, 2147483648
  %v4560 = vor.u32 1.1754944e-38, %v4559
  %v4561 = vsel %vm4558, %v4560, %v4556
  %v4562 = vmul.f32 1.0, %v4561
  %v4563 = vrcp.pop %v3357
  %v4564 = vmul.f32 %v3357, %v4563
  %v4565 = vsub.f32 1.0, %v4564
  %v4566 = vmul.f32 %v4563, %v4565
  %v4567 = vadd.f32 %v4563, %v4566
  %vm4568 = vweird.f32 %v3357
  %vm4569 = vweird.f32 %v4563
  %vm4570 = vmor %vm4568, %vm4569
  %v4571 = vsel %vm4570, %v4563, %v4567
  %v4572 = vand.u32 2147483647, %v3357
  %vm4573 = vcmp.eq.f32.partialorder %v4572, 8.507059e+37
  %v4574 = vand.u32 %v3357, 2147483648
  %v4575 = vor.u32 1.1754944e-38, %v4574
  %v4576 = vsel %vm4573, %v4575, %v4571
  %v4577 = vmul.f32 1.0, %v4576
  %v4578 = vrcp.pop %v3358
  %v4579 = vmul.f32 %v3358, %v4578
  %v4580 = vsub.f32 1.0, %v4579
  %v4581 = vmul.f32 %v4578, %v4580
  %v4582 = vadd.f32 %v4578, %v4581
  %vm4583 = vweird.f32 %v3358
  %vm4584 = vweird.f32 %v4578
  %vm4585 = vmor %vm4583, %vm4584
  %v4586 = vsel %vm4585, %v4578, %v4582
  %v4587 = vand.u32 2147483647, %v3358
  %vm4588 = vcmp.eq.f32.partialorder %v4587, 8.507059e+37
  %v4589 = vand.u32 %v3358, 2147483648
  %v4590 = vor.u32 1.1754944e-38, %v4589
  %v4591 = vsel %vm4588, %v4590, %v4586
  %v4592 = vmul.f32 1.0, %v4591
  %v4593 = vrcp.pop %v3359
  %v4594 = vmul.f32 %v3359, %v4593
  %v4595 = vsub.f32 1.0, %v4594
  %v4596 = vmul.f32 %v4593, %v4595
  %v4597 = vadd.f32 %v4593, %v4596
  %vm4598 = vweird.f32 %v3359
  %vm4599 = vweird.f32 %v4593
  %vm4600 = vmor %vm4598, %vm4599
  %v4601 = vsel %vm4600, %v4593, %v4597
  %v4602 = vand.u32 2147483647, %v3359
  %vm4603 = vcmp.eq.f32.partialorder %v4602, 8.507059e+37
  %v4604 = vand.u32 %v3359, 2147483648
  %v4605 = vor.u32 1.1754944e-38, %v4604
  %v4606 = vsel %vm4603, %v4605, %v4601
  %v4607 = vmul.f32 1.0, %v4606
  %v4608 = vrcp.pop %v3360
  %v4609 = vmul.f32 %v3360, %v4608
  %v4610 = vsub.f32 1.0, %v4609
  %v4611 = vmul.f32 %v4608, %v4610
  %v4612 = vadd.f32 %v4608, %v4611
  %vm4613 = vweird.f32 %v3360
  %vm4614 = vweird.f32 %v4608
  %vm4615 = vmor %vm4613, %vm4614
  %v4616 = vsel %vm4615, %v4608, %v4612
  %v4617 = vand.u32 2147483647, %v3360
  %vm4618 = vcmp.eq.f32.partialorder %v4617, 8.507059e+37
  %v4619 = vand.u32 %v3360, 2147483648
  %v4620 = vor.u32 1.1754944e-38, %v4619
  %v4621 = vsel %vm4618, %v4620, %v4616
  %v4622 = vmul.f32 1.0, %v4621
  %v4623 = vrcp.pop %v3361
  %v4624 = vmul.f32 %v3361, %v4623
  %v4625 = vsub.f32 1.0, %v4624
  %v4626 = vmul.f32 %v4623, %v4625
  %v4627 = vadd.f32 %v4623, %v4626
  %vm4628 = vweird.f32 %v3361
  %vm4629 = vweird.f32 %v4623
  %vm4630 = vmor %vm4628, %vm4629
  %v4631 = vsel %vm4630, %v4623, %v4627
  %v4632 = vand.u32 2147483647, %v3361
  %vm4633 = vcmp.eq.f32.partialorder %v4632, 8.507059e+37
  %v4634 = vand.u32 %v3361, 2147483648
  %v4635 = vor.u32 1.1754944e-38, %v4634
  %v4636 = vsel %vm4633, %v4635, %v4631
  %v4637 = vmul.f32 1.0, %v4636
  %v4638 = vrcp.pop %v3362
  %v4639 = vmul.f32 %v3362, %v4638
  %v4640 = vsub.f32 1.0, %v4639
  %v4641 = vmul.f32 %v4638, %v4640
  %v4642 = vadd.f32 %v4638, %v4641
  %vm4643 = vweird.f32 %v3362
  %vm4644 = vweird.f32 %v4638
  %vm4645 = vmor %vm4643, %vm4644
  %v4646 = vsel %vm4645, %v4638, %v4642
  %v4647 = vand.u32 2147483647, %v3362
  %vm4648 = vcmp.eq.f32.partialorder %v4647, 8.507059e+37
  %v4649 = vand.u32 %v3362, 2147483648
  %v4650 = vor.u32 1.1754944e-38, %v4649
  %v4651 = vsel %vm4648, %v4650, %v4646
  %v4652 = vmul.f32 1.0, %v4651
  %v4653 = vrcp.pop %v3363
  %v4654 = vmul.f32 %v3363, %v4653
  %v4655 = vsub.f32 1.0, %v4654
  %v4656 = vmul.f32 %v4653, %v4655
  %v4657 = vadd.f32 %v4653, %v4656
  %vm4658 = vweird.f32 %v3363
  %vm4659 = vweird.f32 %v4653
  %vm4660 = vmor %vm4658, %vm4659
  %v4661 = vsel %vm4660, %v4653, %v4657
  %v4662 = vand.u32 2147483647, %v3363
  %vm4663 = vcmp.eq.f32.partialorder %v4662, 8.507059e+37
  %v4664 = vand.u32 %v3363, 2147483648
  %v4665 = vor.u32 1.1754944e-38, %v4664
  %v4666 = vsel %vm4663, %v4665, %v4661
  %v4667 = vmul.f32 1.0, %v4666
  %v4668 = vrcp.pop %v3364
  %v4669 = vmul.f32 %v3364, %v4668
  %v4670 = vsub.f32 1.0, %v4669
  %v4671 = vmul.f32 %v4668, %v4670
  %v4672 = vadd.f32 %v4668, %v4671
  %vm4673 = vweird.f32 %v3364
  %vm4674 = vweird.f32 %v4668
  %vm4675 = vmor %vm4673, %vm4674
  %v4676 = vsel %vm4675, %v4668, %v4672
  %v4677 = vand.u32 2147483647, %v3364
  %vm4678 = vcmp.eq.f32.partialorder %v4677, 8.507059e+37
  %v4679 = vand.u32 %v3364, 2147483648
  %v4680 = vor.u32 1.1754944e-38, %v4679
  %v4681 = vsel %vm4678, %v4680, %v4676
  %v4682 = vmul.f32 1.0, %v4681
  %v4683 = vrcp.pop %v3365
  %v4684 = vmul.f32 %v3365, %v4683
  %v4685 = vsub.f32 1.0, %v4684
  %v4686 = vmul.f32 %v4683, %v4685
  %v4687 = vadd.f32 %v4683, %v4686
  %vm4688 = vweird.f32 %v3365
  %vm4689 = vweird.f32 %v4683
  %vm4690 = vmor %vm4688, %vm4689
  %v4691 = vsel %vm4690, %v4683, %v4687
  %v4692 = vand.u32 2147483647, %v3365
  %vm4693 = vcmp.eq.f32.partialorder %v4692, 8.507059e+37
  %v4694 = vand.u32 %v3365, 2147483648
  %v4695 = vor.u32 1.1754944e-38, %v4694
  %v4696 = vsel %vm4693, %v4695, %v4691
  %v4697 = vmul.f32 1.0, %v4696
  %v4698 = vrcp.pop %v3366
  %v4699 = vmul.f32 %v3366, %v4698
  %v4700 = vsub.f32 1.0, %v4699
  %v4701 = vmul.f32 %v4698, %v4700
  %v4702 = vadd.f32 %v4698, %v4701
  %vm4703 = vweird.f32 %v3366
  %vm4704 = vweird.f32 %v4698
  %vm4705 = vmor %vm4703, %vm4704
  %v4706 = vsel %vm4705, %v4698, %v4702
  %v4707 = vand.u32 2147483647, %v3366
  %vm4708 = vcmp.eq.f32.partialorder %v4707, 8.507059e+37
  %v4709 = vand.u32 %v3366, 2147483648
  %v4710 = vor.u32 1.1754944e-38, %v4709
  %v4711 = vsel %vm4708, %v4710, %v4706
  %v4712 = vmul.f32 1.0, %v4711
  %v4713 = vrcp.pop %v3367
  %v4714 = vmul.f32 %v3367, %v4713
  %v4715 = vsub.f32 1.0, %v4714
  %v4716 = vmul.f32 %v4713, %v4715
  %v4717 = vadd.f32 %v4713, %v4716
  %vm4718 = vweird.f32 %v3367
  %vm4719 = vweird.f32 %v4713
  %vm4720 = vmor %vm4718, %vm4719
  %v4721 = vsel %vm4720, %v4713, %v4717
  %v4722 = vand.u32 2147483647, %v3367
  %vm4723 = vcmp.eq.f32.partialorder %v4722, 8.507059e+37
  %v4724 = vand.u32 %v3367, 2147483648
  %v4725 = vor.u32 1.1754944e-38, %v4724
  %v4726 = vsel %vm4723, %v4725, %v4721
  %v4727 = vmul.f32 1.0, %v4726
  %v4728 = vrcp.pop %v3368
  %v4729 = vmul.f32 %v3368, %v4728
  %v4730 = vsub.f32 1.0, %v4729
  %v4731 = vmul.f32 %v4728, %v4730
  %v4732 = vadd.f32 %v4728, %v4731
  %vm4733 = vweird.f32 %v3368
  %vm4734 = vweird.f32 %v4728
  %vm4735 = vmor %vm4733, %vm4734
  %v4736 = vsel %vm4735, %v4728, %v4732
  %v4737 = vand.u32 2147483647, %v3368
  %vm4738 = vcmp.eq.f32.partialorder %v4737, 8.507059e+37
  %v4739 = vand.u32 %v3368, 2147483648
  %v4740 = vor.u32 1.1754944e-38, %v4739
  %v4741 = vsel %vm4738, %v4740, %v4736
  %v4742 = vmul.f32 1.0, %v4741
  %v4743 = vrcp.pop %v3369
  %v4744 = vmul.f32 %v3369, %v4743
  %v4745 = vsub.f32 1.0, %v4744
  %v4746 = vmul.f32 %v4743, %v4745
  %v4747 = vadd.f32 %v4743, %v4746
  %vm4748 = vweird.f32 %v3369
  %vm4749 = vweird.f32 %v4743
  %vm4750 = vmor %vm4748, %vm4749
  %v4751 = vsel %vm4750, %v4743, %v4747
  %v4752 = vand.u32 2147483647, %v3369
  %vm4753 = vcmp.eq.f32.partialorder %v4752, 8.507059e+37
  %v4754 = vand.u32 %v3369, 2147483648
  %v4755 = vor.u32 1.1754944e-38, %v4754
  %v4756 = vsel %vm4753, %v4755, %v4751
  %v4757 = vmul.f32 1.0, %v4756
  %v4758 = vrcp.pop %v3370
  %v4759 = vmul.f32 %v3370, %v4758
  %v4760 = vsub.f32 1.0, %v4759
  %v4761 = vmul.f32 %v4758, %v4760
  %v4762 = vadd.f32 %v4758, %v4761
  %vm4763 = vweird.f32 %v3370
  %vm4764 = vweird.f32 %v4758
  %vm4765 = vmor %vm4763, %vm4764
  %v4766 = vsel %vm4765, %v4758, %v4762
  %v4767 = vand.u32 2147483647, %v3370
  %vm4768 = vcmp.eq.f32.partialorder %v4767, 8.507059e+37
  %v4769 = vand.u32 %v3370, 2147483648
  %v4770 = vor.u32 1.1754944e-38, %v4769
  %v4771 = vsel %vm4768, %v4770, %v4766
  %v4772 = vmul.f32 1.0, %v4771
  %v4773 = vrcp.pop %v3371
  %v4774 = vmul.f32 %v3371, %v4773
  %v4775 = vsub.f32 1.0, %v4774
  %v4776 = vmul.f32 %v4773, %v4775
  %v4777 = vadd.f32 %v4773, %v4776
  %vm4778 = vweird.f32 %v3371
  %vm4779 = vweird.f32 %v4773
  %vm4780 = vmor %vm4778, %vm4779
  %v4781 = vsel %vm4780, %v4773, %v4777
  %v4782 = vand.u32 2147483647, %v3371
  %vm4783 = vcmp.eq.f32.partialorder %v4782, 8.507059e+37
  %v4784 = vand.u32 %v3371, 2147483648
  %v4785 = vor.u32 1.1754944e-38, %v4784
  %v4786 = vsel %vm4783, %v4785, %v4781
  %v4787 = vmul.f32 1.0, %v4786
  %v4788 = vrcp.pop %v3372
  %v4789 = vmul.f32 %v3372, %v4788
  %v4790 = vsub.f32 1.0, %v4789
  %v4791 = vmul.f32 %v4788, %v4790
  %v4792 = vadd.f32 %v4788, %v4791
  %vm4793 = vweird.f32 %v3372
  %vm4794 = vweird.f32 %v4788
  %vm4795 = vmor %vm4793, %vm4794
  %v4796 = vsel %vm4795, %v4788, %v4792
  %v4797 = vand.u32 2147483647, %v3372
  %vm4798 = vcmp.eq.f32.partialorder %v4797, 8.507059e+37
  %v4799 = vand.u32 %v3372, 2147483648
  %v4800 = vor.u32 1.1754944e-38, %v4799
  %v4801 = vsel %vm4798, %v4800, %v4796
  %v4802 = vmul.f32 1.0, %v4801
  %v4803 = vrcp.pop %v3373
  %v4804 = vmul.f32 %v3373, %v4803
  %v4805 = vsub.f32 1.0, %v4804
  %v4806 = vmul.f32 %v4803, %v4805
  %v4807 = vadd.f32 %v4803, %v4806
  %vm4808 = vweird.f32 %v3373
  %vm4809 = vweird.f32 %v4803
  %vm4810 = vmor %vm4808, %vm4809
  %v4811 = vsel %vm4810, %v4803, %v4807
  %v4812 = vand.u32 2147483647, %v3373
  %vm4813 = vcmp.eq.f32.partialorder %v4812, 8.507059e+37
  %v4814 = vand.u32 %v3373, 2147483648
  %v4815 = vor.u32 1.1754944e-38, %v4814
  %v4816 = vsel %vm4813, %v4815, %v4811
  %v4817 = vmul.f32 1.0, %v4816
  %v4818 = vrcp.pop %v3374
  %v4819 = vmul.f32 %v3374, %v4818
  %v4820 = vsub.f32 1.0, %v4819
  %v4821 = vmul.f32 %v4818, %v4820
  %v4822 = vadd.f32 %v4818, %v4821
  %vm4823 = vweird.f32 %v3374
  %vm4824 = vweird.f32 %v4818
  %vm4825 = vmor %vm4823, %vm4824
  %v4826 = vsel %vm4825, %v4818, %v4822
  %v4827 = vand.u32 2147483647, %v3374
  %vm4828 = vcmp.eq.f32.partialorder %v4827, 8.507059e+37
  %v4829 = vand.u32 %v3374, 2147483648
  %v4830 = vor.u32 1.1754944e-38, %v4829
  %v4831 = vsel %vm4828, %v4830, %v4826
  %v4832 = vmul.f32 1.0, %v4831
  %v4833 = vrcp.pop %v3375
  %v4834 = vmul.f32 %v3375, %v4833
  %v4835 = vsub.f32 1.0, %v4834
  %v4836 = vmul.f32 %v4833, %v4835
  %v4837 = vadd.f32 %v4833, %v4836
  %vm4838 = vweird.f32 %v3375
  %vm4839 = vweird.f32 %v4833
  %vm4840 = vmor %vm4838, %vm4839
  %v4841 = vsel %vm4840, %v4833, %v4837
  %v4842 = vand.u32 2147483647, %v3375
  %vm4843 = vcmp.eq.f32.partialorder %v4842, 8.507059e+37
  %v4844 = vand.u32 %v3375, 2147483648
  %v4845 = vor.u32 1.1754944e-38, %v4844
  %v4846 = vsel %vm4843, %v4845, %v4841
  %v4847 = vmul.f32 1.0, %v4846
  %v4848 = vrcp.pop %v3376
  %v4849 = vmul.f32 %v3376, %v4848
  %v4850 = vsub.f32 1.0, %v4849
  %v4851 = vmul.f32 %v4848, %v4850
  %v4852 = vadd.f32 %v4848, %v4851
  %vm4853 = vweird.f32 %v3376
  %vm4854 = vweird.f32 %v4848
  %vm4855 = vmor %vm4853, %vm4854
  %v4856 = vsel %vm4855, %v4848, %v4852
  %v4857 = vand.u32 2147483647, %v3376
  %vm4858 = vcmp.eq.f32.partialorder %v4857, 8.507059e+37
  %v4859 = vand.u32 %v3376, 2147483648
  %v4860 = vor.u32 1.1754944e-38, %v4859
  %v4861 = vsel %vm4858, %v4860, %v4856
  %v4862 = vmul.f32 1.0, %v4861
  %v4863 = vrcp.pop %v3377
  %v4864 = vmul.f32 %v3377, %v4863
  %v4865 = vsub.f32 1.0, %v4864
  %v4866 = vmul.f32 %v4863, %v4865
  %v4867 = vadd.f32 %v4863, %v4866
  %vm4868 = vweird.f32 %v3377
  %vm4869 = vweird.f32 %v4863
  %vm4870 = vmor %vm4868, %vm4869
  %v4871 = vsel %vm4870, %v4863, %v4867
  %v4872 = vand.u32 2147483647, %v3377
  %vm4873 = vcmp.eq.f32.partialorder %v4872, 8.507059e+37
  %v4874 = vand.u32 %v3377, 2147483648
  %v4875 = vor.u32 1.1754944e-38, %v4874
  %v4876 = vsel %vm4873, %v4875, %v4871
  %v4877 = vmul.f32 1.0, %v4876
  %v4878 = vrcp.pop %v3378
  %v4879 = vmul.f32 %v3378, %v4878
  %v4880 = vsub.f32 1.0, %v4879
  %v4881 = vmul.f32 %v4878, %v4880
  %v4882 = vadd.f32 %v4878, %v4881
  %vm4883 = vweird.f32 %v3378
  %vm4884 = vweird.f32 %v4878
  %vm4885 = vmor %vm4883, %vm4884
  %v4886 = vsel %vm4885, %v4878, %v4882
  %v4887 = vand.u32 2147483647, %v3378
  %vm4888 = vcmp.eq.f32.partialorder %v4887, 8.507059e+37
  %v4889 = vand.u32 %v3378, 2147483648
  %v4890 = vor.u32 1.1754944e-38, %v4889
  %v4891 = vsel %vm4888, %v4890, %v4886
  %v4892 = vmul.f32 1.0, %v4891
  %v4893 = vrcp.pop %v3379
  %v4894 = vmul.f32 %v3379, %v4893
  %v4895 = vsub.f32 1.0, %v4894
  %v4896 = vmul.f32 %v4893, %v4895
  %v4897 = vadd.f32 %v4893, %v4896
  %vm4898 = vweird.f32 %v3379
  %vm4899 = vweird.f32 %v4893
  %vm4900 = vmor %vm4898, %vm4899
  %v4901 = vsel %vm4900, %v4893, %v4897
  %v4902 = vand.u32 2147483647, %v3379
  %vm4903 = vcmp.eq.f32.partialorder %v4902, 8.507059e+37
  %v4904 = vand.u32 %v3379, 2147483648
  %v4905 = vor.u32 1.1754944e-38, %v4904
  %v4906 = vsel %vm4903, %v4905, %v4901
  %v4907 = vmul.f32 1.0, %v4906
  %v4908 = vrcp.pop %v3380
  %v4909 = vmul.f32 %v3380, %v4908
  %v4910 = vsub.f32 1.0, %v4909
  %v4911 = vmul.f32 %v4908, %v4910
  %v4912 = vadd.f32 %v4908, %v4911
  %vm4913 = vweird.f32 %v3380
  %vm4914 = vweird.f32 %v4908
  %vm4915 = vmor %vm4913, %vm4914
  %v4916 = vsel %vm4915, %v4908, %v4912
  %v4917 = vand.u32 2147483647, %v3380
  %vm4918 = vcmp.eq.f32.partialorder %v4917, 8.507059e+37
  %v4919 = vand.u32 %v3380, 2147483648
  %v4920 = vor.u32 1.1754944e-38, %v4919
  %v4921 = vsel %vm4918, %v4920, %v4916
  %v4922 = vmul.f32 1.0, %v4921
  %v4923 = vrcp.pop %v3381
  %v4924 = vmul.f32 %v3381, %v4923
  %v4925 = vsub.f32 1.0, %v4924
  %v4926 = vmul.f32 %v4923, %v4925
  %v4927 = vadd.f32 %v4923, %v4926
  %vm4928 = vweird.f32 %v3381
  %vm4929 = vweird.f32 %v4923
  %vm4930 = vmor %vm4928, %vm4929
  %v4931 = vsel %vm4930, %v4923, %v4927
  %v4932 = vand.u32 2147483647, %v3381
  %vm4933 = vcmp.eq.f32.partialorder %v4932, 8.507059e+37
  %v4934 = vand.u32 %v3381, 2147483648
  %v4935 = vor.u32 1.1754944e-38, %v4934
  %v4936 = vsel %vm4933, %v4935, %v4931
  %v4937 = vmul.f32 1.0, %v4936
  %v4938 = vrcp.pop %v3382
  %v4939 = vmul.f32 %v3382, %v4938
  %v4940 = vsub.f32 1.0, %v4939
  %v4941 = vmul.f32 %v4938, %v4940
  %v4942 = vadd.f32 %v4938, %v4941
  %vm4943 = vweird.f32 %v3382
  %vm4944 = vweird.f32 %v4938
  %vm4945 = vmor %vm4943, %vm4944
  %v4946 = vsel %vm4945, %v4938, %v4942
  %v4947 = vand.u32 2147483647, %v3382
  %vm4948 = vcmp.eq.f32.partialorder %v4947, 8.507059e+37
  %v4949 = vand.u32 %v3382, 2147483648
  %v4950 = vor.u32 1.1754944e-38, %v4949
  %v4951 = vsel %vm4948, %v4950, %v4946
  %v4952 = vmul.f32 1.0, %v4951
  %v4953 = vrcp.pop %v3383
  %v4954 = vmul.f32 %v3383, %v4953
  %v4955 = vsub.f32 1.0, %v4954
  %v4956 = vmul.f32 %v4953, %v4955
  %v4957 = vadd.f32 %v4953, %v4956
  %vm4958 = vweird.f32 %v3383
  %vm4959 = vweird.f32 %v4953
  %vm4960 = vmor %vm4958, %vm4959
  %v4961 = vsel %vm4960, %v4953, %v4957
  %v4962 = vand.u32 2147483647, %v3383
  %vm4963 = vcmp.eq.f32.partialorder %v4962, 8.507059e+37
  %v4964 = vand.u32 %v3383, 2147483648
  %v4965 = vor.u32 1.1754944e-38, %v4964
  %v4966 = vsel %vm4963, %v4965, %v4961
  %v4967 = vmul.f32 1.0, %v4966
  %v4968 = vrcp.pop %v3384
  %v4969 = vmul.f32 %v3384, %v4968
  %v4970 = vsub.f32 1.0, %v4969
  %v4971 = vmul.f32 %v4968, %v4970
  %v4972 = vadd.f32 %v4968, %v4971
  %vm4973 = vweird.f32 %v3384
  %vm4974 = vweird.f32 %v4968
  %vm4975 = vmor %vm4973, %vm4974
  %v4976 = vsel %vm4975, %v4968, %v4972
  %v4977 = vand.u32 2147483647, %v3384
  %vm4978 = vcmp.eq.f32.partialorder %v4977, 8.507059e+37
  %v4979 = vand.u32 %v3384, 2147483648
  %v4980 = vor.u32 1.1754944e-38, %v4979
  %v4981 = vsel %vm4978, %v4980, %v4976
  %v4982 = vmul.f32 1.0, %v4981
  %v4983 = vrcp.pop %v3385
  %v4984 = vmul.f32 %v3385, %v4983
  %v4985 = vsub.f32 1.0, %v4984
  %v4986 = vmul.f32 %v4983, %v4985
  %v4987 = vadd.f32 %v4983, %v4986
  %vm4988 = vweird.f32 %v3385
  %vm4989 = vweird.f32 %v4983
  %vm4990 = vmor %vm4988, %vm4989
  %v4991 = vsel %vm4990, %v4983, %v4987
  %v4992 = vand.u32 2147483647, %v3385
  %vm4993 = vcmp.eq.f32.partialorder %v4992, 8.507059e+37
  %v4994 = vand.u32 %v3385, 2147483648
  %v4995 = vor.u32 1.1754944e-38, %v4994
  %v4996 = vsel %vm4993, %v4995, %v4991
  %v4997 = vmul.f32 1.0, %v4996
  %v4998 = vrcp.pop %v3386
  %v4999 = vmul.f32 %v3386, %v4998
  %v5000 = vsub.f32 1.0, %v4999
  %v5001 = vmul.f32 %v4998, %v5000
  %v5002 = vadd.f32 %v4998, %v5001
  %vm5003 = vweird.f32 %v3386
  %vm5004 = vweird.f32 %v4998
  %vm5005 = vmor %vm5003, %vm5004
  %v5006 = vsel %vm5005, %v4998, %v5002
  %v5007 = vand.u32 2147483647, %v3386
  %vm5008 = vcmp.eq.f32.partialorder %v5007, 8.507059e+37
  %v5009 = vand.u32 %v3386, 2147483648
  %v5010 = vor.u32 1.1754944e-38, %v5009
  %v5011 = vsel %vm5008, %v5010, %v5006
  %v5012 = vmul.f32 1.0, %v5011
  %v5013 = vrcp.pop %v3387
  %v5014 = vmul.f32 %v3387, %v5013
  %v5015 = vsub.f32 1.0, %v5014
  %v5016 = vmul.f32 %v5013, %v5015
  %v5017 = vadd.f32 %v5013, %v5016
  %vm5018 = vweird.f32 %v3387
  %vm5019 = vweird.f32 %v5013
  %vm5020 = vmor %vm5018, %vm5019
  %v5021 = vsel %vm5020, %v5013, %v5017
  %v5022 = vand.u32 2147483647, %v3387
  %vm5023 = vcmp.eq.f32.partialorder %v5022, 8.507059e+37
  %v5024 = vand.u32 %v3387, 2147483648
  %v5025 = vor.u32 1.1754944e-38, %v5024
  %v5026 = vsel %vm5023, %v5025, %v5021
  %v5027 = vmul.f32 1.0, %v5026
  %v5028 = vrcp.pop %v3388
  %v5029 = vmul.f32 %v3388, %v5028
  %v5030 = vsub.f32 1.0, %v5029
  %v5031 = vmul.f32 %v5028, %v5030
  %v5032 = vadd.f32 %v5028, %v5031
  %vm5033 = vweird.f32 %v3388
  %vm5034 = vweird.f32 %v5028
  %vm5035 = vmor %vm5033, %vm5034
  %v5036 = vsel %vm5035, %v5028, %v5032
  %v5037 = vand.u32 2147483647, %v3388
  %vm5038 = vcmp.eq.f32.partialorder %v5037, 8.507059e+37
  %v5039 = vand.u32 %v3388, 2147483648
  %v5040 = vor.u32 1.1754944e-38, %v5039
  %v5041 = vsel %vm5038, %v5040, %v5036
  %v5042 = vmul.f32 1.0, %v5041
  %v5043 = vrcp.pop %v3389
  %v5044 = vmul.f32 %v3389, %v5043
  %v5045 = vsub.f32 1.0, %v5044
  %v5046 = vmul.f32 %v5043, %v5045
  %v5047 = vadd.f32 %v5043, %v5046
  %vm5048 = vweird.f32 %v3389
  %vm5049 = vweird.f32 %v5043
  %vm5050 = vmor %vm5048, %vm5049
  %v5051 = vsel %vm5050, %v5043, %v5047
  %v5052 = vand.u32 2147483647, %v3389
  %vm5053 = vcmp.eq.f32.partialorder %v5052, 8.507059e+37
  %v5054 = vand.u32 %v3389, 2147483648
  %v5055 = vor.u32 1.1754944e-38, %v5054
  %v5056 = vsel %vm5053, %v5055, %v5051
  %v5057 = vmul.f32 1.0, %v5056
  %v5058 = vrcp.pop %v3390
  %v5059 = vmul.f32 %v3390, %v5058
  %v5060 = vsub.f32 1.0, %v5059
  %v5061 = vmul.f32 %v5058, %v5060
  %v5062 = vadd.f32 %v5058, %v5061
  %vm5063 = vweird.f32 %v3390
  %vm5064 = vweird.f32 %v5058
  %vm5065 = vmor %vm5063, %vm5064
  %v5066 = vsel %vm5065, %v5058, %v5062
  %v5067 = vand.u32 2147483647, %v3390
  %vm5068 = vcmp.eq.f32.partialorder %v5067, 8.507059e+37
  %v5069 = vand.u32 %v3390, 2147483648
  %v5070 = vor.u32 1.1754944e-38, %v5069
  %v5071 = vsel %vm5068, %v5070, %v5066
  %v5072 = vmul.f32 1.0, %v5071
  %v5073 = vrcp.pop %v3391
  %v5074 = vmul.f32 %v3391, %v5073
  %v5075 = vsub.f32 1.0, %v5074
  %v5076 = vmul.f32 %v5073, %v5075
  %v5077 = vadd.f32 %v5073, %v5076
  %vm5078 = vweird.f32 %v3391
  %vm5079 = vweird.f32 %v5073
  %vm5080 = vmor %vm5078, %vm5079
  %v5081 = vsel %vm5080, %v5073, %v5077
  %v5082 = vand.u32 2147483647, %v3391
  %vm5083 = vcmp.eq.f32.partialorder %v5082, 8.507059e+37
  %v5084 = vand.u32 %v3391, 2147483648
  %v5085 = vor.u32 1.1754944e-38, %v5084
  %v5086 = vsel %vm5083, %v5085, %v5081
  %v5087 = vmul.f32 1.0, %v5086
  %v5088 = vrcp.pop %v3392
  %v5089 = vmul.f32 %v3392, %v5088
  %v5090 = vsub.f32 1.0, %v5089
  %v5091 = vmul.f32 %v5088, %v5090
  %v5092 = vadd.f32 %v5088, %v5091
  %vm5093 = vweird.f32 %v3392
  %vm5094 = vweird.f32 %v5088
  %vm5095 = vmor %vm5093, %vm5094
  %v5096 = vsel %vm5095, %v5088, %v5092
  %v5097 = vand.u32 2147483647, %v3392
  %vm5098 = vcmp.eq.f32.partialorder %v5097, 8.507059e+37
  %v5099 = vand.u32 %v3392, 2147483648
  %v5100 = vor.u32 1.1754944e-38, %v5099
  %v5101 = vsel %vm5098, %v5100, %v5096
  %v5102 = vmul.f32 1.0, %v5101
  %v5103 = vrcp.pop %v3393
  %v5104 = vmul.f32 %v3393, %v5103
  %v5105 = vsub.f32 1.0, %v5104
  %v5106 = vmul.f32 %v5103, %v5105
  %v5107 = vadd.f32 %v5103, %v5106
  %vm5108 = vweird.f32 %v3393
  %vm5109 = vweird.f32 %v5103
  %vm5110 = vmor %vm5108, %vm5109
  %v5111 = vsel %vm5110, %v5103, %v5107
  %v5112 = vand.u32 2147483647, %v3393
  %vm5113 = vcmp.eq.f32.partialorder %v5112, 8.507059e+37
  %v5114 = vand.u32 %v3393, 2147483648
  %v5115 = vor.u32 1.1754944e-38, %v5114
  %v5116 = vsel %vm5113, %v5115, %v5111
  %v5117 = vmul.f32 1.0, %v5116
  %v5118 = vrcp.pop %v3394
  %v5119 = vmul.f32 %v3394, %v5118
  %v5120 = vsub.f32 1.0, %v5119
  %v5121 = vmul.f32 %v5118, %v5120
  %v5122 = vadd.f32 %v5118, %v5121
  %vm5123 = vweird.f32 %v3394
  %vm5124 = vweird.f32 %v5118
  %vm5125 = vmor %vm5123, %vm5124
  %v5126 = vsel %vm5125, %v5118, %v5122
  %v5127 = vand.u32 2147483647, %v3394
  %vm5128 = vcmp.eq.f32.partialorder %v5127, 8.507059e+37
  %v5129 = vand.u32 %v3394, 2147483648
  %v5130 = vor.u32 1.1754944e-38, %v5129
  %v5131 = vsel %vm5128, %v5130, %v5126
  %v5132 = vmul.f32 1.0, %v5131
  %v5133 = vrcp.pop %v3395
  %v5134 = vmul.f32 %v3395, %v5133
  %v5135 = vsub.f32 1.0, %v5134
  %v5136 = vmul.f32 %v5133, %v5135
  %v5137 = vadd.f32 %v5133, %v5136
  %vm5138 = vweird.f32 %v3395
  %vm5139 = vweird.f32 %v5133
  %vm5140 = vmor %vm5138, %vm5139
  %v5141 = vsel %vm5140, %v5133, %v5137
  %v5142 = vand.u32 2147483647, %v3395
  %vm5143 = vcmp.eq.f32.partialorder %v5142, 8.507059e+37
  %v5144 = vand.u32 %v3395, 2147483648
  %v5145 = vor.u32 1.1754944e-38, %v5144
  %v5146 = vsel %vm5143, %v5145, %v5141
  %v5147 = vmul.f32 1.0, %v5146
  %v5148 = vrcp.pop %v3396
  %v5149 = vmul.f32 %v3396, %v5148
  %v5150 = vsub.f32 1.0, %v5149
  %v5151 = vmul.f32 %v5148, %v5150
  %v5152 = vadd.f32 %v5148, %v5151
  %vm5153 = vweird.f32 %v3396
  %vm5154 = vweird.f32 %v5148
  %vm5155 = vmor %vm5153, %vm5154
  %v5156 = vsel %vm5155, %v5148, %v5152
  %v5157 = vand.u32 2147483647, %v3396
  %vm5158 = vcmp.eq.f32.partialorder %v5157, 8.507059e+37
  %v5159 = vand.u32 %v3396, 2147483648
  %v5160 = vor.u32 1.1754944e-38, %v5159
  %v5161 = vsel %vm5158, %v5160, %v5156
  %v5162 = vmul.f32 1.0, %v5161
  %v5163 = vrcp.pop %v3397
  %v5164 = vmul.f32 %v3397, %v5163
  %v5165 = vsub.f32 1.0, %v5164
  %v5166 = vmul.f32 %v5163, %v5165
  %v5167 = vadd.f32 %v5163, %v5166
  %vm5168 = vweird.f32 %v3397
  %vm5169 = vweird.f32 %v5163
  %vm5170 = vmor %vm5168, %vm5169
  %v5171 = vsel %vm5170, %v5163, %v5167
  %v5172 = vand.u32 2147483647, %v3397
  %vm5173 = vcmp.eq.f32.partialorder %v5172, 8.507059e+37
  %v5174 = vand.u32 %v3397, 2147483648
  %v5175 = vor.u32 1.1754944e-38, %v5174
  %v5176 = vsel %vm5173, %v5175, %v5171
  %v5177 = vmul.f32 1.0, %v5176
  %v5178 = vrcp.pop %v3398
  %v5179 = vmul.f32 %v3398, %v5178
  %v5180 = vsub.f32 1.0, %v5179
  %v5181 = vmul.f32 %v5178, %v5180
  %v5182 = vadd.f32 %v5178, %v5181
  %vm5183 = vweird.f32 %v3398
  %vm5184 = vweird.f32 %v5178
  %vm5185 = vmor %vm5183, %vm5184
  %v5186 = vsel %vm5185, %v5178, %v5182
  %v5187 = vand.u32 2147483647, %v3398
  %vm5188 = vcmp.eq.f32.partialorder %v5187, 8.507059e+37
  %v5189 = vand.u32 %v3398, 2147483648
  %v5190 = vor.u32 1.1754944e-38, %v5189
  %v5191 = vsel %vm5188, %v5190, %v5186
  %v5192 = vmul.f32 1.0, %v5191
  %v5193 = vrcp.pop %v3399
  %v5194 = vmul.f32 %v3399, %v5193
  %v5195 = vsub.f32 1.0, %v5194
  %v5196 = vmul.f32 %v5193, %v5195
  %v5197 = vadd.f32 %v5193, %v5196
  %vm5198 = vweird.f32 %v3399
  %vm5199 = vweird.f32 %v5193
  %vm5200 = vmor %vm5198, %vm5199
  %v5201 = vsel %vm5200, %v5193, %v5197
  %v5202 = vand.u32 2147483647, %v3399
  %vm5203 = vcmp.eq.f32.partialorder %v5202, 8.507059e+37
  %v5204 = vand.u32 %v3399, 2147483648
  %v5205 = vor.u32 1.1754944e-38, %v5204
  %v5206 = vsel %vm5203, %v5205, %v5201
  %v5207 = vmul.f32 1.0, %v5206
  %v5208 = vrcp.pop %v3400
  %v5209 = vmul.f32 %v3400, %v5208
  %v5210 = vsub.f32 1.0, %v5209
  %v5211 = vmul.f32 %v5208, %v5210
  %v5212 = vadd.f32 %v5208, %v5211
  %vm5213 = vweird.f32 %v3400
  %vm5214 = vweird.f32 %v5208
  %vm5215 = vmor %vm5213, %vm5214
  %v5216 = vsel %vm5215, %v5208, %v5212
  %v5217 = vand.u32 2147483647, %v3400
  %vm5218 = vcmp.eq.f32.partialorder %v5217, 8.507059e+37
  %v5219 = vand.u32 %v3400, 2147483648
  %v5220 = vor.u32 1.1754944e-38, %v5219
  %v5221 = vsel %vm5218, %v5220, %v5216
  %v5222 = vmul.f32 1.0, %v5221
  %v5223 = vrcp.pop %v3401
  %v5224 = vmul.f32 %v3401, %v5223
  %v5225 = vsub.f32 1.0, %v5224
  %v5226 = vmul.f32 %v5223, %v5225
  %v5227 = vadd.f32 %v5223, %v5226
  %vm5228 = vweird.f32 %v3401
  %vm5229 = vweird.f32 %v5223
  %vm5230 = vmor %vm5228, %vm5229
  %v5231 = vsel %vm5230, %v5223, %v5227
  %v5232 = vand.u32 2147483647, %v3401
  %vm5233 = vcmp.eq.f32.partialorder %v5232, 8.507059e+37
  %v5234 = vand.u32 %v3401, 2147483648
  %v5235 = vor.u32 1.1754944e-38, %v5234
  %v5236 = vsel %vm5233, %v5235, %v5231
  %v5237 = vmul.f32 1.0, %v5236
  %v5238 = vrcp.pop %v3402
  %v5239 = vmul.f32 %v3402, %v5238
  %v5240 = vsub.f32 1.0, %v5239
  %v5241 = vmul.f32 %v5238, %v5240
  %v5242 = vadd.f32 %v5238, %v5241
  %vm5243 = vweird.f32 %v3402
  %vm5244 = vweird.f32 %v5238
  %vm5245 = vmor %vm5243, %vm5244
  %v5246 = vsel %vm5245, %v5238, %v5242
  %v5247 = vand.u32 2147483647, %v3402
  %vm5248 = vcmp.eq.f32.partialorder %v5247, 8.507059e+37
  %v5249 = vand.u32 %v3402, 2147483648
  %v5250 = vor.u32 1.1754944e-38, %v5249
  %v5251 = vsel %vm5248, %v5250, %v5246
  %v5252 = vmul.f32 1.0, %v5251
  %v5253 = vrcp.pop %v3403
  %v5254 = vmul.f32 %v3403, %v5253
  %v5255 = vsub.f32 1.0, %v5254
  %v5256 = vmul.f32 %v5253, %v5255
  %v5257 = vadd.f32 %v5253, %v5256
  %vm5258 = vweird.f32 %v3403
  %vm5259 = vweird.f32 %v5253
  %vm5260 = vmor %vm5258, %vm5259
  %v5261 = vsel %vm5260, %v5253, %v5257
  %v5262 = vand.u32 2147483647, %v3403
  %vm5263 = vcmp.eq.f32.partialorder %v5262, 8.507059e+37
  %v5264 = vand.u32 %v3403, 2147483648
  %v5265 = vor.u32 1.1754944e-38, %v5264
  %v5266 = vsel %vm5263, %v5265, %v5261
  %v5267 = vmul.f32 1.0, %v5266
  %v5268 = vrcp.pop %v3404
  %v5269 = vmul.f32 %v3404, %v5268
  %v5270 = vsub.f32 1.0, %v5269
  %v5271 = vmul.f32 %v5268, %v5270
  %v5272 = vadd.f32 %v5268, %v5271
  %vm5273 = vweird.f32 %v3404
  %vm5274 = vweird.f32 %v5268
  %vm5275 = vmor %vm5273, %vm5274
  %v5276 = vsel %vm5275, %v5268, %v5272
  %v5277 = vand.u32 2147483647, %v3404
  %vm5278 = vcmp.eq.f32.partialorder %v5277, 8.507059e+37
  %v5279 = vand.u32 %v3404, 2147483648
  %v5280 = vor.u32 1.1754944e-38, %v5279
  %v5281 = vsel %vm5278, %v5280, %v5276
  %v5282 = vmul.f32 1.0, %v5281
  %v5283 = vrcp.pop %v3405
  %v5284 = vmul.f32 %v3405, %v5283
  %v5285 = vsub.f32 1.0, %v5284
  %v5286 = vmul.f32 %v5283, %v5285
  %v5287 = vadd.f32 %v5283, %v5286
  %vm5288 = vweird.f32 %v3405
  %vm5289 = vweird.f32 %v5283
  %vm5290 = vmor %vm5288, %vm5289
  %v5291 = vsel %vm5290, %v5283, %v5287
  %v5292 = vand.u32 2147483647, %v3405
  %vm5293 = vcmp.eq.f32.partialorder %v5292, 8.507059e+37
  %v5294 = vand.u32 %v3405, 2147483648
  %v5295 = vor.u32 1.1754944e-38, %v5294
  %v5296 = vsel %vm5293, %v5295, %v5291
  %v5297 = vmul.f32 1.0, %v5296
  %v5298 = vrcp.pop %v3406
  %v5299 = vmul.f32 %v3406, %v5298
  %v5300 = vsub.f32 1.0, %v5299
  %v5301 = vmul.f32 %v5298, %v5300
  %v5302 = vadd.f32 %v5298, %v5301
  %vm5303 = vweird.f32 %v3406
  %vm5304 = vweird.f32 %v5298
  %vm5305 = vmor %vm5303, %vm5304
  %v5306 = vsel %vm5305, %v5298, %v5302
  %v5307 = vand.u32 2147483647, %v3406
  %vm5308 = vcmp.eq.f32.partialorder %v5307, 8.507059e+37
  %v5309 = vand.u32 %v3406, 2147483648
  %v5310 = vor.u32 1.1754944e-38, %v5309
  %v5311 = vsel %vm5308, %v5310, %v5306
  %v5312 = vmul.f32 1.0, %v5311
  %v5313 = vrcp.pop %v3407
  %v5314 = vmul.f32 %v3407, %v5313
  %v5315 = vsub.f32 1.0, %v5314
  %v5316 = vmul.f32 %v5313, %v5315
  %v5317 = vadd.f32 %v5313, %v5316
  %vm5318 = vweird.f32 %v3407
  %vm5319 = vweird.f32 %v5313
  %vm5320 = vmor %vm5318, %vm5319
  %v5321 = vsel %vm5320, %v5313, %v5317
  %v5322 = vand.u32 2147483647, %v3407
  %vm5323 = vcmp.eq.f32.partialorder %v5322, 8.507059e+37
  %v5324 = vand.u32 %v3407, 2147483648
  %v5325 = vor.u32 1.1754944e-38, %v5324
  %v5326 = vsel %vm5323, %v5325, %v5321
  %v5327 = vmul.f32 1.0, %v5326
  %v5456 = vlaneseq
  %v5457 = vand.u32 %v5456, 127
  %v5458 = vperm.slane %v3422, %v5457
  %v5459 = vadd.s32 %v5457, 4294967288
  %v5460 = vperm.slane %v3437, %v5459
  %vm5461 = vcmask 130112
  %v5462 = vsel %vm5461, %v5460, %v5458
  %v5463 = vadd.s32 %v5457, 4294967280
  %v5464 = vperm.slane %v3452, %v5463
  %vm5465 = vcmask 195712
  %v5466 = vsel %vm5465, %v5464, %v5462
  %v5467 = vadd.s32 %v5457, 4294967272
  %v5468 = vperm.slane %v3467, %v5467
  %vm5469 = vcmask 261312
  %v5470 = vsel %vm5469, %v5468, %v5466
  %v5471 = vadd.s32 %v5457, 4294967264
  %v5472 = vperm.slane %v3482, %v5471
  %vm5473 = vcmask 326912
  %v5474 = vsel %vm5473, %v5472, %v5470
  %v5475 = vadd.s32 %v5457, 4294967256
  %v5476 = vperm.slane %v3497, %v5475
  %vm5477 = vcmask 392512
  %v5478 = vsel %vm5477, %v5476, %v5474
  %v5479 = vadd.s32 %v5457, 4294967248
  %v5480 = vperm.slane %v3512, %v5479
  %vm5481 = vcmask 458112
  %v5482 = vsel %vm5481, %v5480, %v5478
  %v5483 = vadd.s32 %v5457, 4294967240
  %v5484 = vperm.slane %v3527, %v5483
  %vm5485 = vcmask 523712
  %v5486 = vsel %vm5485, %v5484, %v5482
  %v5487 = vadd.s32 %v5457, 4294967232
  %v5488 = vperm.slane %v3542, %v5487
  %vm5489 = vcmask 589312
  %v5490 = vsel %vm5489, %v5488, %v5486
  %v5491 = vadd.s32 %v5457, 4294967224
  %v5492 = vperm.slane %v3557, %v5491
  %vm5493 = vcmask 654912
  %v5494 = vsel %vm5493, %v5492, %v5490
  %v5495 = vadd.s32 %v5457, 4294967216
  %v5496 = vperm.slane %v3572, %v5495
  %vm5497 = vcmask 720512
  %v5498 = vsel %vm5497, %v5496, %v5494
  %v5499 = vadd.s32 %v5457, 4294967208
  %v5500 = vperm.slane %v3587, %v5499
  %vm5501 = vcmask 786112
  %v5502 = vsel %vm5501, %v5500, %v5498
  %v5503 = vadd.s32 %v5457, 4294967200
  %v5504 = vperm.slane %v3602, %v5503
  %vm5505 = vcmask 851712
  %v5506 = vsel %vm5505, %v5504, %v5502
  %v5507 = vadd.s32 %v5457, 4294967192
  %v5508 = vperm.slane %v3617, %v5507
  %vm5509 = vcmask 917312
  %v5510 = vsel %vm5509, %v5508, %v5506
  %v5511 = vadd.s32 %v5457, 4294967184
  %v5512 = vperm.slane %v3632, %v5511
  %vm5513 = vcmask 982912
  %v5514 = vsel %vm5513, %v5512, %v5510
  %v5515 = vadd.s32 %v5457, 4294967176
  %v5516 = vperm.slane %v3647, %v5515
  %vm5517 = vcmask 1048512
  %v5518 = vsel %vm5517, %v5516, %v5514
  %v5519 = vperm.slane %v3662, %v5457
  %v5520 = vperm.slane %v3677, %v5459
  %v5521 = vsel %vm5461, %v5520, %v5519
  %v5522 = vperm.slane %v3692, %v5463
  %v5523 = vsel %vm5465, %v5522, %v5521
  %v5524 = vperm.slane %v3707, %v5467
  %v5525 = vsel %vm5469, %v5524, %v5523
  %v5526 = vperm.slane %v3722, %v5471
  %v5527 = vsel %vm5473, %v5526, %v5525
  %v5528 = vperm.slane %v3737, %v5475
  %v5529 = vsel %vm5477, %v5528, %v5527
  %v5530 = vperm.slane %v3752, %v5479
  %v5531 = vsel %vm5481, %v5530, %v5529
  %v5532 = vperm.slane %v3767, %v5483
  %v5533 = vsel %vm5485, %v5532, %v5531
  %v5534 = vperm.slane %v3782, %v5487
  %v5535 = vsel %vm5489, %v5534, %v5533
  %v5536 = vperm.slane %v3797, %v5491
  %v5537 = vsel %vm5493, %v5536, %v5535
  %v5538 = vperm.slane %v3812, %v5495
  %v5539 = vsel %vm5497, %v5538, %v5537
  %v5540 = vperm.slane %v3827, %v5499
  %v5541 = vsel %vm5501, %v5540, %v5539
  %v5542 = vperm.slane %v3842, %v5503
  %v5543 = vsel %vm5505, %v5542, %v5541
  %v5544 = vperm.slane %v3857, %v5507
  %v5545 = vsel %vm5509, %v5544, %v5543
  %v5546 = vperm.slane %v3872, %v5511
  %v5547 = vsel %vm5513, %v5546, %v5545
  %v5548 = vperm.slane %v3887, %v5515
  %v5549 = vsel %vm5517, %v5548, %v5547
  %v5550 = vperm.slane %v3902, %v5457
  %v5551 = vperm.slane %v3917, %v5459
  %v5552 = vsel %vm5461, %v5551, %v5550
  %v5553 = vperm.slane %v3932, %v5463
  %v5554 = vsel %vm5465, %v5553, %v5552
  %v5555 = vperm.slane %v3947, %v5467
  %v5556 = vsel %vm5469, %v5555, %v5554
  %v5557 = vperm.slane %v3962, %v5471
  %v5558 = vsel %vm5473, %v5557, %v5556
  %v5559 = vperm.slane %v3977, %v5475
  %v5560 = vsel %vm5477, %v5559, %v5558
  %v5561 = vperm.slane %v3992, %v5479
  %v5562 = vsel %vm5481, %v5561, %v5560
  %v5563 = vperm.slane %v4007, %v5483
  %v5564 = vsel %vm5485, %v5563, %v5562
  %v5565 = vperm.slane %v4022, %v5487
  %v5566 = vsel %vm5489, %v5565, %v5564
  %v5567 = vperm.slane %v4037, %v5491
  %v5568 = vsel %vm5493, %v5567, %v5566
  %v5569 = vperm.slane %v4052, %v5495
  %v5570 = vsel %vm5497, %v5569, %v5568
  %v5571 = vperm.slane %v4067, %v5499
  %v5572 = vsel %vm5501, %v5571, %v5570
  %v5573 = vperm.slane %v4082, %v5503
  %v5574 = vsel %vm5505, %v5573, %v5572
  %v5575 = vperm.slane %v4097, %v5507
  %v5576 = vsel %vm5509, %v5575, %v5574
  %v5577 = vperm.slane %v4112, %v5511
  %v5578 = vsel %vm5513, %v5577, %v5576
  %v5579 = vperm.slane %v4127, %v5515
  %v5580 = vsel %vm5517, %v5579, %v5578
  %v5581 = vperm.slane %v4142, %v5457
  %v5582 = vperm.slane %v4157, %v5459
  %v5583 = vsel %vm5461, %v5582, %v5581
  %v5584 = vperm.slane %v4172, %v5463
  %v5585 = vsel %vm5465, %v5584, %v5583
  %v5586 = vperm.slane %v4187, %v5467
  %v5587 = vsel %vm5469, %v5586, %v5585
  %v5588 = vperm.slane %v4202, %v5471
  %v5589 = vsel %vm5473, %v5588, %v5587
  %v5590 = vperm.slane %v4217, %v5475
  %v5591 = vsel %vm5477, %v5590, %v5589
  %v5592 = vperm.slane %v4232, %v5479
  %v5593 = vsel %vm5481, %v5592, %v5591
  %v5594 = vperm.slane %v4247, %v5483
  %v5595 = vsel %vm5485, %v5594, %v5593
  %v5596 = vperm.slane %v4262, %v5487
  %v5597 = vsel %vm5489, %v5596, %v5595
  %v5598 = vperm.slane %v4277, %v5491
  %v5599 = vsel %vm5493, %v5598, %v5597
  %v5600 = vperm.slane %v4292, %v5495
  %v5601 = vsel %vm5497, %v5600, %v5599
  %v5602 = vperm.slane %v4307, %v5499
  %v5603 = vsel %vm5501, %v5602, %v5601
  %v5604 = vperm.slane %v4322, %v5503
  %v5605 = vsel %vm5505, %v5604, %v5603
  %v5606 = vperm.slane %v4337, %v5507
  %v5607 = vsel %vm5509, %v5606, %v5605
  %v5608 = vperm.slane %v4352, %v5511
  %v5609 = vsel %vm5513, %v5608, %v5607
  %v5610 = vperm.slane %v4367, %v5515
  %v5611 = vsel %vm5517, %v5610, %v5609
  %v5612 = vperm.slane %v4382, %v5457
  %v5613 = vperm.slane %v4397, %v5459
  %v5614 = vsel %vm5461, %v5613, %v5612
  %v5615 = vperm.slane %v4412, %v5463
  %v5616 = vsel %vm5465, %v5615, %v5614
  %v5617 = vperm.slane %v4427, %v5467
  %v5618 = vsel %vm5469, %v5617, %v5616
  %v5619 = vperm.slane %v4442, %v5471
  %v5620 = vsel %vm5473, %v5619, %v5618
  %v5621 = vperm.slane %v4457, %v5475
  %v5622 = vsel %vm5477, %v5621, %v5620
  %v5623 = vperm.slane %v4472, %v5479
  %v5624 = vsel %vm5481, %v5623, %v5622
  %v5625 = vperm.slane %v4487, %v5483
  %v5626 = vsel %vm5485, %v5625, %v5624
  %v5627 = vperm.slane %v4502, %v5487
  %v5628 = vsel %vm5489, %v5627, %v5626
  %v5629 = vperm.slane %v4517, %v5491
  %v5630 = vsel %vm5493, %v5629, %v5628
  %v5631 = vperm.slane %v4532, %v5495
  %v5632 = vsel %vm5497, %v5631, %v5630
  %v5633 = vperm.slane %v4547, %v5499
  %v5634 = vsel %vm5501, %v5633, %v5632
  %v5635 = vperm.slane %v4562, %v5503
  %v5636 = vsel %vm5505, %v5635, %v5634
  %v5637 = vperm.slane %v4577, %v5507
  %v5638 = vsel %vm5509, %v5637, %v5636
  %v5639 = vperm.slane %v4592, %v5511
  %v5640 = vsel %vm5513, %v5639, %v5638
  %v5641 = vperm.slane %v4607, %v5515
  %v5642 = vsel %vm5517, %v5641, %v5640
  %v5643 = vperm.slane %v4622, %v5457
  %v5644 = vperm.slane %v4637, %v5459
  %v5645 = vsel %vm5461, %v5644, %v5643
  %v5646 = vperm.slane %v4652, %v5463
  %v5647 = vsel %vm5465, %v5646, %v5645
  %v5648 = vperm.slane %v4667, %v5467
  %v5649 = vsel %vm5469, %v5648, %v5647
  %v5650 = vperm.slane %v4682, %v5471
  %v5651 = vsel %vm5473, %v5650, %v5649
  %v5652 = vperm.slane %v4697, %v5475
  %v5653 = vsel %vm5477, %v5652, %v5651
  %v5654 = vperm.slane %v4712, %v5479
  %v5655 = vsel %vm5481, %v5654, %v5653
  %v5656 = vperm.slane %v4727, %v5483
  %v5657 = vsel %vm5485, %v5656, %v5655
  %v5658 = vperm.slane %v4742, %v5487
  %v5659 = vsel %vm5489, %v5658, %v5657
  %v5660 = vperm.slane %v4757, %v5491
  %v5661 = vsel %vm5493, %v5660, %v5659
  %v5662 = vperm.slane %v4772, %v5495
  %v5663 = vsel %vm5497, %v5662, %v5661
  %v5664 = vperm.slane %v4787, %v5499
  %v5665 = vsel %vm5501, %v5664, %v5663
  %v5666 = vperm.slane %v4802, %v5503
  %v5667 = vsel %vm5505, %v5666, %v5665
  %v5668 = vperm.slane %v4817, %v5507
  %v5669 = vsel %vm5509, %v5668, %v5667
  %v5670 = vperm.slane %v4832, %v5511
  %v5671 = vsel %vm5513, %v5670, %v5669
  %v5672 = vperm.slane %v4847, %v5515
  %v5673 = vsel %vm5517, %v5672, %v5671
  %v5674 = vperm.slane %v4862, %v5457
  %v5675 = vperm.slane %v4877, %v5459
  %v5676 = vsel %vm5461, %v5675, %v5674
  %v5677 = vperm.slane %v4892, %v5463
  %v5678 = vsel %vm5465, %v5677, %v5676
  %v5679 = vperm.slane %v4907, %v5467
  %v5680 = vsel %vm5469, %v5679, %v5678
  %v5681 = vperm.slane %v4922, %v5471
  %v5682 = vsel %vm5473, %v5681, %v5680
  %v5683 = vperm.slane %v4937, %v5475
  %v5684 = vsel %vm5477, %v5683, %v5682
  %v5685 = vperm.slane %v4952, %v5479
  %v5686 = vsel %vm5481, %v5685, %v5684
  %v5687 = vperm.slane %v4967, %v5483
  %v5688 = vsel %vm5485, %v5687, %v5686
  %v5689 = vperm.slane %v4982, %v5487
  %v5690 = vsel %vm5489, %v5689, %v5688
  %v5691 = vperm.slane %v4997, %v5491
  %v5692 = vsel %vm5493, %v5691, %v5690
  %v5693 = vperm.slane %v5012, %v5495
  %v5694 = vsel %vm5497, %v5693, %v5692
  %v5695 = vperm.slane %v5027, %v5499
  %v5696 = vsel %vm5501, %v5695, %v5694
  %v5697 = vperm.slane %v5042, %v5503
  %v5698 = vsel %vm5505, %v5697, %v5696
  %v5699 = vperm.slane %v5057, %v5507
  %v5700 = vsel %vm5509, %v5699, %v5698
  %v5701 = vperm.slane %v5072, %v5511
  %v5702 = vsel %vm5513, %v5701, %v5700
  %v5703 = vperm.slane %v5087, %v5515
  %v5704 = vsel %vm5517, %v5703, %v5702
  %v5705 = vperm.slane %v5102, %v5457
  %v5706 = vperm.slane %v5117, %v5459
  %v5707 = vsel %vm5461, %v5706, %v5705
  %v5708 = vperm.slane %v5132, %v5463
  %v5709 = vsel %vm5465, %v5708, %v5707
  %v5710 = vperm.slane %v5147, %v5467
  %v5711 = vsel %vm5469, %v5710, %v5709
  %v5712 = vperm.slane %v5162, %v5471
  %v5713 = vsel %vm5473, %v5712, %v5711
  %v5714 = vperm.slane %v5177, %v5475
  %v5715 = vsel %vm5477, %v5714, %v5713
  %v5716 = vperm.slane %v5192, %v5479
  %v5717 = vsel %vm5481, %v5716, %v5715
  %v5718 = vperm.slane %v5207, %v5483
  %v5719 = vsel %vm5485, %v5718, %v5717
  %v5720 = vperm.slane %v5222, %v5487
  %v5721 = vsel %vm5489, %v5720, %v5719
  %v5722 = vperm.slane %v5237, %v5491
  %v5723 = vsel %vm5493, %v5722, %v5721
  %v5724 = vperm.slane %v5252, %v5495
  %v5725 = vsel %vm5497, %v5724, %v5723
  %v5726 = vperm.slane %v5267, %v5499
  %v5727 = vsel %vm5501, %v5726, %v5725
  %v5728 = vperm.slane %v5282, %v5503
  %v5729 = vsel %vm5505, %v5728, %v5727
  %v5730 = vperm.slane %v5297, %v5507
  %v5731 = vsel %vm5509, %v5730, %v5729
  %v5732 = vperm.slane %v5312, %v5511
  %v5733 = vsel %vm5513, %v5732, %v5731
  %v5734 = vperm.slane %v5327, %v5515
  %v5735 = vsel %vm5517, %v5734, %v5733
  %vm5736 = vcmask 1041409
  %v5737 = vsel %vm5736, %v5549, %v5518
  %vm5738 = vcmask 1042434
  %v5739 = vsel %vm5738, %v5580, %v5737
  %vm5740 = vcmask 1043459
  %v5741 = vsel %vm5740, %v5611, %v5739
  %vm5742 = vcmask 1044484
  %v5743 = vsel %vm5742, %v5642, %v5741
  %vm5744 = vcmask 1045509
  %v5745 = vsel %vm5744, %v5673, %v5743
  %vm5746 = vcmask 1046534
  %v5747 = vsel %vm5746, %v5704, %v5745
  %vm5748 = vcmask 1047559
  %v5749 = vsel %vm5748, %v5735, %v5747
  %5751 = vst [vmem:[%s7] sm:$0xff] %v5749
  // Predicated region
  $region30: #{prompt_linear_net.1} parent=0 // pred_check
    _
  $region31: #{prompt_linear_net.1} parent=0 // pred_check_branch
    %5753 = sbr.rel (0) target = $region33
  $region32: #{prompt_linear_net.1} parent=0 // pred_region
    _
  $region33: #{prompt_linear_net.1} parent=0 // pred_fallthru
    _
  // Predicated region
  $region34: #{prompt_linear_net.1} parent=0 // pred_check
    _
  $region35: #{prompt_linear_net.1} parent=0 // pred_check_branch
    %5755 = sbr.rel (0) target = $region37
  $region36: #{prompt_linear_net.1} parent=0 // pred_region
    _
  $region37: #{prompt_linear_net.1} parent=0 // pred_fallthru
    _

</llo_original>
